<compile_context>
chip_gen: v5e
topology: v5e:2x2
jax: 0.10.0
libtpu: 0.0.40
codegen_flags: <defaults>
</compile_context>

<pallas_src>
import functools

import numpy as np
import jax
import jax.numpy as jnp
from jax import lax
from jax.experimental import pallas as pl
from jax.experimental.pallas import tpu as pltpu

START_TAG = "<START>"
STOP_TAG = "<STOP>"

_VMEM = pl.BlockSpec(memory_space=pltpu.MemorySpace.VMEM)


# --------------------------------------------------------------------------
# LSTM cell helpers (traced inside the kernel)
# --------------------------------------------------------------------------

def _lstm_activations(gates, c_prev, H):
    """gates: (B, 4H) in [i, f, o, g] column order."""
    sig = jax.nn.sigmoid(gates[:, :3 * H])
    i = sig[:, 0 * H:1 * H]
    f = sig[:, 1 * H:2 * H]
    o = sig[:, 2 * H:3 * H]
    g = jnp.tanh(gates[:, 3 * H:])
    c_new = f * c_prev + i * g
    h_new = o * jnp.tanh(c_new)
    return h_new, c_new


def _lstm_step(gx, h_prev, c_prev, whh, H):
    """gx = x_t @ W_ih + b (precomputed / hoisted); only h @ W_hh here."""
    gates = gx + jnp.dot(h_prev, whh, preferred_element_type=jnp.float32)
    return _lstm_activations(gates, c_prev, H)


# --------------------------------------------------------------------------
# Fused forward kernel
# --------------------------------------------------------------------------

def _fused_kernel(x_char_ref, w_emb_ref,
                  c_wih_f_ref, c_whh_f_ref, c_b_f_ref,
                  c_wih_b_ref, c_b_b_ref,
                  w_wih_f_ref, w_whh_f_ref, w_b_f_ref,
                  w_wih_b_ref, w_whh_b_ref, w_b_b_ref,
                  h0f_ref, c0f_ref, h0b_ref, c0b_ref,
                  h2t_w_ref, h2t_b_ref, trans_ref,
                  path_ref, score_ref, start_ref,
                  *, start_idx, stop_idx):
    T, E = w_emb_ref.shape
    Dc = x_char_ref.shape[1]
    C = x_char_ref.shape[0] // T
    H = w_whh_f_ref.shape[0]
    K = trans_ref.shape[0]

    x_char = x_char_ref[...]                     # (C*T, Dc), time-major blocks of T rows
    w_emb = w_emb_ref[...]                       # (T, E)

    # ---------------- char BiLSTM ----------------
    # forward direction: hoist x @ W_ih for all C*T rows into one matmul
    gx_cf = (jnp.dot(x_char, c_wih_f_ref[...], preferred_element_type=jnp.float32)
             + c_b_f_ref[...])                   # (C*T, 4Dc)
    c_whh_f = c_whh_f_ref[...]
    h = jnp.zeros((T, Dc), jnp.float32)
    c = jnp.zeros((T, Dc), jnp.float32)
    for t in range(C):
        h, c = _lstm_step(gx_cf[t * T:(t + 1) * T, :], h, c, c_whh_f, Dc)
    h_char_f = h                                 # (T, Dc)

    # backward direction: char_lstm_out[-1] for the reverse direction is the
    # hidden state after a single step on the last character with zero initial
    # hidden, so only one step is needed; h0 @ W_hh_b == 0 and is skipped.
    gx_cb = (jnp.dot(x_char[(C - 1) * T:, :], c_wih_b_ref[...],
                     preferred_element_type=jnp.float32) + c_b_b_ref[...])   # (T, 4Dc)
    h_char_b, _ = _lstm_activations(gx_cb, jnp.zeros((T, Dc), jnp.float32), Dc)

    # ---------------- word BiLSTM ----------------
    # split the hoisted input projection by source (word emb / char fwd / char bwd)
    # instead of materializing a concatenated (T, E + 2Dc) tensor.
    w_wih_f = w_wih_f_ref[...]
    w_wih_b = w_wih_b_ref[...]
    gx_wf = (jnp.dot(w_emb, w_wih_f[:E, :], preferred_element_type=jnp.float32)
             + jnp.dot(h_char_f, w_wih_f[E:E + Dc, :], preferred_element_type=jnp.float32)
             + jnp.dot(h_char_b, w_wih_f[E + Dc:, :], preferred_element_type=jnp.float32)
             + w_b_f_ref[...])                   # (T, 4H)
    gx_wb = (jnp.dot(w_emb, w_wih_b[:E, :], preferred_element_type=jnp.float32)
             + jnp.dot(h_char_f, w_wih_b[E:E + Dc, :], preferred_element_type=jnp.float32)
             + jnp.dot(h_char_b, w_wih_b[E + Dc:, :], preferred_element_type=jnp.float32)
             + w_b_b_ref[...])                   # (T, 4H)

    whh_f = w_whh_f_ref[...]
    whh_b = w_whh_b_ref[...]
    row_t = lax.broadcasted_iota(jnp.int32, (T, 1), 0)      # hoisted out of loop
    out_f = jnp.zeros((T, H), jnp.float32)
    out_b = jnp.zeros((T, H), jnp.float32)
    hf, cf = h0f_ref[...], c0f_ref[...]
    hb, cb = h0b_ref[...], c0b_ref[...]
    for s in range(T):                           # both directions interleaved
        tb = T - 1 - s
        hf, cf = _lstm_step(gx_wf[s:s + 1, :], hf, cf, whh_f, H)
        hb, cb = _lstm_step(gx_wb[tb:tb + 1, :], hb, cb, whh_b, H)
        out_f = jnp.where(row_t == s, hf, out_f)
        out_b = jnp.where(row_t == tb, hb, out_b)

    # ---------------- hidden2tag ----------------
    h2t_w = h2t_w_ref[...]
    feats = (jnp.dot(out_f, h2t_w[:H, :], preferred_element_type=jnp.float32)
             + jnp.dot(out_b, h2t_w[H:, :], preferred_element_type=jnp.float32)
             + h2t_b_ref[...])                   # (T, K)

    # ---------------- Viterbi decode (forward recursion + backtrack) ----------------
    trans = trans_ref[...]                       # trans[next, prev]
    lane_kk = lax.broadcasted_iota(jnp.int32, (K, K), 1)
    eye = (lax.broadcasted_iota(jnp.int32, (K, K), 0) == lane_kk).astype(jnp.float32)
    lane_kt = lax.broadcasted_iota(jnp.int32, (K, T), 1)
    row_k1 = lax.broadcasted_iota(jnp.int32, (K, 1), 0)
    lane_1k = lax.broadcasted_iota(jnp.int32, (1, K), 1)
    lane_1t = lax.broadcasted_iota(jnp.int32, (1, T), 1)

    fv = jnp.where(lane_1k == start_idx, 0.0, -10000.0)     # (1, K), indexed by prev
    bptr = jnp.zeros((K, T), jnp.int32)                     # bptr[next_tag, t]
    for t in range(T):
        M = fv + trans                                      # M[next, prev]
        vit_col = jnp.max(M, axis=1, keepdims=True)         # (K, 1)
        bp_col = jnp.min(jnp.where(M == vit_col, lane_kk, K),
                         axis=1, keepdims=True)             # (K, 1) int32, first argmax
        bptr = jnp.where(lane_kt == t, bp_col, bptr)        # keep column orientation
        vit_row = jnp.sum(vit_col * eye, axis=0, keepdims=True)   # (1, K) flip
        fv = vit_row + feats[t:t + 1, :]

    terminal = fv + trans[stop_idx:stop_idx + 1, :]          # (1, K)
    score = jnp.max(terminal, axis=1, keepdims=True)         # (1, 1)
    best = jnp.min(jnp.where(terminal == score, lane_1k, K),
                   axis=1, keepdims=True)                    # (1, 1) int32

    # backtrack entirely on-device
    path = jnp.where(lane_1t == T - 1, best, jnp.zeros((1, T), jnp.int32))
    cur = best
    for t in range(T - 1, 0, -1):
        bp_t = bptr[:, t:t + 1]                              # (K, 1)
        cur = jnp.sum(jnp.where(row_k1 == cur, bp_t, 0),
                      axis=0, keepdims=True)                 # (1, 1)
        path = jnp.where(lane_1t == t - 1, cur, path)
    start_chk = jnp.sum(jnp.where(row_k1 == cur, bptr[:, 0:1], 0),
                        axis=0, keepdims=True)               # should equal START

    path_ref[...] = path
    score_ref[...] = score
    start_ref[...] = start_chk


def run_fused(x_char2d, word_emb, p, start_idx, stop_idx):
    T = word_emb.shape[0]
    kernel = functools.partial(_fused_kernel, start_idx=start_idx, stop_idx=stop_idx)
    return pl.pallas_call(
        kernel,
        out_shape=(jax.ShapeDtypeStruct((1, T), jnp.int32),   # best path
                   jax.ShapeDtypeStruct((1, 1), jnp.float32),  # path score
                   jax.ShapeDtypeStruct((1, 1), jnp.int32)),   # start-tag check
        in_specs=[_VMEM] * 20,
        out_specs=(_VMEM, _VMEM, _VMEM),
    )(x_char2d, word_emb,
      p["c_wih_f"], p["c_whh_f"], p["c_b_f"],
      p["c_wih_b"], p["c_b_b"],
      p["w_wih_f"], p["w_whh_f"], p["w_b_f"],
      p["w_wih_b"], p["w_whh_b"], p["w_b_b"],
      p["h0"][0], p["c0"][0], p["h0"][1], p["c0"][1],
      p["h2t_w"], p["h2t_b"], p["transitions"])


@functools.partial(jax.jit, static_argnums=(3, 4))
def _forward_device(params, word_ids, char_ids, start_idx, stop_idx):
    T, C = char_ids.shape
    Dc = params["char_emb"].shape[1]
    # embedding gathers stay in XLA; everything downstream is one fused kernel
    char_emb = jnp.take(params["char_emb"], char_ids, axis=0)        # (T, C, Dc)
    x_char2d = jnp.transpose(char_emb, (1, 0, 2)).reshape(C * T, Dc)  # time-major blocks
    word_emb = jnp.take(params["word_emb"], word_ids, axis=0)         # (T, E)
    return run_fused(x_char2d, word_emb, params, start_idx, stop_idx)


# --------------------------------------------------------------------------
# Model: parameters + forward
# --------------------------------------------------------------------------

def init_params(key, V, CV, E, Dc, H, K, tag_to_ix):
    keys = list(jax.random.split(key, 24))

    def nrm(shape, scale=0.1):
        return (scale * jax.random.normal(keys.pop(), shape)).astype(jnp.float32)

    Din_w = E + 2 * Dc
    # NOTE: gate columns of all W_ih / W_hh / b are in [i, f, o, g] order
    # (PyTorch stores [i, f, g, o]; a checkpoint converter must permute columns).
    p = dict(
        char_emb=nrm((CV, Dc), 1.0),
        word_emb=nrm((V, E), 1.0),
        # char BiLSTM: nn.LSTM(Dc, Dc, bidirectional=True)
        c_wih_f=nrm((Dc, 4 * Dc)), c_whh_f=nrm((Dc, 4 * Dc)), c_b_f=nrm((1, 4 * Dc)),
        # c_whh_b exists as a parameter but is unused in forward: the backward char
        # feature only needs one step from a zero hidden state (h0 @ W_hh_b == 0).
        c_wih_b=nrm((Dc, 4 * Dc)), c_whh_b=nrm((Dc, 4 * Dc)), c_b_b=nrm((1, 4 * Dc)),
        # word BiLSTM: nn.LSTM(E + 2*Dc, H, bidirectional=True)
        w_wih_f=nrm((Din_w, 4 * H)), w_whh_f=nrm((H, 4 * H)), w_b_f=nrm((1, 4 * H)),
        w_wih_b=nrm((Din_w, 4 * H)), w_whh_b=nrm((H, 4 * H)), w_b_b=nrm((1, 4 * H)),
        # hidden2tag: Linear(2H, K)
        h2t_w=nrm((2 * H, K)), h2t_b=nrm((1, K)),
        # deterministic stand-in for init_hidden() = torch.randn(2, 1, H)
        h0=nrm((2, 1, H), 1.0), c0=nrm((2, 1, H), 1.0),
    )
    trans = jax.random.normal(keys.pop(), (K, K)).astype(jnp.float32)
    trans = trans.at[tag_to_ix[START_TAG], :].set(-10000.0)
    trans = trans.at[:, tag_to_ix[STOP_TAG]].set(-10000.0)
    p["transitions"] = trans
    return p


def bilstm_crf_forward(params, word_ids, char_ids, tag_to_ix):
    start_idx = tag_to_ix[START_TAG]
    stop_idx = tag_to_ix[STOP_TAG]
    path, score, start_chk = _forward_device(params, word_ids, char_ids,
                                             start_idx, stop_idx)
    path_np = np.asarray(jax.device_get(path))[0]
    assert int(np.asarray(jax.device_get(start_chk))[0, 0]) == start_idx
    best_path = [int(v) for v in path_np]
    return score[0, 0], best_path


# --------------------------------------------------------------------------
# main
# --------------------------------------------------------------------------

if __name__ == "__main__":
    key = jax.random.PRNGKey(0)

    # small shapes consistent with the module
    T, C = 8, 6                 # sentence length, chars per word
    V, CV = 20, 30              # word vocab, char vocab
    E, Dc, H = 16, 8, 16        # embedding_dim, char_embedding_dim, hidden_dim
    tag_to_ix = {"B": 0, "I": 1, "O": 2, START_TAG: 3, STOP_TAG: 4}
    K = len(tag_to_ix)

    k_param, k_data = jax.random.split(key)
    params = init_params(k_param, V, CV, E, Dc, H, K, tag_to_ix)

    k_w, k_c = jax.random.split(k_data)
    word_ids = jax.random.randint(k_w, (T,), 0, V, dtype=jnp.int32)
    char_ids = jax.random.randint(k_c, (T, C), 0, CV, dtype=jnp.int32)

    score, tag_seq = bilstm_crf_forward(params, word_ids, char_ids, tag_to_ix)
    jax.block_until_ready(score)
    assert len(tag_seq) == T
    assert all(0 <= t < K for t in tag_seq)
    print("KERNEL_OK")
</pallas_src>

<mosaic_0001>
module attributes {stable_mosaic.version = 11 : i64} {
  func.func @_fused_kernel(%arg0: memref<48x8xf32, #tpu.memory_space<vmem>>, %arg1: memref<8x16xf32, #tpu.memory_space<vmem>>, %arg2: memref<8x32xf32, #tpu.memory_space<vmem>>, %arg3: memref<8x32xf32, #tpu.memory_space<vmem>>, %arg4: memref<1x32xf32, #tpu.memory_space<vmem>>, %arg5: memref<8x32xf32, #tpu.memory_space<vmem>>, %arg6: memref<1x32xf32, #tpu.memory_space<vmem>>, %arg7: memref<32x64xf32, #tpu.memory_space<vmem>>, %arg8: memref<16x64xf32, #tpu.memory_space<vmem>>, %arg9: memref<1x64xf32, #tpu.memory_space<vmem>>, %arg10: memref<32x64xf32, #tpu.memory_space<vmem>>, %arg11: memref<16x64xf32, #tpu.memory_space<vmem>>, %arg12: memref<1x64xf32, #tpu.memory_space<vmem>>, %arg13: memref<1x16xf32, #tpu.memory_space<vmem>>, %arg14: memref<1x16xf32, #tpu.memory_space<vmem>>, %arg15: memref<1x16xf32, #tpu.memory_space<vmem>>, %arg16: memref<1x16xf32, #tpu.memory_space<vmem>>, %arg17: memref<32x5xf32, #tpu.memory_space<vmem>>, %arg18: memref<1x5xf32, #tpu.memory_space<vmem>>, %arg19: memref<5x5xf32, #tpu.memory_space<vmem>>, %arg20: memref<1x8xi32, #tpu.memory_space<vmem>>, %arg21: memref<1x1xf32, #tpu.memory_space<vmem>>, %arg22: memref<1x1xi32, #tpu.memory_space<vmem>>) attributes {dimension_semantics = [], scalar_prefetch = 0 : i64, scratch_operands = 0 : i64, tpu.core_type = #tpu.core_type<tc>} {
    %c0 = arith.constant 0 : index
    %c0_0 = arith.constant 0 : index
    %0 = vector.load %arg0[%c0, %c0_0] : memref<48x8xf32, #tpu.memory_space<vmem>>, vector<48x8xf32>
    %c0_1 = arith.constant 0 : index
    %c0_2 = arith.constant 0 : index
    %1 = vector.load %arg1[%c0_1, %c0_2] : memref<8x16xf32, #tpu.memory_space<vmem>>, vector<8x16xf32>
    %c0_3 = arith.constant 0 : index
    %c0_4 = arith.constant 0 : index
    %2 = vector.load %arg2[%c0_3, %c0_4] : memref<8x32xf32, #tpu.memory_space<vmem>>, vector<8x32xf32>
    %cst = arith.constant dense<0.000000e+00> : vector<48x32xf32>
    %3 = tpu.matmul %0, %2, %cst {dimension_numbers = #tpu.dot_dimension_numbers<[1], [0], [0], [1], [0, 0, 1, 1], [], []>} : vector<48x8xf32>, vector<8x32xf32>, vector<48x32xf32> -> vector<48x32xf32>
    %c0_5 = arith.constant 0 : index
    %c0_6 = arith.constant 0 : index
    %4 = vector.load %arg4[%c0_5, %c0_6] : memref<1x32xf32, #tpu.memory_space<vmem>>, vector<1x32xf32>
    %5 = vector.broadcast %4 : vector<1x32xf32> to vector<48x32xf32>
    %6 = arith.addf %3, %5 : vector<48x32xf32>
    %c0_7 = arith.constant 0 : index
    %c0_8 = arith.constant 0 : index
    %7 = vector.load %arg3[%c0_7, %c0_8] : memref<8x32xf32, #tpu.memory_space<vmem>>, vector<8x32xf32>
    %cst_9 = arith.constant 0.000000e+00 : f32
    %8 = vector.broadcast %cst_9 : f32 to vector<8x8xf32>
    %cst_10 = arith.constant 0.000000e+00 : f32
    %9 = vector.broadcast %cst_10 : f32 to vector<8x8xf32>
    %10 = vector.extract_strided_slice %6 {offsets = [0, 0], sizes = [8, 32], strides = [1, 1]} : vector<48x32xf32> to vector<8x32xf32>
    %cst_11 = arith.constant dense<0.000000e+00> : vector<8x32xf32>
    %11 = tpu.matmul %8, %7, %cst_11 {dimension_numbers = #tpu.dot_dimension_numbers<[1], [0], [0], [1], [0, 0, 1, 1], [], []>} : vector<8x8xf32>, vector<8x32xf32>, vector<8x32xf32> -> vector<8x32xf32>
    %12 = arith.addf %10, %11 : vector<8x32xf32>
    %13 = vector.extract_strided_slice %12 {offsets = [0, 0], sizes = [8, 24], strides = [1, 1]} : vector<8x32xf32> to vector<8x24xf32>
    %14 = arith.negf %13 : vector<8x24xf32>
    %15 = math.exp %14 : vector<8x24xf32>
    %cst_12 = arith.constant 1.000000e+00 : f32
    %16 = vector.broadcast %cst_12 : f32 to vector<8x24xf32>
    %17 = arith.addf %16, %15 : vector<8x24xf32>
    %18 = arith.divf %16, %17 : vector<8x24xf32>
    %19 = vector.extract_strided_slice %18 {offsets = [0, 0], sizes = [8, 8], strides = [1, 1]} : vector<8x24xf32> to vector<8x8xf32>
    %20 = vector.extract_strided_slice %18 {offsets = [0, 8], sizes = [8, 8], strides = [1, 1]} : vector<8x24xf32> to vector<8x8xf32>
    %21 = vector.extract_strided_slice %18 {offsets = [0, 16], sizes = [8, 8], strides = [1, 1]} : vector<8x24xf32> to vector<8x8xf32>
    %22 = vector.extract_strided_slice %12 {offsets = [0, 24], sizes = [8, 8], strides = [1, 1]} : vector<8x32xf32> to vector<8x8xf32>
    %23 = math.tanh %22 : vector<8x8xf32>
    %24 = arith.mulf %20, %9 : vector<8x8xf32>
    %25 = arith.mulf %19, %23 : vector<8x8xf32>
    %26 = arith.addf %24, %25 : vector<8x8xf32>
    %27 = math.tanh %26 : vector<8x8xf32>
    %28 = arith.mulf %21, %27 : vector<8x8xf32>
    %29 = vector.extract_strided_slice %6 {offsets = [8, 0], sizes = [8, 32], strides = [1, 1]} : vector<48x32xf32> to vector<8x32xf32>
    %cst_13 = arith.constant dense<0.000000e+00> : vector<8x32xf32>
    %30 = tpu.matmul %28, %7, %cst_13 {dimension_numbers = #tpu.dot_dimension_numbers<[1], [0], [0], [1], [0, 0, 1, 1], [], []>} : vector<8x8xf32>, vector<8x32xf32>, vector<8x32xf32> -> vector<8x32xf32>
    %31 = arith.addf %29, %30 : vector<8x32xf32>
    %32 = vector.extract_strided_slice %31 {offsets = [0, 0], sizes = [8, 24], strides = [1, 1]} : vector<8x32xf32> to vector<8x24xf32>
    %33 = arith.negf %32 : vector<8x24xf32>
    %34 = math.exp %33 : vector<8x24xf32>
    %cst_14 = arith.constant 1.000000e+00 : f32
    %35 = vector.broadcast %cst_14 : f32 to vector<8x24xf32>
    %36 = arith.addf %35, %34 : vector<8x24xf32>
    %37 = arith.divf %35, %36 : vector<8x24xf32>
    %38 = vector.extract_strided_slice %37 {offsets = [0, 0], sizes = [8, 8], strides = [1, 1]} : vector<8x24xf32> to vector<8x8xf32>
    %39 = vector.extract_strided_slice %37 {offsets = [0, 8], sizes = [8, 8], strides = [1, 1]} : vector<8x24xf32> to vector<8x8xf32>
    %40 = vector.extract_strided_slice %37 {offsets = [0, 16], sizes = [8, 8], strides = [1, 1]} : vector<8x24xf32> to vector<8x8xf32>
    %41 = vector.extract_strided_slice %31 {offsets = [0, 24], sizes = [8, 8], strides = [1, 1]} : vector<8x32xf32> to vector<8x8xf32>
    %42 = math.tanh %41 : vector<8x8xf32>
    %43 = arith.mulf %39, %26 : vector<8x8xf32>
    %44 = arith.mulf %38, %42 : vector<8x8xf32>
    %45 = arith.addf %43, %44 : vector<8x8xf32>
    %46 = math.tanh %45 : vector<8x8xf32>
    %47 = arith.mulf %40, %46 : vector<8x8xf32>
    %48 = vector.extract_strided_slice %6 {offsets = [16, 0], sizes = [8, 32], strides = [1, 1]} : vector<48x32xf32> to vector<8x32xf32>
    %cst_15 = arith.constant dense<0.000000e+00> : vector<8x32xf32>
    %49 = tpu.matmul %47, %7, %cst_15 {dimension_numbers = #tpu.dot_dimension_numbers<[1], [0], [0], [1], [0, 0, 1, 1], [], []>} : vector<8x8xf32>, vector<8x32xf32>, vector<8x32xf32> -> vector<8x32xf32>
    %50 = arith.addf %48, %49 : vector<8x32xf32>
    %51 = vector.extract_strided_slice %50 {offsets = [0, 0], sizes = [8, 24], strides = [1, 1]} : vector<8x32xf32> to vector<8x24xf32>
    %52 = arith.negf %51 : vector<8x24xf32>
    %53 = math.exp %52 : vector<8x24xf32>
    %cst_16 = arith.constant 1.000000e+00 : f32
    %54 = vector.broadcast %cst_16 : f32 to vector<8x24xf32>
    %55 = arith.addf %54, %53 : vector<8x24xf32>
    %56 = arith.divf %54, %55 : vector<8x24xf32>
    %57 = vector.extract_strided_slice %56 {offsets = [0, 0], sizes = [8, 8], strides = [1, 1]} : vector<8x24xf32> to vector<8x8xf32>
    %58 = vector.extract_strided_slice %56 {offsets = [0, 8], sizes = [8, 8], strides = [1, 1]} : vector<8x24xf32> to vector<8x8xf32>
    %59 = vector.extract_strided_slice %56 {offsets = [0, 16], sizes = [8, 8], strides = [1, 1]} : vector<8x24xf32> to vector<8x8xf32>
    %60 = vector.extract_strided_slice %50 {offsets = [0, 24], sizes = [8, 8], strides = [1, 1]} : vector<8x32xf32> to vector<8x8xf32>
    %61 = math.tanh %60 : vector<8x8xf32>
    %62 = arith.mulf %58, %45 : vector<8x8xf32>
    %63 = arith.mulf %57, %61 : vector<8x8xf32>
    %64 = arith.addf %62, %63 : vector<8x8xf32>
    %65 = math.tanh %64 : vector<8x8xf32>
    %66 = arith.mulf %59, %65 : vector<8x8xf32>
    %67 = vector.extract_strided_slice %6 {offsets = [24, 0], sizes = [8, 32], strides = [1, 1]} : vector<48x32xf32> to vector<8x32xf32>
    %cst_17 = arith.constant dense<0.000000e+00> : vector<8x32xf32>
    %68 = tpu.matmul %66, %7, %cst_17 {dimension_numbers = #tpu.dot_dimension_numbers<[1], [0], [0], [1], [0, 0, 1, 1], [], []>} : vector<8x8xf32>, vector<8x32xf32>, vector<8x32xf32> -> vector<8x32xf32>
    %69 = arith.addf %67, %68 : vector<8x32xf32>
    %70 = vector.extract_strided_slice %69 {offsets = [0, 0], sizes = [8, 24], strides = [1, 1]} : vector<8x32xf32> to vector<8x24xf32>
    %71 = arith.negf %70 : vector<8x24xf32>
    %72 = math.exp %71 : vector<8x24xf32>
    %cst_18 = arith.constant 1.000000e+00 : f32
    %73 = vector.broadcast %cst_18 : f32 to vector<8x24xf32>
    %74 = arith.addf %73, %72 : vector<8x24xf32>
    %75 = arith.divf %73, %74 : vector<8x24xf32>
    %76 = vector.extract_strided_slice %75 {offsets = [0, 0], sizes = [8, 8], strides = [1, 1]} : vector<8x24xf32> to vector<8x8xf32>
    %77 = vector.extract_strided_slice %75 {offsets = [0, 8], sizes = [8, 8], strides = [1, 1]} : vector<8x24xf32> to vector<8x8xf32>
    %78 = vector.extract_strided_slice %75 {offsets = [0, 16], sizes = [8, 8], strides = [1, 1]} : vector<8x24xf32> to vector<8x8xf32>
    %79 = vector.extract_strided_slice %69 {offsets = [0, 24], sizes = [8, 8], strides = [1, 1]} : vector<8x32xf32> to vector<8x8xf32>
    %80 = math.tanh %79 : vector<8x8xf32>
    %81 = arith.mulf %77, %64 : vector<8x8xf32>
    %82 = arith.mulf %76, %80 : vector<8x8xf32>
    %83 = arith.addf %81, %82 : vector<8x8xf32>
    %84 = math.tanh %83 : vector<8x8xf32>
    %85 = arith.mulf %78, %84 : vector<8x8xf32>
    %86 = vector.extract_strided_slice %6 {offsets = [32, 0], sizes = [8, 32], strides = [1, 1]} : vector<48x32xf32> to vector<8x32xf32>
    %cst_19 = arith.constant dense<0.000000e+00> : vector<8x32xf32>
    %87 = tpu.matmul %85, %7, %cst_19 {dimension_numbers = #tpu.dot_dimension_numbers<[1], [0], [0], [1], [0, 0, 1, 1], [], []>} : vector<8x8xf32>, vector<8x32xf32>, vector<8x32xf32> -> vector<8x32xf32>
    %88 = arith.addf %86, %87 : vector<8x32xf32>
    %89 = vector.extract_strided_slice %88 {offsets = [0, 0], sizes = [8, 24], strides = [1, 1]} : vector<8x32xf32> to vector<8x24xf32>
    %90 = arith.negf %89 : vector<8x24xf32>
    %91 = math.exp %90 : vector<8x24xf32>
    %cst_20 = arith.constant 1.000000e+00 : f32
    %92 = vector.broadcast %cst_20 : f32 to vector<8x24xf32>
    %93 = arith.addf %92, %91 : vector<8x24xf32>
    %94 = arith.divf %92, %93 : vector<8x24xf32>
    %95 = vector.extract_strided_slice %94 {offsets = [0, 0], sizes = [8, 8], strides = [1, 1]} : vector<8x24xf32> to vector<8x8xf32>
    %96 = vector.extract_strided_slice %94 {offsets = [0, 8], sizes = [8, 8], strides = [1, 1]} : vector<8x24xf32> to vector<8x8xf32>
    %97 = vector.extract_strided_slice %94 {offsets = [0, 16], sizes = [8, 8], strides = [1, 1]} : vector<8x24xf32> to vector<8x8xf32>
    %98 = vector.extract_strided_slice %88 {offsets = [0, 24], sizes = [8, 8], strides = [1, 1]} : vector<8x32xf32> to vector<8x8xf32>
    %99 = math.tanh %98 : vector<8x8xf32>
    %100 = arith.mulf %96, %83 : vector<8x8xf32>
    %101 = arith.mulf %95, %99 : vector<8x8xf32>
    %102 = arith.addf %100, %101 : vector<8x8xf32>
    %103 = math.tanh %102 : vector<8x8xf32>
    %104 = arith.mulf %97, %103 : vector<8x8xf32>
    %105 = vector.extract_strided_slice %6 {offsets = [40, 0], sizes = [8, 32], strides = [1, 1]} : vector<48x32xf32> to vector<8x32xf32>
    %cst_21 = arith.constant dense<0.000000e+00> : vector<8x32xf32>
    %106 = tpu.matmul %104, %7, %cst_21 {dimension_numbers = #tpu.dot_dimension_numbers<[1], [0], [0], [1], [0, 0, 1, 1], [], []>} : vector<8x8xf32>, vector<8x32xf32>, vector<8x32xf32> -> vector<8x32xf32>
    %107 = arith.addf %105, %106 : vector<8x32xf32>
    %108 = vector.extract_strided_slice %107 {offsets = [0, 0], sizes = [8, 24], strides = [1, 1]} : vector<8x32xf32> to vector<8x24xf32>
    %109 = arith.negf %108 : vector<8x24xf32>
    %110 = math.exp %109 : vector<8x24xf32>
    %cst_22 = arith.constant 1.000000e+00 : f32
    %111 = vector.broadcast %cst_22 : f32 to vector<8x24xf32>
    %112 = arith.addf %111, %110 : vector<8x24xf32>
    %113 = arith.divf %111, %112 : vector<8x24xf32>
    %114 = vector.extract_strided_slice %113 {offsets = [0, 0], sizes = [8, 8], strides = [1, 1]} : vector<8x24xf32> to vector<8x8xf32>
    %115 = vector.extract_strided_slice %113 {offsets = [0, 8], sizes = [8, 8], strides = [1, 1]} : vector<8x24xf32> to vector<8x8xf32>
    %116 = vector.extract_strided_slice %113 {offsets = [0, 16], sizes = [8, 8], strides = [1, 1]} : vector<8x24xf32> to vector<8x8xf32>
    %117 = vector.extract_strided_slice %107 {offsets = [0, 24], sizes = [8, 8], strides = [1, 1]} : vector<8x32xf32> to vector<8x8xf32>
    %118 = math.tanh %117 : vector<8x8xf32>
    %119 = arith.mulf %115, %102 : vector<8x8xf32>
    %120 = arith.mulf %114, %118 : vector<8x8xf32>
    %121 = arith.addf %119, %120 : vector<8x8xf32>
    %122 = math.tanh %121 : vector<8x8xf32>
    %123 = arith.mulf %116, %122 : vector<8x8xf32>
    %124 = vector.extract_strided_slice %0 {offsets = [40, 0], sizes = [8, 8], strides = [1, 1]} : vector<48x8xf32> to vector<8x8xf32>
    %c0_23 = arith.constant 0 : index
    %c0_24 = arith.constant 0 : index
    %125 = vector.load %arg5[%c0_23, %c0_24] : memref<8x32xf32, #tpu.memory_space<vmem>>, vector<8x32xf32>
    %cst_25 = arith.constant dense<0.000000e+00> : vector<8x32xf32>
    %126 = tpu.matmul %124, %125, %cst_25 {dimension_numbers = #tpu.dot_dimension_numbers<[1], [0], [0], [1], [0, 0, 1, 1], [], []>} : vector<8x8xf32>, vector<8x32xf32>, vector<8x32xf32> -> vector<8x32xf32>
    %c0_26 = arith.constant 0 : index
    %c0_27 = arith.constant 0 : index
    %127 = vector.load %arg6[%c0_26, %c0_27] : memref<1x32xf32, #tpu.memory_space<vmem>>, vector<1x32xf32>
    %128 = vector.broadcast %127 : vector<1x32xf32> to vector<8x32xf32>
    %129 = arith.addf %126, %128 : vector<8x32xf32>
    %cst_28 = arith.constant 0.000000e+00 : f32
    %130 = vector.broadcast %cst_28 : f32 to vector<8x8xf32>
    %131 = vector.extract_strided_slice %129 {offsets = [0, 0], sizes = [8, 24], strides = [1, 1]} : vector<8x32xf32> to vector<8x24xf32>
    %132 = arith.negf %131 : vector<8x24xf32>
    %133 = math.exp %132 : vector<8x24xf32>
    %cst_29 = arith.constant 1.000000e+00 : f32
    %134 = vector.broadcast %cst_29 : f32 to vector<8x24xf32>
    %135 = arith.addf %134, %133 : vector<8x24xf32>
    %136 = arith.divf %134, %135 : vector<8x24xf32>
    %137 = vector.extract_strided_slice %136 {offsets = [0, 0], sizes = [8, 8], strides = [1, 1]} : vector<8x24xf32> to vector<8x8xf32>
    %138 = vector.extract_strided_slice %136 {offsets = [0, 8], sizes = [8, 8], strides = [1, 1]} : vector<8x24xf32> to vector<8x8xf32>
    %139 = vector.extract_strided_slice %136 {offsets = [0, 16], sizes = [8, 8], strides = [1, 1]} : vector<8x24xf32> to vector<8x8xf32>
    %140 = vector.extract_strided_slice %129 {offsets = [0, 24], sizes = [8, 8], strides = [1, 1]} : vector<8x32xf32> to vector<8x8xf32>
    %141 = math.tanh %140 : vector<8x8xf32>
    %142 = arith.mulf %138, %130 : vector<8x8xf32>
    %143 = arith.mulf %137, %141 : vector<8x8xf32>
    %144 = arith.addf %142, %143 : vector<8x8xf32>
    %145 = math.tanh %144 : vector<8x8xf32>
    %146 = arith.mulf %139, %145 : vector<8x8xf32>
    %c0_30 = arith.constant 0 : index
    %c0_31 = arith.constant 0 : index
    %147 = vector.load %arg7[%c0_30, %c0_31] : memref<32x64xf32, #tpu.memory_space<vmem>>, vector<32x64xf32>
    %c0_32 = arith.constant 0 : index
    %c0_33 = arith.constant 0 : index
    %148 = vector.load %arg10[%c0_32, %c0_33] : memref<32x64xf32, #tpu.memory_space<vmem>>, vector<32x64xf32>
    %149 = vector.extract_strided_slice %147 {offsets = [0, 0], sizes = [16, 64], strides = [1, 1]} : vector<32x64xf32> to vector<16x64xf32>
    %cst_34 = arith.constant dense<0.000000e+00> : vector<8x64xf32>
    %150 = tpu.matmul %1, %149, %cst_34 {dimension_numbers = #tpu.dot_dimension_numbers<[1], [0], [0], [1], [0, 0, 1, 1], [], []>} : vector<8x16xf32>, vector<16x64xf32>, vector<8x64xf32> -> vector<8x64xf32>
    %151 = vector.extract_strided_slice %147 {offsets = [16, 0], sizes = [8, 64], strides = [1, 1]} : vector<32x64xf32> to vector<8x64xf32>
    %cst_35 = arith.constant dense<0.000000e+00> : vector<8x64xf32>
    %152 = tpu.matmul %123, %151, %cst_35 {dimension_numbers = #tpu.dot_dimension_numbers<[1], [0], [0], [1], [0, 0, 1, 1], [], []>} : vector<8x8xf32>, vector<8x64xf32>, vector<8x64xf32> -> vector<8x64xf32>
    %153 = arith.addf %150, %152 : vector<8x64xf32>
    %154 = vector.extract_strided_slice %147 {offsets = [24, 0], sizes = [8, 64], strides = [1, 1]} : vector<32x64xf32> to vector<8x64xf32>
    %cst_36 = arith.constant dense<0.000000e+00> : vector<8x64xf32>
    %155 = tpu.matmul %146, %154, %cst_36 {dimension_numbers = #tpu.dot_dimension_numbers<[1], [0], [0], [1], [0, 0, 1, 1], [], []>} : vector<8x8xf32>, vector<8x64xf32>, vector<8x64xf32> -> vector<8x64xf32>
    %156 = arith.addf %153, %155 : vector<8x64xf32>
    %c0_37 = arith.constant 0 : index
    %c0_38 = arith.constant 0 : index
    %157 = vector.load %arg9[%c0_37, %c0_38] : memref<1x64xf32, #tpu.memory_space<vmem>>, vector<1x64xf32>
    %158 = vector.broadcast %157 : vector<1x64xf32> to vector<8x64xf32>
    %159 = arith.addf %156, %158 : vector<8x64xf32>
    %160 = vector.extract_strided_slice %148 {offsets = [0, 0], sizes = [16, 64], strides = [1, 1]} : vector<32x64xf32> to vector<16x64xf32>
    %cst_39 = arith.constant dense<0.000000e+00> : vector<8x64xf32>
    %161 = tpu.matmul %1, %160, %cst_39 {dimension_numbers = #tpu.dot_dimension_numbers<[1], [0], [0], [1], [0, 0, 1, 1], [], []>} : vector<8x16xf32>, vector<16x64xf32>, vector<8x64xf32> -> vector<8x64xf32>
    %162 = vector.extract_strided_slice %148 {offsets = [16, 0], sizes = [8, 64], strides = [1, 1]} : vector<32x64xf32> to vector<8x64xf32>
    %cst_40 = arith.constant dense<0.000000e+00> : vector<8x64xf32>
    %163 = tpu.matmul %123, %162, %cst_40 {dimension_numbers = #tpu.dot_dimension_numbers<[1], [0], [0], [1], [0, 0, 1, 1], [], []>} : vector<8x8xf32>, vector<8x64xf32>, vector<8x64xf32> -> vector<8x64xf32>
    %164 = arith.addf %161, %163 : vector<8x64xf32>
    %165 = vector.extract_strided_slice %148 {offsets = [24, 0], sizes = [8, 64], strides = [1, 1]} : vector<32x64xf32> to vector<8x64xf32>
    %cst_41 = arith.constant dense<0.000000e+00> : vector<8x64xf32>
    %166 = tpu.matmul %146, %165, %cst_41 {dimension_numbers = #tpu.dot_dimension_numbers<[1], [0], [0], [1], [0, 0, 1, 1], [], []>} : vector<8x8xf32>, vector<8x64xf32>, vector<8x64xf32> -> vector<8x64xf32>
    %167 = arith.addf %164, %166 : vector<8x64xf32>
    %c0_42 = arith.constant 0 : index
    %c0_43 = arith.constant 0 : index
    %168 = vector.load %arg12[%c0_42, %c0_43] : memref<1x64xf32, #tpu.memory_space<vmem>>, vector<1x64xf32>
    %169 = vector.broadcast %168 : vector<1x64xf32> to vector<8x64xf32>
    %170 = arith.addf %167, %169 : vector<8x64xf32>
    %c0_44 = arith.constant 0 : index
    %c0_45 = arith.constant 0 : index
    %171 = vector.load %arg8[%c0_44, %c0_45] : memref<16x64xf32, #tpu.memory_space<vmem>>, vector<16x64xf32>
    %c0_46 = arith.constant 0 : index
    %c0_47 = arith.constant 0 : index
    %172 = vector.load %arg11[%c0_46, %c0_47] : memref<16x64xf32, #tpu.memory_space<vmem>>, vector<16x64xf32>
    %173 = tpu.iota {dimensions = array<i32: 0>} : vector<8x1xi32>
    %cst_48 = arith.constant 0.000000e+00 : f32
    %174 = vector.broadcast %cst_48 : f32 to vector<8x16xf32>
    %cst_49 = arith.constant 0.000000e+00 : f32
    %175 = vector.broadcast %cst_49 : f32 to vector<8x16xf32>
    %c0_50 = arith.constant 0 : index
    %c0_51 = arith.constant 0 : index
    %176 = vector.load %arg13[%c0_50, %c0_51] : memref<1x16xf32, #tpu.memory_space<vmem>>, vector<1x16xf32>
    %c0_52 = arith.constant 0 : index
    %c0_53 = arith.constant 0 : index
    %177 = vector.load %arg14[%c0_52, %c0_53] : memref<1x16xf32, #tpu.memory_space<vmem>>, vector<1x16xf32>
    %c0_54 = arith.constant 0 : index
    %c0_55 = arith.constant 0 : index
    %178 = vector.load %arg15[%c0_54, %c0_55] : memref<1x16xf32, #tpu.memory_space<vmem>>, vector<1x16xf32>
    %c0_56 = arith.constant 0 : index
    %c0_57 = arith.constant 0 : index
    %179 = vector.load %arg16[%c0_56, %c0_57] : memref<1x16xf32, #tpu.memory_space<vmem>>, vector<1x16xf32>
    %180 = vector.extract_strided_slice %159 {offsets = [0, 0], sizes = [1, 64], strides = [1, 1]} : vector<8x64xf32> to vector<1x64xf32>
    %cst_58 = arith.constant dense<0.000000e+00> : vector<1x64xf32>
    %181 = tpu.matmul %176, %171, %cst_58 {dimension_numbers = #tpu.dot_dimension_numbers<[1], [0], [0], [1], [0, 0, 1, 1], [], []>} : vector<1x16xf32>, vector<16x64xf32>, vector<1x64xf32> -> vector<1x64xf32>
    %182 = arith.addf %180, %181 : vector<1x64xf32>
    %183 = vector.extract_strided_slice %182 {offsets = [0, 0], sizes = [1, 48], strides = [1, 1]} : vector<1x64xf32> to vector<1x48xf32>
    %184 = arith.negf %183 : vector<1x48xf32>
    %185 = math.exp %184 : vector<1x48xf32>
    %cst_59 = arith.constant 1.000000e+00 : f32
    %186 = vector.broadcast %cst_59 : f32 to vector<1x48xf32>
    %187 = arith.addf %186, %185 : vector<1x48xf32>
    %188 = arith.divf %186, %187 : vector<1x48xf32>
    %189 = vector.extract_strided_slice %188 {offsets = [0, 0], sizes = [1, 16], strides = [1, 1]} : vector<1x48xf32> to vector<1x16xf32>
    %190 = vector.extract_strided_slice %188 {offsets = [0, 16], sizes = [1, 16], strides = [1, 1]} : vector<1x48xf32> to vector<1x16xf32>
    %191 = vector.extract_strided_slice %188 {offsets = [0, 32], sizes = [1, 16], strides = [1, 1]} : vector<1x48xf32> to vector<1x16xf32>
    %192 = vector.extract_strided_slice %182 {offsets = [0, 48], sizes = [1, 16], strides = [1, 1]} : vector<1x64xf32> to vector<1x16xf32>
    %193 = math.tanh %192 : vector<1x16xf32>
    %194 = arith.mulf %190, %177 : vector<1x16xf32>
    %195 = arith.mulf %189, %193 : vector<1x16xf32>
    %196 = arith.addf %194, %195 : vector<1x16xf32>
    %197 = math.tanh %196 : vector<1x16xf32>
    %198 = arith.mulf %191, %197 : vector<1x16xf32>
    %199 = vector.extract_strided_slice %170 {offsets = [7, 0], sizes = [1, 64], strides = [1, 1]} : vector<8x64xf32> to vector<1x64xf32>
    %cst_60 = arith.constant dense<0.000000e+00> : vector<1x64xf32>
    %200 = tpu.matmul %178, %172, %cst_60 {dimension_numbers = #tpu.dot_dimension_numbers<[1], [0], [0], [1], [0, 0, 1, 1], [], []>} : vector<1x16xf32>, vector<16x64xf32>, vector<1x64xf32> -> vector<1x64xf32>
    %201 = arith.addf %199, %200 : vector<1x64xf32>
    %202 = vector.extract_strided_slice %201 {offsets = [0, 0], sizes = [1, 48], strides = [1, 1]} : vector<1x64xf32> to vector<1x48xf32>
    %203 = arith.negf %202 : vector<1x48xf32>
    %204 = math.exp %203 : vector<1x48xf32>
    %cst_61 = arith.constant 1.000000e+00 : f32
    %205 = vector.broadcast %cst_61 : f32 to vector<1x48xf32>
    %206 = arith.addf %205, %204 : vector<1x48xf32>
    %207 = arith.divf %205, %206 : vector<1x48xf32>
    %208 = vector.extract_strided_slice %207 {offsets = [0, 0], sizes = [1, 16], strides = [1, 1]} : vector<1x48xf32> to vector<1x16xf32>
    %209 = vector.extract_strided_slice %207 {offsets = [0, 16], sizes = [1, 16], strides = [1, 1]} : vector<1x48xf32> to vector<1x16xf32>
    %210 = vector.extract_strided_slice %207 {offsets = [0, 32], sizes = [1, 16], strides = [1, 1]} : vector<1x48xf32> to vector<1x16xf32>
    %211 = vector.extract_strided_slice %201 {offsets = [0, 48], sizes = [1, 16], strides = [1, 1]} : vector<1x64xf32> to vector<1x16xf32>
    %212 = math.tanh %211 : vector<1x16xf32>
    %213 = arith.mulf %209, %179 : vector<1x16xf32>
    %214 = arith.mulf %208, %212 : vector<1x16xf32>
    %215 = arith.addf %213, %214 : vector<1x16xf32>
    %216 = math.tanh %215 : vector<1x16xf32>
    %217 = arith.mulf %210, %216 : vector<1x16xf32>
    %c0_i32 = arith.constant 0 : i32
    %218 = vector.broadcast %c0_i32 : i32 to vector<8x1xi32>
    %219 = arith.cmpi eq, %173, %218 : vector<8x1xi32>
    %220 = vector.shape_cast %219 : vector<8x1xi1> to vector<8x1xi1>
    %221 = vector.broadcast %220 : vector<8x1xi1> to vector<8x16xi1>
    %222 = vector.shape_cast %198 : vector<1x16xf32> to vector<1x16xf32>
    %223 = vector.broadcast %222 : vector<1x16xf32> to vector<8x16xf32>
    %224 = arith.select %221, %223, %174 : vector<8x16xi1>, vector<8x16xf32>
    %c7_i32 = arith.constant 7 : i32
    %225 = vector.broadcast %c7_i32 : i32 to vector<8x1xi32>
    %226 = arith.cmpi eq, %173, %225 : vector<8x1xi32>
    %227 = vector.shape_cast %226 : vector<8x1xi1> to vector<8x1xi1>
    %228 = vector.broadcast %227 : vector<8x1xi1> to vector<8x16xi1>
    %229 = vector.shape_cast %217 : vector<1x16xf32> to vector<1x16xf32>
    %230 = vector.broadcast %229 : vector<1x16xf32> to vector<8x16xf32>
    %231 = arith.select %228, %230, %175 : vector<8x16xi1>, vector<8x16xf32>
    %232 = vector.extract_strided_slice %159 {offsets = [1, 0], sizes = [1, 64], strides = [1, 1]} : vector<8x64xf32> to vector<1x64xf32>
    %cst_62 = arith.constant dense<0.000000e+00> : vector<1x64xf32>
    %233 = tpu.matmul %198, %171, %cst_62 {dimension_numbers = #tpu.dot_dimension_numbers<[1], [0], [0], [1], [0, 0, 1, 1], [], []>} : vector<1x16xf32>, vector<16x64xf32>, vector<1x64xf32> -> vector<1x64xf32>
    %234 = arith.addf %232, %233 : vector<1x64xf32>
    %235 = vector.extract_strided_slice %234 {offsets = [0, 0], sizes = [1, 48], strides = [1, 1]} : vector<1x64xf32> to vector<1x48xf32>
    %236 = arith.negf %235 : vector<1x48xf32>
    %237 = math.exp %236 : vector<1x48xf32>
    %cst_63 = arith.constant 1.000000e+00 : f32
    %238 = vector.broadcast %cst_63 : f32 to vector<1x48xf32>
    %239 = arith.addf %238, %237 : vector<1x48xf32>
    %240 = arith.divf %238, %239 : vector<1x48xf32>
    %241 = vector.extract_strided_slice %240 {offsets = [0, 0], sizes = [1, 16], strides = [1, 1]} : vector<1x48xf32> to vector<1x16xf32>
    %242 = vector.extract_strided_slice %240 {offsets = [0, 16], sizes = [1, 16], strides = [1, 1]} : vector<1x48xf32> to vector<1x16xf32>
    %243 = vector.extract_strided_slice %240 {offsets = [0, 32], sizes = [1, 16], strides = [1, 1]} : vector<1x48xf32> to vector<1x16xf32>
    %244 = vector.extract_strided_slice %234 {offsets = [0, 48], sizes = [1, 16], strides = [1, 1]} : vector<1x64xf32> to vector<1x16xf32>
    %245 = math.tanh %244 : vector<1x16xf32>
    %246 = arith.mulf %242, %196 : vector<1x16xf32>
    %247 = arith.mulf %241, %245 : vector<1x16xf32>
    %248 = arith.addf %246, %247 : vector<1x16xf32>
    %249 = math.tanh %248 : vector<1x16xf32>
    %250 = arith.mulf %243, %249 : vector<1x16xf32>
    %251 = vector.extract_strided_slice %170 {offsets = [6, 0], sizes = [1, 64], strides = [1, 1]} : vector<8x64xf32> to vector<1x64xf32>
    %cst_64 = arith.constant dense<0.000000e+00> : vector<1x64xf32>
    %252 = tpu.matmul %217, %172, %cst_64 {dimension_numbers = #tpu.dot_dimension_numbers<[1], [0], [0], [1], [0, 0, 1, 1], [], []>} : vector<1x16xf32>, vector<16x64xf32>, vector<1x64xf32> -> vector<1x64xf32>
    %253 = arith.addf %251, %252 : vector<1x64xf32>
    %254 = vector.extract_strided_slice %253 {offsets = [0, 0], sizes = [1, 48], strides = [1, 1]} : vector<1x64xf32> to vector<1x48xf32>
    %255 = arith.negf %254 : vector<1x48xf32>
    %256 = math.exp %255 : vector<1x48xf32>
    %cst_65 = arith.constant 1.000000e+00 : f32
    %257 = vector.broadcast %cst_65 : f32 to vector<1x48xf32>
    %258 = arith.addf %257, %256 : vector<1x48xf32>
    %259 = arith.divf %257, %258 : vector<1x48xf32>
    %260 = vector.extract_strided_slice %259 {offsets = [0, 0], sizes = [1, 16], strides = [1, 1]} : vector<1x48xf32> to vector<1x16xf32>
    %261 = vector.extract_strided_slice %259 {offsets = [0, 16], sizes = [1, 16], strides = [1, 1]} : vector<1x48xf32> to vector<1x16xf32>
    %262 = vector.extract_strided_slice %259 {offsets = [0, 32], sizes = [1, 16], strides = [1, 1]} : vector<1x48xf32> to vector<1x16xf32>
    %263 = vector.extract_strided_slice %253 {offsets = [0, 48], sizes = [1, 16], strides = [1, 1]} : vector<1x64xf32> to vector<1x16xf32>
    %264 = math.tanh %263 : vector<1x16xf32>
    %265 = arith.mulf %261, %215 : vector<1x16xf32>
    %266 = arith.mulf %260, %264 : vector<1x16xf32>
    %267 = arith.addf %265, %266 : vector<1x16xf32>
    %268 = math.tanh %267 : vector<1x16xf32>
    %269 = arith.mulf %262, %268 : vector<1x16xf32>
    %c1_i32 = arith.constant 1 : i32
    %270 = vector.broadcast %c1_i32 : i32 to vector<8x1xi32>
    %271 = arith.cmpi eq, %173, %270 : vector<8x1xi32>
    %272 = vector.shape_cast %271 : vector<8x1xi1> to vector<8x1xi1>
    %273 = vector.broadcast %272 : vector<8x1xi1> to vector<8x16xi1>
    %274 = vector.shape_cast %250 : vector<1x16xf32> to vector<1x16xf32>
    %275 = vector.broadcast %274 : vector<1x16xf32> to vector<8x16xf32>
    %276 = arith.select %273, %275, %224 : vector<8x16xi1>, vector<8x16xf32>
    %c6_i32 = arith.constant 6 : i32
    %277 = vector.broadcast %c6_i32 : i32 to vector<8x1xi32>
    %278 = arith.cmpi eq, %173, %277 : vector<8x1xi32>
    %279 = vector.shape_cast %278 : vector<8x1xi1> to vector<8x1xi1>
    %280 = vector.broadcast %279 : vector<8x1xi1> to vector<8x16xi1>
    %281 = vector.shape_cast %269 : vector<1x16xf32> to vector<1x16xf32>
    %282 = vector.broadcast %281 : vector<1x16xf32> to vector<8x16xf32>
    %283 = arith.select %280, %282, %231 : vector<8x16xi1>, vector<8x16xf32>
    %284 = vector.extract_strided_slice %159 {offsets = [2, 0], sizes = [1, 64], strides = [1, 1]} : vector<8x64xf32> to vector<1x64xf32>
    %cst_66 = arith.constant dense<0.000000e+00> : vector<1x64xf32>
    %285 = tpu.matmul %250, %171, %cst_66 {dimension_numbers = #tpu.dot_dimension_numbers<[1], [0], [0], [1], [0, 0, 1, 1], [], []>} : vector<1x16xf32>, vector<16x64xf32>, vector<1x64xf32> -> vector<1x64xf32>
    %286 = arith.addf %284, %285 : vector<1x64xf32>
    %287 = vector.extract_strided_slice %286 {offsets = [0, 0], sizes = [1, 48], strides = [1, 1]} : vector<1x64xf32> to vector<1x48xf32>
    %288 = arith.negf %287 : vector<1x48xf32>
    %289 = math.exp %288 : vector<1x48xf32>
    %cst_67 = arith.constant 1.000000e+00 : f32
    %290 = vector.broadcast %cst_67 : f32 to vector<1x48xf32>
    %291 = arith.addf %290, %289 : vector<1x48xf32>
    %292 = arith.divf %290, %291 : vector<1x48xf32>
    %293 = vector.extract_strided_slice %292 {offsets = [0, 0], sizes = [1, 16], strides = [1, 1]} : vector<1x48xf32> to vector<1x16xf32>
    %294 = vector.extract_strided_slice %292 {offsets = [0, 16], sizes = [1, 16], strides = [1, 1]} : vector<1x48xf32> to vector<1x16xf32>
    %295 = vector.extract_strided_slice %292 {offsets = [0, 32], sizes = [1, 16], strides = [1, 1]} : vector<1x48xf32> to vector<1x16xf32>
    %296 = vector.extract_strided_slice %286 {offsets = [0, 48], sizes = [1, 16], strides = [1, 1]} : vector<1x64xf32> to vector<1x16xf32>
    %297 = math.tanh %296 : vector<1x16xf32>
    %298 = arith.mulf %294, %248 : vector<1x16xf32>
    %299 = arith.mulf %293, %297 : vector<1x16xf32>
    %300 = arith.addf %298, %299 : vector<1x16xf32>
    %301 = math.tanh %300 : vector<1x16xf32>
    %302 = arith.mulf %295, %301 : vector<1x16xf32>
    %303 = vector.extract_strided_slice %170 {offsets = [5, 0], sizes = [1, 64], strides = [1, 1]} : vector<8x64xf32> to vector<1x64xf32>
    %cst_68 = arith.constant dense<0.000000e+00> : vector<1x64xf32>
    %304 = tpu.matmul %269, %172, %cst_68 {dimension_numbers = #tpu.dot_dimension_numbers<[1], [0], [0], [1], [0, 0, 1, 1], [], []>} : vector<1x16xf32>, vector<16x64xf32>, vector<1x64xf32> -> vector<1x64xf32>
    %305 = arith.addf %303, %304 : vector<1x64xf32>
    %306 = vector.extract_strided_slice %305 {offsets = [0, 0], sizes = [1, 48], strides = [1, 1]} : vector<1x64xf32> to vector<1x48xf32>
    %307 = arith.negf %306 : vector<1x48xf32>
    %308 = math.exp %307 : vector<1x48xf32>
    %cst_69 = arith.constant 1.000000e+00 : f32
    %309 = vector.broadcast %cst_69 : f32 to vector<1x48xf32>
    %310 = arith.addf %309, %308 : vector<1x48xf32>
    %311 = arith.divf %309, %310 : vector<1x48xf32>
    %312 = vector.extract_strided_slice %311 {offsets = [0, 0], sizes = [1, 16], strides = [1, 1]} : vector<1x48xf32> to vector<1x16xf32>
    %313 = vector.extract_strided_slice %311 {offsets = [0, 16], sizes = [1, 16], strides = [1, 1]} : vector<1x48xf32> to vector<1x16xf32>
    %314 = vector.extract_strided_slice %311 {offsets = [0, 32], sizes = [1, 16], strides = [1, 1]} : vector<1x48xf32> to vector<1x16xf32>
    %315 = vector.extract_strided_slice %305 {offsets = [0, 48], sizes = [1, 16], strides = [1, 1]} : vector<1x64xf32> to vector<1x16xf32>
    %316 = math.tanh %315 : vector<1x16xf32>
    %317 = arith.mulf %313, %267 : vector<1x16xf32>
    %318 = arith.mulf %312, %316 : vector<1x16xf32>
    %319 = arith.addf %317, %318 : vector<1x16xf32>
    %320 = math.tanh %319 : vector<1x16xf32>
    %321 = arith.mulf %314, %320 : vector<1x16xf32>
    %c2_i32 = arith.constant 2 : i32
    %322 = vector.broadcast %c2_i32 : i32 to vector<8x1xi32>
    %323 = arith.cmpi eq, %173, %322 : vector<8x1xi32>
    %324 = vector.shape_cast %323 : vector<8x1xi1> to vector<8x1xi1>
    %325 = vector.broadcast %324 : vector<8x1xi1> to vector<8x16xi1>
    %326 = vector.shape_cast %302 : vector<1x16xf32> to vector<1x16xf32>
    %327 = vector.broadcast %326 : vector<1x16xf32> to vector<8x16xf32>
    %328 = arith.select %325, %327, %276 : vector<8x16xi1>, vector<8x16xf32>
    %c5_i32 = arith.constant 5 : i32
    %329 = vector.broadcast %c5_i32 : i32 to vector<8x1xi32>
    %330 = arith.cmpi eq, %173, %329 : vector<8x1xi32>
    %331 = vector.shape_cast %330 : vector<8x1xi1> to vector<8x1xi1>
    %332 = vector.broadcast %331 : vector<8x1xi1> to vector<8x16xi1>
    %333 = vector.shape_cast %321 : vector<1x16xf32> to vector<1x16xf32>
    %334 = vector.broadcast %333 : vector<1x16xf32> to vector<8x16xf32>
    %335 = arith.select %332, %334, %283 : vector<8x16xi1>, vector<8x16xf32>
    %336 = vector.extract_strided_slice %159 {offsets = [3, 0], sizes = [1, 64], strides = [1, 1]} : vector<8x64xf32> to vector<1x64xf32>
    %cst_70 = arith.constant dense<0.000000e+00> : vector<1x64xf32>
    %337 = tpu.matmul %302, %171, %cst_70 {dimension_numbers = #tpu.dot_dimension_numbers<[1], [0], [0], [1], [0, 0, 1, 1], [], []>} : vector<1x16xf32>, vector<16x64xf32>, vector<1x64xf32> -> vector<1x64xf32>
    %338 = arith.addf %336, %337 : vector<1x64xf32>
    %339 = vector.extract_strided_slice %338 {offsets = [0, 0], sizes = [1, 48], strides = [1, 1]} : vector<1x64xf32> to vector<1x48xf32>
    %340 = arith.negf %339 : vector<1x48xf32>
    %341 = math.exp %340 : vector<1x48xf32>
    %cst_71 = arith.constant 1.000000e+00 : f32
    %342 = vector.broadcast %cst_71 : f32 to vector<1x48xf32>
    %343 = arith.addf %342, %341 : vector<1x48xf32>
    %344 = arith.divf %342, %343 : vector<1x48xf32>
    %345 = vector.extract_strided_slice %344 {offsets = [0, 0], sizes = [1, 16], strides = [1, 1]} : vector<1x48xf32> to vector<1x16xf32>
    %346 = vector.extract_strided_slice %344 {offsets = [0, 16], sizes = [1, 16], strides = [1, 1]} : vector<1x48xf32> to vector<1x16xf32>
    %347 = vector.extract_strided_slice %344 {offsets = [0, 32], sizes = [1, 16], strides = [1, 1]} : vector<1x48xf32> to vector<1x16xf32>
    %348 = vector.extract_strided_slice %338 {offsets = [0, 48], sizes = [1, 16], strides = [1, 1]} : vector<1x64xf32> to vector<1x16xf32>
    %349 = math.tanh %348 : vector<1x16xf32>
    %350 = arith.mulf %346, %300 : vector<1x16xf32>
    %351 = arith.mulf %345, %349 : vector<1x16xf32>
    %352 = arith.addf %350, %351 : vector<1x16xf32>
    %353 = math.tanh %352 : vector<1x16xf32>
    %354 = arith.mulf %347, %353 : vector<1x16xf32>
    %355 = vector.extract_strided_slice %170 {offsets = [4, 0], sizes = [1, 64], strides = [1, 1]} : vector<8x64xf32> to vector<1x64xf32>
    %cst_72 = arith.constant dense<0.000000e+00> : vector<1x64xf32>
    %356 = tpu.matmul %321, %172, %cst_72 {dimension_numbers = #tpu.dot_dimension_numbers<[1], [0], [0], [1], [0, 0, 1, 1], [], []>} : vector<1x16xf32>, vector<16x64xf32>, vector<1x64xf32> -> vector<1x64xf32>
    %357 = arith.addf %355, %356 : vector<1x64xf32>
    %358 = vector.extract_strided_slice %357 {offsets = [0, 0], sizes = [1, 48], strides = [1, 1]} : vector<1x64xf32> to vector<1x48xf32>
    %359 = arith.negf %358 : vector<1x48xf32>
    %360 = math.exp %359 : vector<1x48xf32>
    %cst_73 = arith.constant 1.000000e+00 : f32
    %361 = vector.broadcast %cst_73 : f32 to vector<1x48xf32>
    %362 = arith.addf %361, %360 : vector<1x48xf32>
    %363 = arith.divf %361, %362 : vector<1x48xf32>
    %364 = vector.extract_strided_slice %363 {offsets = [0, 0], sizes = [1, 16], strides = [1, 1]} : vector<1x48xf32> to vector<1x16xf32>
    %365 = vector.extract_strided_slice %363 {offsets = [0, 16], sizes = [1, 16], strides = [1, 1]} : vector<1x48xf32> to vector<1x16xf32>
    %366 = vector.extract_strided_slice %363 {offsets = [0, 32], sizes = [1, 16], strides = [1, 1]} : vector<1x48xf32> to vector<1x16xf32>
    %367 = vector.extract_strided_slice %357 {offsets = [0, 48], sizes = [1, 16], strides = [1, 1]} : vector<1x64xf32> to vector<1x16xf32>
    %368 = math.tanh %367 : vector<1x16xf32>
    %369 = arith.mulf %365, %319 : vector<1x16xf32>
    %370 = arith.mulf %364, %368 : vector<1x16xf32>
    %371 = arith.addf %369, %370 : vector<1x16xf32>
    %372 = math.tanh %371 : vector<1x16xf32>
    %373 = arith.mulf %366, %372 : vector<1x16xf32>
    %c3_i32 = arith.constant 3 : i32
    %374 = vector.broadcast %c3_i32 : i32 to vector<8x1xi32>
    %375 = arith.cmpi eq, %173, %374 : vector<8x1xi32>
    %376 = vector.shape_cast %375 : vector<8x1xi1> to vector<8x1xi1>
    %377 = vector.broadcast %376 : vector<8x1xi1> to vector<8x16xi1>
    %378 = vector.shape_cast %354 : vector<1x16xf32> to vector<1x16xf32>
    %379 = vector.broadcast %378 : vector<1x16xf32> to vector<8x16xf32>
    %380 = arith.select %377, %379, %328 : vector<8x16xi1>, vector<8x16xf32>
    %c4_i32 = arith.constant 4 : i32
    %381 = vector.broadcast %c4_i32 : i32 to vector<8x1xi32>
    %382 = arith.cmpi eq, %173, %381 : vector<8x1xi32>
    %383 = vector.shape_cast %382 : vector<8x1xi1> to vector<8x1xi1>
    %384 = vector.broadcast %383 : vector<8x1xi1> to vector<8x16xi1>
    %385 = vector.shape_cast %373 : vector<1x16xf32> to vector<1x16xf32>
    %386 = vector.broadcast %385 : vector<1x16xf32> to vector<8x16xf32>
    %387 = arith.select %384, %386, %335 : vector<8x16xi1>, vector<8x16xf32>
    %388 = vector.extract_strided_slice %159 {offsets = [4, 0], sizes = [1, 64], strides = [1, 1]} : vector<8x64xf32> to vector<1x64xf32>
    %cst_74 = arith.constant dense<0.000000e+00> : vector<1x64xf32>
    %389 = tpu.matmul %354, %171, %cst_74 {dimension_numbers = #tpu.dot_dimension_numbers<[1], [0], [0], [1], [0, 0, 1, 1], [], []>} : vector<1x16xf32>, vector<16x64xf32>, vector<1x64xf32> -> vector<1x64xf32>
    %390 = arith.addf %388, %389 : vector<1x64xf32>
    %391 = vector.extract_strided_slice %390 {offsets = [0, 0], sizes = [1, 48], strides = [1, 1]} : vector<1x64xf32> to vector<1x48xf32>
    %392 = arith.negf %391 : vector<1x48xf32>
    %393 = math.exp %392 : vector<1x48xf32>
    %cst_75 = arith.constant 1.000000e+00 : f32
    %394 = vector.broadcast %cst_75 : f32 to vector<1x48xf32>
    %395 = arith.addf %394, %393 : vector<1x48xf32>
    %396 = arith.divf %394, %395 : vector<1x48xf32>
    %397 = vector.extract_strided_slice %396 {offsets = [0, 0], sizes = [1, 16], strides = [1, 1]} : vector<1x48xf32> to vector<1x16xf32>
    %398 = vector.extract_strided_slice %396 {offsets = [0, 16], sizes = [1, 16], strides = [1, 1]} : vector<1x48xf32> to vector<1x16xf32>
    %399 = vector.extract_strided_slice %396 {offsets = [0, 32], sizes = [1, 16], strides = [1, 1]} : vector<1x48xf32> to vector<1x16xf32>
    %400 = vector.extract_strided_slice %390 {offsets = [0, 48], sizes = [1, 16], strides = [1, 1]} : vector<1x64xf32> to vector<1x16xf32>
    %401 = math.tanh %400 : vector<1x16xf32>
    %402 = arith.mulf %398, %352 : vector<1x16xf32>
    %403 = arith.mulf %397, %401 : vector<1x16xf32>
    %404 = arith.addf %402, %403 : vector<1x16xf32>
    %405 = math.tanh %404 : vector<1x16xf32>
    %406 = arith.mulf %399, %405 : vector<1x16xf32>
    %407 = vector.extract_strided_slice %170 {offsets = [3, 0], sizes = [1, 64], strides = [1, 1]} : vector<8x64xf32> to vector<1x64xf32>
    %cst_76 = arith.constant dense<0.000000e+00> : vector<1x64xf32>
    %408 = tpu.matmul %373, %172, %cst_76 {dimension_numbers = #tpu.dot_dimension_numbers<[1], [0], [0], [1], [0, 0, 1, 1], [], []>} : vector<1x16xf32>, vector<16x64xf32>, vector<1x64xf32> -> vector<1x64xf32>
    %409 = arith.addf %407, %408 : vector<1x64xf32>
    %410 = vector.extract_strided_slice %409 {offsets = [0, 0], sizes = [1, 48], strides = [1, 1]} : vector<1x64xf32> to vector<1x48xf32>
    %411 = arith.negf %410 : vector<1x48xf32>
    %412 = math.exp %411 : vector<1x48xf32>
    %cst_77 = arith.constant 1.000000e+00 : f32
    %413 = vector.broadcast %cst_77 : f32 to vector<1x48xf32>
    %414 = arith.addf %413, %412 : vector<1x48xf32>
    %415 = arith.divf %413, %414 : vector<1x48xf32>
    %416 = vector.extract_strided_slice %415 {offsets = [0, 0], sizes = [1, 16], strides = [1, 1]} : vector<1x48xf32> to vector<1x16xf32>
    %417 = vector.extract_strided_slice %415 {offsets = [0, 16], sizes = [1, 16], strides = [1, 1]} : vector<1x48xf32> to vector<1x16xf32>
    %418 = vector.extract_strided_slice %415 {offsets = [0, 32], sizes = [1, 16], strides = [1, 1]} : vector<1x48xf32> to vector<1x16xf32>
    %419 = vector.extract_strided_slice %409 {offsets = [0, 48], sizes = [1, 16], strides = [1, 1]} : vector<1x64xf32> to vector<1x16xf32>
    %420 = math.tanh %419 : vector<1x16xf32>
    %421 = arith.mulf %417, %371 : vector<1x16xf32>
    %422 = arith.mulf %416, %420 : vector<1x16xf32>
    %423 = arith.addf %421, %422 : vector<1x16xf32>
    %424 = math.tanh %423 : vector<1x16xf32>
    %425 = arith.mulf %418, %424 : vector<1x16xf32>
    %c4_i32_78 = arith.constant 4 : i32
    %426 = vector.broadcast %c4_i32_78 : i32 to vector<8x1xi32>
    %427 = arith.cmpi eq, %173, %426 : vector<8x1xi32>
    %428 = vector.shape_cast %427 : vector<8x1xi1> to vector<8x1xi1>
    %429 = vector.broadcast %428 : vector<8x1xi1> to vector<8x16xi1>
    %430 = vector.shape_cast %406 : vector<1x16xf32> to vector<1x16xf32>
    %431 = vector.broadcast %430 : vector<1x16xf32> to vector<8x16xf32>
    %432 = arith.select %429, %431, %380 : vector<8x16xi1>, vector<8x16xf32>
    %c3_i32_79 = arith.constant 3 : i32
    %433 = vector.broadcast %c3_i32_79 : i32 to vector<8x1xi32>
    %434 = arith.cmpi eq, %173, %433 : vector<8x1xi32>
    %435 = vector.shape_cast %434 : vector<8x1xi1> to vector<8x1xi1>
    %436 = vector.broadcast %435 : vector<8x1xi1> to vector<8x16xi1>
    %437 = vector.shape_cast %425 : vector<1x16xf32> to vector<1x16xf32>
    %438 = vector.broadcast %437 : vector<1x16xf32> to vector<8x16xf32>
    %439 = arith.select %436, %438, %387 : vector<8x16xi1>, vector<8x16xf32>
    %440 = vector.extract_strided_slice %159 {offsets = [5, 0], sizes = [1, 64], strides = [1, 1]} : vector<8x64xf32> to vector<1x64xf32>
    %cst_80 = arith.constant dense<0.000000e+00> : vector<1x64xf32>
    %441 = tpu.matmul %406, %171, %cst_80 {dimension_numbers = #tpu.dot_dimension_numbers<[1], [0], [0], [1], [0, 0, 1, 1], [], []>} : vector<1x16xf32>, vector<16x64xf32>, vector<1x64xf32> -> vector<1x64xf32>
    %442 = arith.addf %440, %441 : vector<1x64xf32>
    %443 = vector.extract_strided_slice %442 {offsets = [0, 0], sizes = [1, 48], strides = [1, 1]} : vector<1x64xf32> to vector<1x48xf32>
    %444 = arith.negf %443 : vector<1x48xf32>
    %445 = math.exp %444 : vector<1x48xf32>
    %cst_81 = arith.constant 1.000000e+00 : f32
    %446 = vector.broadcast %cst_81 : f32 to vector<1x48xf32>
    %447 = arith.addf %446, %445 : vector<1x48xf32>
    %448 = arith.divf %446, %447 : vector<1x48xf32>
    %449 = vector.extract_strided_slice %448 {offsets = [0, 0], sizes = [1, 16], strides = [1, 1]} : vector<1x48xf32> to vector<1x16xf32>
    %450 = vector.extract_strided_slice %448 {offsets = [0, 16], sizes = [1, 16], strides = [1, 1]} : vector<1x48xf32> to vector<1x16xf32>
    %451 = vector.extract_strided_slice %448 {offsets = [0, 32], sizes = [1, 16], strides = [1, 1]} : vector<1x48xf32> to vector<1x16xf32>
    %452 = vector.extract_strided_slice %442 {offsets = [0, 48], sizes = [1, 16], strides = [1, 1]} : vector<1x64xf32> to vector<1x16xf32>
    %453 = math.tanh %452 : vector<1x16xf32>
    %454 = arith.mulf %450, %404 : vector<1x16xf32>
    %455 = arith.mulf %449, %453 : vector<1x16xf32>
    %456 = arith.addf %454, %455 : vector<1x16xf32>
    %457 = math.tanh %456 : vector<1x16xf32>
    %458 = arith.mulf %451, %457 : vector<1x16xf32>
    %459 = vector.extract_strided_slice %170 {offsets = [2, 0], sizes = [1, 64], strides = [1, 1]} : vector<8x64xf32> to vector<1x64xf32>
    %cst_82 = arith.constant dense<0.000000e+00> : vector<1x64xf32>
    %460 = tpu.matmul %425, %172, %cst_82 {dimension_numbers = #tpu.dot_dimension_numbers<[1], [0], [0], [1], [0, 0, 1, 1], [], []>} : vector<1x16xf32>, vector<16x64xf32>, vector<1x64xf32> -> vector<1x64xf32>
    %461 = arith.addf %459, %460 : vector<1x64xf32>
    %462 = vector.extract_strided_slice %461 {offsets = [0, 0], sizes = [1, 48], strides = [1, 1]} : vector<1x64xf32> to vector<1x48xf32>
    %463 = arith.negf %462 : vector<1x48xf32>
    %464 = math.exp %463 : vector<1x48xf32>
    %cst_83 = arith.constant 1.000000e+00 : f32
    %465 = vector.broadcast %cst_83 : f32 to vector<1x48xf32>
    %466 = arith.addf %465, %464 : vector<1x48xf32>
    %467 = arith.divf %465, %466 : vector<1x48xf32>
    %468 = vector.extract_strided_slice %467 {offsets = [0, 0], sizes = [1, 16], strides = [1, 1]} : vector<1x48xf32> to vector<1x16xf32>
    %469 = vector.extract_strided_slice %467 {offsets = [0, 16], sizes = [1, 16], strides = [1, 1]} : vector<1x48xf32> to vector<1x16xf32>
    %470 = vector.extract_strided_slice %467 {offsets = [0, 32], sizes = [1, 16], strides = [1, 1]} : vector<1x48xf32> to vector<1x16xf32>
    %471 = vector.extract_strided_slice %461 {offsets = [0, 48], sizes = [1, 16], strides = [1, 1]} : vector<1x64xf32> to vector<1x16xf32>
    %472 = math.tanh %471 : vector<1x16xf32>
    %473 = arith.mulf %469, %423 : vector<1x16xf32>
    %474 = arith.mulf %468, %472 : vector<1x16xf32>
    %475 = arith.addf %473, %474 : vector<1x16xf32>
    %476 = math.tanh %475 : vector<1x16xf32>
    %477 = arith.mulf %470, %476 : vector<1x16xf32>
    %c5_i32_84 = arith.constant 5 : i32
    %478 = vector.broadcast %c5_i32_84 : i32 to vector<8x1xi32>
    %479 = arith.cmpi eq, %173, %478 : vector<8x1xi32>
    %480 = vector.shape_cast %479 : vector<8x1xi1> to vector<8x1xi1>
    %481 = vector.broadcast %480 : vector<8x1xi1> to vector<8x16xi1>
    %482 = vector.shape_cast %458 : vector<1x16xf32> to vector<1x16xf32>
    %483 = vector.broadcast %482 : vector<1x16xf32> to vector<8x16xf32>
    %484 = arith.select %481, %483, %432 : vector<8x16xi1>, vector<8x16xf32>
    %c2_i32_85 = arith.constant 2 : i32
    %485 = vector.broadcast %c2_i32_85 : i32 to vector<8x1xi32>
    %486 = arith.cmpi eq, %173, %485 : vector<8x1xi32>
    %487 = vector.shape_cast %486 : vector<8x1xi1> to vector<8x1xi1>
    %488 = vector.broadcast %487 : vector<8x1xi1> to vector<8x16xi1>
    %489 = vector.shape_cast %477 : vector<1x16xf32> to vector<1x16xf32>
    %490 = vector.broadcast %489 : vector<1x16xf32> to vector<8x16xf32>
    %491 = arith.select %488, %490, %439 : vector<8x16xi1>, vector<8x16xf32>
    %492 = vector.extract_strided_slice %159 {offsets = [6, 0], sizes = [1, 64], strides = [1, 1]} : vector<8x64xf32> to vector<1x64xf32>
    %cst_86 = arith.constant dense<0.000000e+00> : vector<1x64xf32>
    %493 = tpu.matmul %458, %171, %cst_86 {dimension_numbers = #tpu.dot_dimension_numbers<[1], [0], [0], [1], [0, 0, 1, 1], [], []>} : vector<1x16xf32>, vector<16x64xf32>, vector<1x64xf32> -> vector<1x64xf32>
    %494 = arith.addf %492, %493 : vector<1x64xf32>
    %495 = vector.extract_strided_slice %494 {offsets = [0, 0], sizes = [1, 48], strides = [1, 1]} : vector<1x64xf32> to vector<1x48xf32>
    %496 = arith.negf %495 : vector<1x48xf32>
    %497 = math.exp %496 : vector<1x48xf32>
    %cst_87 = arith.constant 1.000000e+00 : f32
    %498 = vector.broadcast %cst_87 : f32 to vector<1x48xf32>
    %499 = arith.addf %498, %497 : vector<1x48xf32>
    %500 = arith.divf %498, %499 : vector<1x48xf32>
    %501 = vector.extract_strided_slice %500 {offsets = [0, 0], sizes = [1, 16], strides = [1, 1]} : vector<1x48xf32> to vector<1x16xf32>
    %502 = vector.extract_strided_slice %500 {offsets = [0, 16], sizes = [1, 16], strides = [1, 1]} : vector<1x48xf32> to vector<1x16xf32>
    %503 = vector.extract_strided_slice %500 {offsets = [0, 32], sizes = [1, 16], strides = [1, 1]} : vector<1x48xf32> to vector<1x16xf32>
    %504 = vector.extract_strided_slice %494 {offsets = [0, 48], sizes = [1, 16], strides = [1, 1]} : vector<1x64xf32> to vector<1x16xf32>
    %505 = math.tanh %504 : vector<1x16xf32>
    %506 = arith.mulf %502, %456 : vector<1x16xf32>
    %507 = arith.mulf %501, %505 : vector<1x16xf32>
    %508 = arith.addf %506, %507 : vector<1x16xf32>
    %509 = math.tanh %508 : vector<1x16xf32>
    %510 = arith.mulf %503, %509 : vector<1x16xf32>
    %511 = vector.extract_strided_slice %170 {offsets = [1, 0], sizes = [1, 64], strides = [1, 1]} : vector<8x64xf32> to vector<1x64xf32>
    %cst_88 = arith.constant dense<0.000000e+00> : vector<1x64xf32>
    %512 = tpu.matmul %477, %172, %cst_88 {dimension_numbers = #tpu.dot_dimension_numbers<[1], [0], [0], [1], [0, 0, 1, 1], [], []>} : vector<1x16xf32>, vector<16x64xf32>, vector<1x64xf32> -> vector<1x64xf32>
    %513 = arith.addf %511, %512 : vector<1x64xf32>
    %514 = vector.extract_strided_slice %513 {offsets = [0, 0], sizes = [1, 48], strides = [1, 1]} : vector<1x64xf32> to vector<1x48xf32>
    %515 = arith.negf %514 : vector<1x48xf32>
    %516 = math.exp %515 : vector<1x48xf32>
    %cst_89 = arith.constant 1.000000e+00 : f32
    %517 = vector.broadcast %cst_89 : f32 to vector<1x48xf32>
    %518 = arith.addf %517, %516 : vector<1x48xf32>
    %519 = arith.divf %517, %518 : vector<1x48xf32>
    %520 = vector.extract_strided_slice %519 {offsets = [0, 0], sizes = [1, 16], strides = [1, 1]} : vector<1x48xf32> to vector<1x16xf32>
    %521 = vector.extract_strided_slice %519 {offsets = [0, 16], sizes = [1, 16], strides = [1, 1]} : vector<1x48xf32> to vector<1x16xf32>
    %522 = vector.extract_strided_slice %519 {offsets = [0, 32], sizes = [1, 16], strides = [1, 1]} : vector<1x48xf32> to vector<1x16xf32>
    %523 = vector.extract_strided_slice %513 {offsets = [0, 48], sizes = [1, 16], strides = [1, 1]} : vector<1x64xf32> to vector<1x16xf32>
    %524 = math.tanh %523 : vector<1x16xf32>
    %525 = arith.mulf %521, %475 : vector<1x16xf32>
    %526 = arith.mulf %520, %524 : vector<1x16xf32>
    %527 = arith.addf %525, %526 : vector<1x16xf32>
    %528 = math.tanh %527 : vector<1x16xf32>
    %529 = arith.mulf %522, %528 : vector<1x16xf32>
    %c6_i32_90 = arith.constant 6 : i32
    %530 = vector.broadcast %c6_i32_90 : i32 to vector<8x1xi32>
    %531 = arith.cmpi eq, %173, %530 : vector<8x1xi32>
    %532 = vector.shape_cast %531 : vector<8x1xi1> to vector<8x1xi1>
    %533 = vector.broadcast %532 : vector<8x1xi1> to vector<8x16xi1>
    %534 = vector.shape_cast %510 : vector<1x16xf32> to vector<1x16xf32>
    %535 = vector.broadcast %534 : vector<1x16xf32> to vector<8x16xf32>
    %536 = arith.select %533, %535, %484 : vector<8x16xi1>, vector<8x16xf32>
    %c1_i32_91 = arith.constant 1 : i32
    %537 = vector.broadcast %c1_i32_91 : i32 to vector<8x1xi32>
    %538 = arith.cmpi eq, %173, %537 : vector<8x1xi32>
    %539 = vector.shape_cast %538 : vector<8x1xi1> to vector<8x1xi1>
    %540 = vector.broadcast %539 : vector<8x1xi1> to vector<8x16xi1>
    %541 = vector.shape_cast %529 : vector<1x16xf32> to vector<1x16xf32>
    %542 = vector.broadcast %541 : vector<1x16xf32> to vector<8x16xf32>
    %543 = arith.select %540, %542, %491 : vector<8x16xi1>, vector<8x16xf32>
    %544 = vector.extract_strided_slice %159 {offsets = [7, 0], sizes = [1, 64], strides = [1, 1]} : vector<8x64xf32> to vector<1x64xf32>
    %cst_92 = arith.constant dense<0.000000e+00> : vector<1x64xf32>
    %545 = tpu.matmul %510, %171, %cst_92 {dimension_numbers = #tpu.dot_dimension_numbers<[1], [0], [0], [1], [0, 0, 1, 1], [], []>} : vector<1x16xf32>, vector<16x64xf32>, vector<1x64xf32> -> vector<1x64xf32>
    %546 = arith.addf %544, %545 : vector<1x64xf32>
    %547 = vector.extract_strided_slice %546 {offsets = [0, 0], sizes = [1, 48], strides = [1, 1]} : vector<1x64xf32> to vector<1x48xf32>
    %548 = arith.negf %547 : vector<1x48xf32>
    %549 = math.exp %548 : vector<1x48xf32>
    %cst_93 = arith.constant 1.000000e+00 : f32
    %550 = vector.broadcast %cst_93 : f32 to vector<1x48xf32>
    %551 = arith.addf %550, %549 : vector<1x48xf32>
    %552 = arith.divf %550, %551 : vector<1x48xf32>
    %553 = vector.extract_strided_slice %552 {offsets = [0, 0], sizes = [1, 16], strides = [1, 1]} : vector<1x48xf32> to vector<1x16xf32>
    %554 = vector.extract_strided_slice %552 {offsets = [0, 16], sizes = [1, 16], strides = [1, 1]} : vector<1x48xf32> to vector<1x16xf32>
    %555 = vector.extract_strided_slice %552 {offsets = [0, 32], sizes = [1, 16], strides = [1, 1]} : vector<1x48xf32> to vector<1x16xf32>
    %556 = vector.extract_strided_slice %546 {offsets = [0, 48], sizes = [1, 16], strides = [1, 1]} : vector<1x64xf32> to vector<1x16xf32>
    %557 = math.tanh %556 : vector<1x16xf32>
    %558 = arith.mulf %554, %508 : vector<1x16xf32>
    %559 = arith.mulf %553, %557 : vector<1x16xf32>
    %560 = arith.addf %558, %559 : vector<1x16xf32>
    %561 = math.tanh %560 : vector<1x16xf32>
    %562 = arith.mulf %555, %561 : vector<1x16xf32>
    %563 = vector.extract_strided_slice %170 {offsets = [0, 0], sizes = [1, 64], strides = [1, 1]} : vector<8x64xf32> to vector<1x64xf32>
    %cst_94 = arith.constant dense<0.000000e+00> : vector<1x64xf32>
    %564 = tpu.matmul %529, %172, %cst_94 {dimension_numbers = #tpu.dot_dimension_numbers<[1], [0], [0], [1], [0, 0, 1, 1], [], []>} : vector<1x16xf32>, vector<16x64xf32>, vector<1x64xf32> -> vector<1x64xf32>
    %565 = arith.addf %563, %564 : vector<1x64xf32>
    %566 = vector.extract_strided_slice %565 {offsets = [0, 0], sizes = [1, 48], strides = [1, 1]} : vector<1x64xf32> to vector<1x48xf32>
    %567 = arith.negf %566 : vector<1x48xf32>
    %568 = math.exp %567 : vector<1x48xf32>
    %cst_95 = arith.constant 1.000000e+00 : f32
    %569 = vector.broadcast %cst_95 : f32 to vector<1x48xf32>
    %570 = arith.addf %569, %568 : vector<1x48xf32>
    %571 = arith.divf %569, %570 : vector<1x48xf32>
    %572 = vector.extract_strided_slice %571 {offsets = [0, 0], sizes = [1, 16], strides = [1, 1]} : vector<1x48xf32> to vector<1x16xf32>
    %573 = vector.extract_strided_slice %571 {offsets = [0, 16], sizes = [1, 16], strides = [1, 1]} : vector<1x48xf32> to vector<1x16xf32>
    %574 = vector.extract_strided_slice %571 {offsets = [0, 32], sizes = [1, 16], strides = [1, 1]} : vector<1x48xf32> to vector<1x16xf32>
    %575 = vector.extract_strided_slice %565 {offsets = [0, 48], sizes = [1, 16], strides = [1, 1]} : vector<1x64xf32> to vector<1x16xf32>
    %576 = math.tanh %575 : vector<1x16xf32>
    %577 = arith.mulf %573, %527 : vector<1x16xf32>
    %578 = arith.mulf %572, %576 : vector<1x16xf32>
    %579 = arith.addf %577, %578 : vector<1x16xf32>
    %580 = math.tanh %579 : vector<1x16xf32>
    %581 = arith.mulf %574, %580 : vector<1x16xf32>
    %c7_i32_96 = arith.constant 7 : i32
    %582 = vector.broadcast %c7_i32_96 : i32 to vector<8x1xi32>
    %583 = arith.cmpi eq, %173, %582 : vector<8x1xi32>
    %584 = vector.shape_cast %583 : vector<8x1xi1> to vector<8x1xi1>
    %585 = vector.broadcast %584 : vector<8x1xi1> to vector<8x16xi1>
    %586 = vector.shape_cast %562 : vector<1x16xf32> to vector<1x16xf32>
    %587 = vector.broadcast %586 : vector<1x16xf32> to vector<8x16xf32>
    %588 = arith.select %585, %587, %536 : vector<8x16xi1>, vector<8x16xf32>
    %c0_i32_97 = arith.constant 0 : i32
    %589 = vector.broadcast %c0_i32_97 : i32 to vector<8x1xi32>
    %590 = arith.cmpi eq, %173, %589 : vector<8x1xi32>
    %591 = vector.shape_cast %590 : vector<8x1xi1> to vector<8x1xi1>
    %592 = vector.broadcast %591 : vector<8x1xi1> to vector<8x16xi1>
    %593 = vector.shape_cast %581 : vector<1x16xf32> to vector<1x16xf32>
    %594 = vector.broadcast %593 : vector<1x16xf32> to vector<8x16xf32>
    %595 = arith.select %592, %594, %543 : vector<8x16xi1>, vector<8x16xf32>
    %c0_98 = arith.constant 0 : index
    %c0_99 = arith.constant 0 : index
    %596 = vector.load %arg17[%c0_98, %c0_99] : memref<32x5xf32, #tpu.memory_space<vmem>>, vector<32x5xf32>
    %597 = vector.extract_strided_slice %596 {offsets = [0, 0], sizes = [16, 5], strides = [1, 1]} : vector<32x5xf32> to vector<16x5xf32>
    %cst_100 = arith.constant dense<0.000000e+00> : vector<8x5xf32>
    %598 = tpu.matmul %588, %597, %cst_100 {dimension_numbers = #tpu.dot_dimension_numbers<[1], [0], [0], [1], [0, 0, 1, 1], [], []>} : vector<8x16xf32>, vector<16x5xf32>, vector<8x5xf32> -> vector<8x5xf32>
    %599 = vector.extract_strided_slice %596 {offsets = [16, 0], sizes = [16, 5], strides = [1, 1]} : vector<32x5xf32> to vector<16x5xf32>
    %cst_101 = arith.constant dense<0.000000e+00> : vector<8x5xf32>
    %600 = tpu.matmul %595, %599, %cst_101 {dimension_numbers = #tpu.dot_dimension_numbers<[1], [0], [0], [1], [0, 0, 1, 1], [], []>} : vector<8x16xf32>, vector<16x5xf32>, vector<8x5xf32> -> vector<8x5xf32>
    %601 = arith.addf %598, %600 : vector<8x5xf32>
    %c0_102 = arith.constant 0 : index
    %c0_103 = arith.constant 0 : index
    %602 = vector.load %arg18[%c0_102, %c0_103] : memref<1x5xf32, #tpu.memory_space<vmem>>, vector<1x5xf32>
    %603 = vector.broadcast %602 : vector<1x5xf32> to vector<8x5xf32>
    %604 = arith.addf %601, %603 : vector<8x5xf32>
    %c0_104 = arith.constant 0 : index
    %c0_105 = arith.constant 0 : index
    %605 = vector.load %arg19[%c0_104, %c0_105] : memref<5x5xf32, #tpu.memory_space<vmem>>, vector<5x5xf32>
    %606 = tpu.iota {dimensions = array<i32: 1>} : vector<5x5xi32>
    %607 = tpu.iota {dimensions = array<i32: 0>} : vector<5x5xi32>
    %608 = arith.cmpi eq, %607, %606 : vector<5x5xi32>
    %609 = arith.extui %608 : vector<5x5xi1> to vector<5x5xi32>
    %610 = arith.sitofp %609 : vector<5x5xi32> to vector<5x5xf32>
    %611 = tpu.iota {dimensions = array<i32: 1>} : vector<5x8xi32>
    %612 = tpu.iota {dimensions = array<i32: 0>} : vector<5x1xi32>
    %613 = tpu.iota {dimensions = array<i32: 1>} : vector<1x5xi32>
    %614 = tpu.iota {dimensions = array<i32: 1>} : vector<1x8xi32>
    %c3_i32_106 = arith.constant 3 : i32
    %615 = vector.broadcast %c3_i32_106 : i32 to vector<1x5xi32>
    %616 = arith.cmpi eq, %613, %615 : vector<1x5xi32>
    %cst_107 = arith.constant 0.000000e+00 : f32
    %cst_108 = arith.constant -1.000000e+04 : f32
    %617 = vector.broadcast %cst_107 : f32 to vector<1x5xf32>
    %618 = vector.broadcast %cst_108 : f32 to vector<1x5xf32>
    %619 = arith.select %616, %617, %618 : vector<1x5xi1>, vector<1x5xf32>
    %c0_i32_109 = arith.constant 0 : i32
    %620 = vector.broadcast %c0_i32_109 : i32 to vector<5x8xi32>
    %621 = vector.broadcast %619 : vector<1x5xf32> to vector<5x5xf32>
    %622 = arith.addf %621, %605 : vector<5x5xf32>
    %cst_110 = arith.constant dense<0xFF800000> : vector<5xf32>
    %623 = vector.multi_reduction <maximumf>, %622, %cst_110 [1] : vector<5x5xf32> to vector<5xf32>
    %624 = vector.shape_cast %623 : vector<5xf32> to vector<5x1xf32>
    %625 = vector.broadcast %624 : vector<5x1xf32> to vector<5x5xf32>
    %626 = arith.cmpf oeq, %622, %625 : vector<5x5xf32>
    %c5_i32_111 = arith.constant 5 : i32
    %627 = vector.broadcast %c5_i32_111 : i32 to vector<5x5xi32>
    %628 = arith.select %626, %606, %627 : vector<5x5xi1>, vector<5x5xi32>
    %cst_112 = arith.constant dense<2147483647> : vector<5xi32>
    %629 = vector.multi_reduction <minsi>, %628, %cst_112 [1] : vector<5x5xi32> to vector<5xi32>
    %630 = vector.shape_cast %629 : vector<5xi32> to vector<5x1xi32>
    %c0_i32_113 = arith.constant 0 : i32
    %631 = vector.broadcast %c0_i32_113 : i32 to vector<5x8xi32>
    %632 = arith.cmpi eq, %611, %631 : vector<5x8xi32>
    %633 = vector.shape_cast %630 : vector<5x1xi32> to vector<5x1xi32>
    %634 = vector.broadcast %633 : vector<5x1xi32> to vector<5x8xi32>
    %635 = arith.select %632, %634, %620 : vector<5x8xi1>, vector<5x8xi32>
    %636 = vector.broadcast %624 : vector<5x1xf32> to vector<5x5xf32>
    %637 = arith.mulf %636, %610 : vector<5x5xf32>
    %cst_114 = arith.constant dense<0.000000e+00> : vector<5xf32>
    %638 = vector.multi_reduction <add>, %637, %cst_114 [0] : vector<5x5xf32> to vector<5xf32>
    %639 = vector.shape_cast %638 : vector<5xf32> to vector<1x5xf32>
    %640 = vector.extract_strided_slice %604 {offsets = [0, 0], sizes = [1, 5], strides = [1, 1]} : vector<8x5xf32> to vector<1x5xf32>
    %641 = arith.addf %639, %640 : vector<1x5xf32>
    %642 = vector.broadcast %641 : vector<1x5xf32> to vector<5x5xf32>
    %643 = arith.addf %642, %605 : vector<5x5xf32>
    %cst_115 = arith.constant dense<0xFF800000> : vector<5xf32>
    %644 = vector.multi_reduction <maximumf>, %643, %cst_115 [1] : vector<5x5xf32> to vector<5xf32>
    %645 = vector.shape_cast %644 : vector<5xf32> to vector<5x1xf32>
    %646 = vector.broadcast %645 : vector<5x1xf32> to vector<5x5xf32>
    %647 = arith.cmpf oeq, %643, %646 : vector<5x5xf32>
    %c5_i32_116 = arith.constant 5 : i32
    %648 = vector.broadcast %c5_i32_116 : i32 to vector<5x5xi32>
    %649 = arith.select %647, %606, %648 : vector<5x5xi1>, vector<5x5xi32>
    %cst_117 = arith.constant dense<2147483647> : vector<5xi32>
    %650 = vector.multi_reduction <minsi>, %649, %cst_117 [1] : vector<5x5xi32> to vector<5xi32>
    %651 = vector.shape_cast %650 : vector<5xi32> to vector<5x1xi32>
    %c1_i32_118 = arith.constant 1 : i32
    %652 = vector.broadcast %c1_i32_118 : i32 to vector<5x8xi32>
    %653 = arith.cmpi eq, %611, %652 : vector<5x8xi32>
    %654 = vector.shape_cast %651 : vector<5x1xi32> to vector<5x1xi32>
    %655 = vector.broadcast %654 : vector<5x1xi32> to vector<5x8xi32>
    %656 = arith.select %653, %655, %635 : vector<5x8xi1>, vector<5x8xi32>
    %657 = vector.broadcast %645 : vector<5x1xf32> to vector<5x5xf32>
    %658 = arith.mulf %657, %610 : vector<5x5xf32>
    %cst_119 = arith.constant dense<0.000000e+00> : vector<5xf32>
    %659 = vector.multi_reduction <add>, %658, %cst_119 [0] : vector<5x5xf32> to vector<5xf32>
    %660 = vector.shape_cast %659 : vector<5xf32> to vector<1x5xf32>
    %661 = vector.extract_strided_slice %604 {offsets = [1, 0], sizes = [1, 5], strides = [1, 1]} : vector<8x5xf32> to vector<1x5xf32>
    %662 = arith.addf %660, %661 : vector<1x5xf32>
    %663 = vector.broadcast %662 : vector<1x5xf32> to vector<5x5xf32>
    %664 = arith.addf %663, %605 : vector<5x5xf32>
    %cst_120 = arith.constant dense<0xFF800000> : vector<5xf32>
    %665 = vector.multi_reduction <maximumf>, %664, %cst_120 [1] : vector<5x5xf32> to vector<5xf32>
    %666 = vector.shape_cast %665 : vector<5xf32> to vector<5x1xf32>
    %667 = vector.broadcast %666 : vector<5x1xf32> to vector<5x5xf32>
    %668 = arith.cmpf oeq, %664, %667 : vector<5x5xf32>
    %c5_i32_121 = arith.constant 5 : i32
    %669 = vector.broadcast %c5_i32_121 : i32 to vector<5x5xi32>
    %670 = arith.select %668, %606, %669 : vector<5x5xi1>, vector<5x5xi32>
    %cst_122 = arith.constant dense<2147483647> : vector<5xi32>
    %671 = vector.multi_reduction <minsi>, %670, %cst_122 [1] : vector<5x5xi32> to vector<5xi32>
    %672 = vector.shape_cast %671 : vector<5xi32> to vector<5x1xi32>
    %c2_i32_123 = arith.constant 2 : i32
    %673 = vector.broadcast %c2_i32_123 : i32 to vector<5x8xi32>
    %674 = arith.cmpi eq, %611, %673 : vector<5x8xi32>
    %675 = vector.shape_cast %672 : vector<5x1xi32> to vector<5x1xi32>
    %676 = vector.broadcast %675 : vector<5x1xi32> to vector<5x8xi32>
    %677 = arith.select %674, %676, %656 : vector<5x8xi1>, vector<5x8xi32>
    %678 = vector.broadcast %666 : vector<5x1xf32> to vector<5x5xf32>
    %679 = arith.mulf %678, %610 : vector<5x5xf32>
    %cst_124 = arith.constant dense<0.000000e+00> : vector<5xf32>
    %680 = vector.multi_reduction <add>, %679, %cst_124 [0] : vector<5x5xf32> to vector<5xf32>
    %681 = vector.shape_cast %680 : vector<5xf32> to vector<1x5xf32>
    %682 = vector.extract_strided_slice %604 {offsets = [2, 0], sizes = [1, 5], strides = [1, 1]} : vector<8x5xf32> to vector<1x5xf32>
    %683 = arith.addf %681, %682 : vector<1x5xf32>
    %684 = vector.broadcast %683 : vector<1x5xf32> to vector<5x5xf32>
    %685 = arith.addf %684, %605 : vector<5x5xf32>
    %cst_125 = arith.constant dense<0xFF800000> : vector<5xf32>
    %686 = vector.multi_reduction <maximumf>, %685, %cst_125 [1] : vector<5x5xf32> to vector<5xf32>
    %687 = vector.shape_cast %686 : vector<5xf32> to vector<5x1xf32>
    %688 = vector.broadcast %687 : vector<5x1xf32> to vector<5x5xf32>
    %689 = arith.cmpf oeq, %685, %688 : vector<5x5xf32>
    %c5_i32_126 = arith.constant 5 : i32
    %690 = vector.broadcast %c5_i32_126 : i32 to vector<5x5xi32>
    %691 = arith.select %689, %606, %690 : vector<5x5xi1>, vector<5x5xi32>
    %cst_127 = arith.constant dense<2147483647> : vector<5xi32>
    %692 = vector.multi_reduction <minsi>, %691, %cst_127 [1] : vector<5x5xi32> to vector<5xi32>
    %693 = vector.shape_cast %692 : vector<5xi32> to vector<5x1xi32>
    %c3_i32_128 = arith.constant 3 : i32
    %694 = vector.broadcast %c3_i32_128 : i32 to vector<5x8xi32>
    %695 = arith.cmpi eq, %611, %694 : vector<5x8xi32>
    %696 = vector.shape_cast %693 : vector<5x1xi32> to vector<5x1xi32>
    %697 = vector.broadcast %696 : vector<5x1xi32> to vector<5x8xi32>
    %698 = arith.select %695, %697, %677 : vector<5x8xi1>, vector<5x8xi32>
    %699 = vector.broadcast %687 : vector<5x1xf32> to vector<5x5xf32>
    %700 = arith.mulf %699, %610 : vector<5x5xf32>
    %cst_129 = arith.constant dense<0.000000e+00> : vector<5xf32>
    %701 = vector.multi_reduction <add>, %700, %cst_129 [0] : vector<5x5xf32> to vector<5xf32>
    %702 = vector.shape_cast %701 : vector<5xf32> to vector<1x5xf32>
    %703 = vector.extract_strided_slice %604 {offsets = [3, 0], sizes = [1, 5], strides = [1, 1]} : vector<8x5xf32> to vector<1x5xf32>
    %704 = arith.addf %702, %703 : vector<1x5xf32>
    %705 = vector.broadcast %704 : vector<1x5xf32> to vector<5x5xf32>
    %706 = arith.addf %705, %605 : vector<5x5xf32>
    %cst_130 = arith.constant dense<0xFF800000> : vector<5xf32>
    %707 = vector.multi_reduction <maximumf>, %706, %cst_130 [1] : vector<5x5xf32> to vector<5xf32>
    %708 = vector.shape_cast %707 : vector<5xf32> to vector<5x1xf32>
    %709 = vector.broadcast %708 : vector<5x1xf32> to vector<5x5xf32>
    %710 = arith.cmpf oeq, %706, %709 : vector<5x5xf32>
    %c5_i32_131 = arith.constant 5 : i32
    %711 = vector.broadcast %c5_i32_131 : i32 to vector<5x5xi32>
    %712 = arith.select %710, %606, %711 : vector<5x5xi1>, vector<5x5xi32>
    %cst_132 = arith.constant dense<2147483647> : vector<5xi32>
    %713 = vector.multi_reduction <minsi>, %712, %cst_132 [1] : vector<5x5xi32> to vector<5xi32>
    %714 = vector.shape_cast %713 : vector<5xi32> to vector<5x1xi32>
    %c4_i32_133 = arith.constant 4 : i32
    %715 = vector.broadcast %c4_i32_133 : i32 to vector<5x8xi32>
    %716 = arith.cmpi eq, %611, %715 : vector<5x8xi32>
    %717 = vector.shape_cast %714 : vector<5x1xi32> to vector<5x1xi32>
    %718 = vector.broadcast %717 : vector<5x1xi32> to vector<5x8xi32>
    %719 = arith.select %716, %718, %698 : vector<5x8xi1>, vector<5x8xi32>
    %720 = vector.broadcast %708 : vector<5x1xf32> to vector<5x5xf32>
    %721 = arith.mulf %720, %610 : vector<5x5xf32>
    %cst_134 = arith.constant dense<0.000000e+00> : vector<5xf32>
    %722 = vector.multi_reduction <add>, %721, %cst_134 [0] : vector<5x5xf32> to vector<5xf32>
    %723 = vector.shape_cast %722 : vector<5xf32> to vector<1x5xf32>
    %724 = vector.extract_strided_slice %604 {offsets = [4, 0], sizes = [1, 5], strides = [1, 1]} : vector<8x5xf32> to vector<1x5xf32>
    %725 = arith.addf %723, %724 : vector<1x5xf32>
    %726 = vector.broadcast %725 : vector<1x5xf32> to vector<5x5xf32>
    %727 = arith.addf %726, %605 : vector<5x5xf32>
    %cst_135 = arith.constant dense<0xFF800000> : vector<5xf32>
    %728 = vector.multi_reduction <maximumf>, %727, %cst_135 [1] : vector<5x5xf32> to vector<5xf32>
    %729 = vector.shape_cast %728 : vector<5xf32> to vector<5x1xf32>
    %730 = vector.broadcast %729 : vector<5x1xf32> to vector<5x5xf32>
    %731 = arith.cmpf oeq, %727, %730 : vector<5x5xf32>
    %c5_i32_136 = arith.constant 5 : i32
    %732 = vector.broadcast %c5_i32_136 : i32 to vector<5x5xi32>
    %733 = arith.select %731, %606, %732 : vector<5x5xi1>, vector<5x5xi32>
    %cst_137 = arith.constant dense<2147483647> : vector<5xi32>
    %734 = vector.multi_reduction <minsi>, %733, %cst_137 [1] : vector<5x5xi32> to vector<5xi32>
    %735 = vector.shape_cast %734 : vector<5xi32> to vector<5x1xi32>
    %c5_i32_138 = arith.constant 5 : i32
    %736 = vector.broadcast %c5_i32_138 : i32 to vector<5x8xi32>
    %737 = arith.cmpi eq, %611, %736 : vector<5x8xi32>
    %738 = vector.shape_cast %735 : vector<5x1xi32> to vector<5x1xi32>
    %739 = vector.broadcast %738 : vector<5x1xi32> to vector<5x8xi32>
    %740 = arith.select %737, %739, %719 : vector<5x8xi1>, vector<5x8xi32>
    %741 = vector.broadcast %729 : vector<5x1xf32> to vector<5x5xf32>
    %742 = arith.mulf %741, %610 : vector<5x5xf32>
    %cst_139 = arith.constant dense<0.000000e+00> : vector<5xf32>
    %743 = vector.multi_reduction <add>, %742, %cst_139 [0] : vector<5x5xf32> to vector<5xf32>
    %744 = vector.shape_cast %743 : vector<5xf32> to vector<1x5xf32>
    %745 = vector.extract_strided_slice %604 {offsets = [5, 0], sizes = [1, 5], strides = [1, 1]} : vector<8x5xf32> to vector<1x5xf32>
    %746 = arith.addf %744, %745 : vector<1x5xf32>
    %747 = vector.broadcast %746 : vector<1x5xf32> to vector<5x5xf32>
    %748 = arith.addf %747, %605 : vector<5x5xf32>
    %cst_140 = arith.constant dense<0xFF800000> : vector<5xf32>
    %749 = vector.multi_reduction <maximumf>, %748, %cst_140 [1] : vector<5x5xf32> to vector<5xf32>
    %750 = vector.shape_cast %749 : vector<5xf32> to vector<5x1xf32>
    %751 = vector.broadcast %750 : vector<5x1xf32> to vector<5x5xf32>
    %752 = arith.cmpf oeq, %748, %751 : vector<5x5xf32>
    %c5_i32_141 = arith.constant 5 : i32
    %753 = vector.broadcast %c5_i32_141 : i32 to vector<5x5xi32>
    %754 = arith.select %752, %606, %753 : vector<5x5xi1>, vector<5x5xi32>
    %cst_142 = arith.constant dense<2147483647> : vector<5xi32>
    %755 = vector.multi_reduction <minsi>, %754, %cst_142 [1] : vector<5x5xi32> to vector<5xi32>
    %756 = vector.shape_cast %755 : vector<5xi32> to vector<5x1xi32>
    %c6_i32_143 = arith.constant 6 : i32
    %757 = vector.broadcast %c6_i32_143 : i32 to vector<5x8xi32>
    %758 = arith.cmpi eq, %611, %757 : vector<5x8xi32>
    %759 = vector.shape_cast %756 : vector<5x1xi32> to vector<5x1xi32>
    %760 = vector.broadcast %759 : vector<5x1xi32> to vector<5x8xi32>
    %761 = arith.select %758, %760, %740 : vector<5x8xi1>, vector<5x8xi32>
    %762 = vector.broadcast %750 : vector<5x1xf32> to vector<5x5xf32>
    %763 = arith.mulf %762, %610 : vector<5x5xf32>
    %cst_144 = arith.constant dense<0.000000e+00> : vector<5xf32>
    %764 = vector.multi_reduction <add>, %763, %cst_144 [0] : vector<5x5xf32> to vector<5xf32>
    %765 = vector.shape_cast %764 : vector<5xf32> to vector<1x5xf32>
    %766 = vector.extract_strided_slice %604 {offsets = [6, 0], sizes = [1, 5], strides = [1, 1]} : vector<8x5xf32> to vector<1x5xf32>
    %767 = arith.addf %765, %766 : vector<1x5xf32>
    %768 = vector.broadcast %767 : vector<1x5xf32> to vector<5x5xf32>
    %769 = arith.addf %768, %605 : vector<5x5xf32>
    %cst_145 = arith.constant dense<0xFF800000> : vector<5xf32>
    %770 = vector.multi_reduction <maximumf>, %769, %cst_145 [1] : vector<5x5xf32> to vector<5xf32>
    %771 = vector.shape_cast %770 : vector<5xf32> to vector<5x1xf32>
    %772 = vector.broadcast %771 : vector<5x1xf32> to vector<5x5xf32>
    %773 = arith.cmpf oeq, %769, %772 : vector<5x5xf32>
    %c5_i32_146 = arith.constant 5 : i32
    %774 = vector.broadcast %c5_i32_146 : i32 to vector<5x5xi32>
    %775 = arith.select %773, %606, %774 : vector<5x5xi1>, vector<5x5xi32>
    %cst_147 = arith.constant dense<2147483647> : vector<5xi32>
    %776 = vector.multi_reduction <minsi>, %775, %cst_147 [1] : vector<5x5xi32> to vector<5xi32>
    %777 = vector.shape_cast %776 : vector<5xi32> to vector<5x1xi32>
    %c7_i32_148 = arith.constant 7 : i32
    %778 = vector.broadcast %c7_i32_148 : i32 to vector<5x8xi32>
    %779 = arith.cmpi eq, %611, %778 : vector<5x8xi32>
    %780 = vector.shape_cast %777 : vector<5x1xi32> to vector<5x1xi32>
    %781 = vector.broadcast %780 : vector<5x1xi32> to vector<5x8xi32>
    %782 = arith.select %779, %781, %761 : vector<5x8xi1>, vector<5x8xi32>
    %783 = vector.broadcast %771 : vector<5x1xf32> to vector<5x5xf32>
    %784 = arith.mulf %783, %610 : vector<5x5xf32>
    %cst_149 = arith.constant dense<0.000000e+00> : vector<5xf32>
    %785 = vector.multi_reduction <add>, %784, %cst_149 [0] : vector<5x5xf32> to vector<5xf32>
    %786 = vector.shape_cast %785 : vector<5xf32> to vector<1x5xf32>
    %787 = vector.extract_strided_slice %604 {offsets = [7, 0], sizes = [1, 5], strides = [1, 1]} : vector<8x5xf32> to vector<1x5xf32>
    %788 = arith.addf %786, %787 : vector<1x5xf32>
    %789 = vector.extract_strided_slice %605 {offsets = [4, 0], sizes = [1, 5], strides = [1, 1]} : vector<5x5xf32> to vector<1x5xf32>
    %790 = arith.addf %788, %789 : vector<1x5xf32>
    %cst_150 = arith.constant dense<0xFF800000> : vector<1xf32>
    %791 = vector.multi_reduction <maximumf>, %790, %cst_150 [1] : vector<1x5xf32> to vector<1xf32>
    %792 = vector.shape_cast %791 : vector<1xf32> to vector<1x1xf32>
    %793 = vector.broadcast %792 : vector<1x1xf32> to vector<1x5xf32>
    %794 = arith.cmpf oeq, %790, %793 : vector<1x5xf32>
    %c5_i32_151 = arith.constant 5 : i32
    %795 = vector.broadcast %c5_i32_151 : i32 to vector<1x5xi32>
    %796 = arith.select %794, %613, %795 : vector<1x5xi1>, vector<1x5xi32>
    %cst_152 = arith.constant dense<2147483647> : vector<1xi32>
    %797 = vector.multi_reduction <minsi>, %796, %cst_152 [1] : vector<1x5xi32> to vector<1xi32>
    %798 = vector.shape_cast %797 : vector<1xi32> to vector<1x1xi32>
    %c7_i32_153 = arith.constant 7 : i32
    %799 = vector.broadcast %c7_i32_153 : i32 to vector<1x8xi32>
    %800 = arith.cmpi eq, %614, %799 : vector<1x8xi32>
    %c0_i32_154 = arith.constant 0 : i32
    %801 = vector.broadcast %c0_i32_154 : i32 to vector<1x8xi32>
    %802 = vector.shape_cast %798 : vector<1x1xi32> to vector<1x1xi32>
    %803 = vector.broadcast %802 : vector<1x1xi32> to vector<1x8xi32>
    %804 = arith.select %800, %803, %801 : vector<1x8xi1>, vector<1x8xi32>
    %805 = vector.extract_strided_slice %782 {offsets = [0, 7], sizes = [5, 1], strides = [1, 1]} : vector<5x8xi32> to vector<5x1xi32>
    %806 = vector.broadcast %798 : vector<1x1xi32> to vector<5x1xi32>
    %807 = arith.cmpi eq, %612, %806 : vector<5x1xi32>
    %c0_i32_155 = arith.constant 0 : i32
    %808 = vector.broadcast %c0_i32_155 : i32 to vector<5x1xi32>
    %809 = arith.select %807, %805, %808 : vector<5x1xi1>, vector<5x1xi32>
    %cst_156 = arith.constant dense<0> : vector<1xi32>
    %810 = vector.multi_reduction <add>, %809, %cst_156 [0] : vector<5x1xi32> to vector<1xi32>
    %811 = vector.shape_cast %810 : vector<1xi32> to vector<1x1xi32>
    %c6_i32_157 = arith.constant 6 : i32
    %812 = vector.broadcast %c6_i32_157 : i32 to vector<1x8xi32>
    %813 = arith.cmpi eq, %614, %812 : vector<1x8xi32>
    %814 = vector.shape_cast %811 : vector<1x1xi32> to vector<1x1xi32>
    %815 = vector.broadcast %814 : vector<1x1xi32> to vector<1x8xi32>
    %816 = arith.select %813, %815, %804 : vector<1x8xi1>, vector<1x8xi32>
    %817 = vector.extract_strided_slice %782 {offsets = [0, 6], sizes = [5, 1], strides = [1, 1]} : vector<5x8xi32> to vector<5x1xi32>
    %818 = vector.broadcast %811 : vector<1x1xi32> to vector<5x1xi32>
    %819 = arith.cmpi eq, %612, %818 : vector<5x1xi32>
    %c0_i32_158 = arith.constant 0 : i32
    %820 = vector.broadcast %c0_i32_158 : i32 to vector<5x1xi32>
    %821 = arith.select %819, %817, %820 : vector<5x1xi1>, vector<5x1xi32>
    %cst_159 = arith.constant dense<0> : vector<1xi32>
    %822 = vector.multi_reduction <add>, %821, %cst_159 [0] : vector<5x1xi32> to vector<1xi32>
    %823 = vector.shape_cast %822 : vector<1xi32> to vector<1x1xi32>
    %c5_i32_160 = arith.constant 5 : i32
    %824 = vector.broadcast %c5_i32_160 : i32 to vector<1x8xi32>
    %825 = arith.cmpi eq, %614, %824 : vector<1x8xi32>
    %826 = vector.shape_cast %823 : vector<1x1xi32> to vector<1x1xi32>
    %827 = vector.broadcast %826 : vector<1x1xi32> to vector<1x8xi32>
    %828 = arith.select %825, %827, %816 : vector<1x8xi1>, vector<1x8xi32>
    %829 = vector.extract_strided_slice %782 {offsets = [0, 5], sizes = [5, 1], strides = [1, 1]} : vector<5x8xi32> to vector<5x1xi32>
    %830 = vector.broadcast %823 : vector<1x1xi32> to vector<5x1xi32>
    %831 = arith.cmpi eq, %612, %830 : vector<5x1xi32>
    %c0_i32_161 = arith.constant 0 : i32
    %832 = vector.broadcast %c0_i32_161 : i32 to vector<5x1xi32>
    %833 = arith.select %831, %829, %832 : vector<5x1xi1>, vector<5x1xi32>
    %cst_162 = arith.constant dense<0> : vector<1xi32>
    %834 = vector.multi_reduction <add>, %833, %cst_162 [0] : vector<5x1xi32> to vector<1xi32>
    %835 = vector.shape_cast %834 : vector<1xi32> to vector<1x1xi32>
    %c4_i32_163 = arith.constant 4 : i32
    %836 = vector.broadcast %c4_i32_163 : i32 to vector<1x8xi32>
    %837 = arith.cmpi eq, %614, %836 : vector<1x8xi32>
    %838 = vector.shape_cast %835 : vector<1x1xi32> to vector<1x1xi32>
    %839 = vector.broadcast %838 : vector<1x1xi32> to vector<1x8xi32>
    %840 = arith.select %837, %839, %828 : vector<1x8xi1>, vector<1x8xi32>
    %841 = vector.extract_strided_slice %782 {offsets = [0, 4], sizes = [5, 1], strides = [1, 1]} : vector<5x8xi32> to vector<5x1xi32>
    %842 = vector.broadcast %835 : vector<1x1xi32> to vector<5x1xi32>
    %843 = arith.cmpi eq, %612, %842 : vector<5x1xi32>
    %c0_i32_164 = arith.constant 0 : i32
    %844 = vector.broadcast %c0_i32_164 : i32 to vector<5x1xi32>
    %845 = arith.select %843, %841, %844 : vector<5x1xi1>, vector<5x1xi32>
    %cst_165 = arith.constant dense<0> : vector<1xi32>
    %846 = vector.multi_reduction <add>, %845, %cst_165 [0] : vector<5x1xi32> to vector<1xi32>
    %847 = vector.shape_cast %846 : vector<1xi32> to vector<1x1xi32>
    %c3_i32_166 = arith.constant 3 : i32
    %848 = vector.broadcast %c3_i32_166 : i32 to vector<1x8xi32>
    %849 = arith.cmpi eq, %614, %848 : vector<1x8xi32>
    %850 = vector.shape_cast %847 : vector<1x1xi32> to vector<1x1xi32>
    %851 = vector.broadcast %850 : vector<1x1xi32> to vector<1x8xi32>
    %852 = arith.select %849, %851, %840 : vector<1x8xi1>, vector<1x8xi32>
    %853 = vector.extract_strided_slice %782 {offsets = [0, 3], sizes = [5, 1], strides = [1, 1]} : vector<5x8xi32> to vector<5x1xi32>
    %854 = vector.broadcast %847 : vector<1x1xi32> to vector<5x1xi32>
    %855 = arith.cmpi eq, %612, %854 : vector<5x1xi32>
    %c0_i32_167 = arith.constant 0 : i32
    %856 = vector.broadcast %c0_i32_167 : i32 to vector<5x1xi32>
    %857 = arith.select %855, %853, %856 : vector<5x1xi1>, vector<5x1xi32>
    %cst_168 = arith.constant dense<0> : vector<1xi32>
    %858 = vector.multi_reduction <add>, %857, %cst_168 [0] : vector<5x1xi32> to vector<1xi32>
    %859 = vector.shape_cast %858 : vector<1xi32> to vector<1x1xi32>
    %c2_i32_169 = arith.constant 2 : i32
    %860 = vector.broadcast %c2_i32_169 : i32 to vector<1x8xi32>
    %861 = arith.cmpi eq, %614, %860 : vector<1x8xi32>
    %862 = vector.shape_cast %859 : vector<1x1xi32> to vector<1x1xi32>
    %863 = vector.broadcast %862 : vector<1x1xi32> to vector<1x8xi32>
    %864 = arith.select %861, %863, %852 : vector<1x8xi1>, vector<1x8xi32>
    %865 = vector.extract_strided_slice %782 {offsets = [0, 2], sizes = [5, 1], strides = [1, 1]} : vector<5x8xi32> to vector<5x1xi32>
    %866 = vector.broadcast %859 : vector<1x1xi32> to vector<5x1xi32>
    %867 = arith.cmpi eq, %612, %866 : vector<5x1xi32>
    %c0_i32_170 = arith.constant 0 : i32
    %868 = vector.broadcast %c0_i32_170 : i32 to vector<5x1xi32>
    %869 = arith.select %867, %865, %868 : vector<5x1xi1>, vector<5x1xi32>
    %cst_171 = arith.constant dense<0> : vector<1xi32>
    %870 = vector.multi_reduction <add>, %869, %cst_171 [0] : vector<5x1xi32> to vector<1xi32>
    %871 = vector.shape_cast %870 : vector<1xi32> to vector<1x1xi32>
    %c1_i32_172 = arith.constant 1 : i32
    %872 = vector.broadcast %c1_i32_172 : i32 to vector<1x8xi32>
    %873 = arith.cmpi eq, %614, %872 : vector<1x8xi32>
    %874 = vector.shape_cast %871 : vector<1x1xi32> to vector<1x1xi32>
    %875 = vector.broadcast %874 : vector<1x1xi32> to vector<1x8xi32>
    %876 = arith.select %873, %875, %864 : vector<1x8xi1>, vector<1x8xi32>
    %877 = vector.extract_strided_slice %782 {offsets = [0, 1], sizes = [5, 1], strides = [1, 1]} : vector<5x8xi32> to vector<5x1xi32>
    %878 = vector.broadcast %871 : vector<1x1xi32> to vector<5x1xi32>
    %879 = arith.cmpi eq, %612, %878 : vector<5x1xi32>
    %c0_i32_173 = arith.constant 0 : i32
    %880 = vector.broadcast %c0_i32_173 : i32 to vector<5x1xi32>
    %881 = arith.select %879, %877, %880 : vector<5x1xi1>, vector<5x1xi32>
    %cst_174 = arith.constant dense<0> : vector<1xi32>
    %882 = vector.multi_reduction <add>, %881, %cst_174 [0] : vector<5x1xi32> to vector<1xi32>
    %883 = vector.shape_cast %882 : vector<1xi32> to vector<1x1xi32>
    %c0_i32_175 = arith.constant 0 : i32
    %884 = vector.broadcast %c0_i32_175 : i32 to vector<1x8xi32>
    %885 = arith.cmpi eq, %614, %884 : vector<1x8xi32>
    %886 = vector.shape_cast %883 : vector<1x1xi32> to vector<1x1xi32>
    %887 = vector.broadcast %886 : vector<1x1xi32> to vector<1x8xi32>
    %888 = arith.select %885, %887, %876 : vector<1x8xi1>, vector<1x8xi32>
    %889 = vector.broadcast %883 : vector<1x1xi32> to vector<5x1xi32>
    %890 = arith.cmpi eq, %612, %889 : vector<5x1xi32>
    %891 = vector.extract_strided_slice %782 {offsets = [0, 0], sizes = [5, 1], strides = [1, 1]} : vector<5x8xi32> to vector<5x1xi32>
    %c0_i32_176 = arith.constant 0 : i32
    %892 = vector.broadcast %c0_i32_176 : i32 to vector<5x1xi32>
    %893 = arith.select %890, %891, %892 : vector<5x1xi1>, vector<5x1xi32>
    %cst_177 = arith.constant dense<0> : vector<1xi32>
    %894 = vector.multi_reduction <add>, %893, %cst_177 [0] : vector<5x1xi32> to vector<1xi32>
    %895 = vector.shape_cast %894 : vector<1xi32> to vector<1x1xi32>
    %c0_178 = arith.constant 0 : index
    %c0_179 = arith.constant 0 : index
    %896 = vector.load %arg20[%c0_178, %c0_179] : memref<1x8xi32, #tpu.memory_space<vmem>>, vector<1x8xi32>
    tpu.vector_store %arg20[%c0_178, %c0_179], %888 {strides = array<i32>} : memref<1x8xi32, #tpu.memory_space<vmem>>, vector<1x8xi32>,
    %c0_180 = arith.constant 0 : index
    %c0_181 = arith.constant 0 : index
    %897 = vector.load %arg21[%c0_180, %c0_181] : memref<1x1xf32, #tpu.memory_space<vmem>>, vector<1x1xf32>
    tpu.vector_store %arg21[%c0_180, %c0_181], %792 {strides = array<i32>} : memref<1x1xf32, #tpu.memory_space<vmem>>, vector<1x1xf32>,
    %c0_182 = arith.constant 0 : index
    %c0_183 = arith.constant 0 : index
    %898 = vector.load %arg22[%c0_182, %c0_183] : memref<1x1xi32, #tpu.memory_space<vmem>>, vector<1x1xi32>
    tpu.vector_store %arg22[%c0_182, %c0_183], %895 {strides = array<i32>} : memref<1x1xi32, #tpu.memory_space<vmem>>, vector<1x1xi32>,
    return
  }
}

</mosaic_0001>

<llo_original>
// kernel: _forward_device.1
$region0: #{_forward_device.1}
  #allocation0 [shape = 'u32[]', space=smem, size = 0x4, offset = 0x4, fixed_abs, tag = 'smem constant byte address 0x4 - core index']
  #allocation1 [shape = 'u32[72,128]{1,0:T(1,128)}', space=vmem, size = 0x9000, scoped, tag = 'internal scratch']
  %s0 = inlined_call_operand.vmem [shape: f32[48,8], index: 0, kind: input, shape index: {}]
  %s1 = inlined_call_operand.vmem [shape: f32[8,16], index: 1, kind: input, shape index: {}]
  %s2 = inlined_call_operand.vmem [shape: f32[8,32], index: 2, kind: input, shape index: {}]
  %s3 = inlined_call_operand.vmem [shape: f32[8,32], index: 3, kind: input, shape index: {}]
  %s4 = inlined_call_operand.vmem [shape: f32[1,32], index: 4, kind: input, shape index: {}]
  %s5 = inlined_call_operand.vmem [shape: f32[8,32], index: 5, kind: input, shape index: {}]
  %s6 = inlined_call_operand.vmem [shape: f32[1,32], index: 6, kind: input, shape index: {}]
  %s7 = inlined_call_operand.vmem [shape: f32[32,64], index: 7, kind: input, shape index: {}]
  %s8 = inlined_call_operand.vmem [shape: f32[16,64], index: 8, kind: input, shape index: {}]
  %s9 = inlined_call_operand.vmem [shape: f32[1,64], index: 9, kind: input, shape index: {}]
  %s10 = inlined_call_operand.vmem [shape: f32[32,64], index: 10, kind: input, shape index: {}]
  %s11 = inlined_call_operand.vmem [shape: f32[16,64], index: 11, kind: input, shape index: {}]
  %s12 = inlined_call_operand.vmem [shape: f32[1,64], index: 12, kind: input, shape index: {}]
  %s13 = inlined_call_operand.vmem [shape: f32[1,16], index: 13, kind: input, shape index: {}]
  %s14 = inlined_call_operand.vmem [shape: f32[1,16], index: 14, kind: input, shape index: {}]
  %s15 = inlined_call_operand.vmem [shape: f32[1,16], index: 15, kind: input, shape index: {}]
  %s16 = inlined_call_operand.vmem [shape: f32[1,16], index: 16, kind: input, shape index: {}]
  %s17 = inlined_call_operand.vmem [shape: f32[32,5], index: 17, kind: input, shape index: {}]
  %s18 = inlined_call_operand.vmem [shape: f32[1,5], index: 18, kind: input, shape index: {}]
  %s19 = inlined_call_operand.vmem [shape: f32[5,5], index: 19, kind: input, shape index: {}]
  %s20 = inlined_call_operand.hbm [shape: s32[1,8], index: 20, kind: output, shape index: {0}]
  %s21 = inlined_call_operand.hbm [shape: f32[1,1], index: 21, kind: output, shape index: {1}]
  %s22 = inlined_call_operand.hbm [shape: s32[1,1], index: 22, kind: output, shape index: {2}]
  %23 = xla_tuple %s20, %s21, %s22
  %s24 = sld [smem:[#allocation0]]
  $region106: #{_forward_device.1} parent=0
    _
  %s26 = ssub.s32 1, %s24
  %s27 = scalar_select 0, %s26, %s24
  $region1: #{_forward_device.1} parent=0
    #allocation2 [shape = 'u8[512]{0}', space=vmem, size = 0x400, scoped, tag = 'output window, operand 0, single buffered']
    #allocation3 [shape = 's32[1]{0}', space=sflag, size = 0x4, scoped, tag = 'scoped memory for _forward_device.1']
    #allocation4 [shape = 'u8[512]{0}', space=vmem, size = 0x400, scoped, tag = 'output window, operand 1, single buffered']
    #allocation5 [shape = 's32[1]{0}', space=sflag, size = 0x4, scoped, tag = 'scoped memory for _forward_device.1']
    #allocation6 [shape = 'u8[512]{0}', space=vmem, size = 0x400, scoped, tag = 'output window, operand 2, single buffered']
    %28 = vsyncpa [#allocation3], 0
    %29 = vsyncpa [#allocation5], 0
    // Predicated region
    $region2: #{_forward_device.1} parent=1 // pred_check
      _
    $region3: #{_forward_device.1} parent=1 // pred_check_branch
      %31 = sbr.rel (0) target = $region5
    $region4: #{_forward_device.1} parent=1 // pred_region
      _
    $region5: #{_forward_device.1} parent=1 // pred_fallthru
      _
    // Predicated region
    $region6: #{_forward_device.1} parent=1 // pred_check
      _
    $region7: #{_forward_device.1} parent=1 // pred_check_branch
      %33 = sbr.rel (0) target = $region9
    $region8: #{_forward_device.1} parent=1 // pred_region
      _
    $region9: #{_forward_device.1} parent=1 // pred_fallthru
      _
    // Predicated region
    $region10: #{_forward_device.1} parent=1 // pred_check
      _
    $region11: #{_forward_device.1} parent=1 // pred_check_branch
      %35 = sbr.rel (0) target = $region13
    $region12: #{_forward_device.1} parent=1 // pred_region
      _
    $region13: #{_forward_device.1} parent=1 // pred_fallthru
      _
    // Predicated region
    $region14: #{_forward_device.1} parent=1 // pred_check
      _
    $region15: #{_forward_device.1} parent=1 // pred_check_branch
      %37 = sbr.rel (0) target = $region17
    $region16: #{_forward_device.1} parent=1 // pred_region
      _
    $region17: #{_forward_device.1} parent=1 // pred_fallthru
      _
    // Predicated region
    $region18: #{_forward_device.1} parent=1 // pred_check
      _
    $region19: #{_forward_device.1} parent=1 // pred_check_branch
      %39 = sbr.rel (0) target = $region21
    $region20: #{_forward_device.1} parent=1 // pred_region
      _
    $region21: #{_forward_device.1} parent=1 // pred_fallthru
      _
    // Predicated region
    $region22: #{_forward_device.1} parent=1 // pred_check
      _
    $region23: #{_forward_device.1} parent=1 // pred_check_branch
      %41 = sbr.rel (0) target = $region25
    $region24: #{_forward_device.1} parent=1 // pred_region
      _
    $region25: #{_forward_device.1} parent=1 // pred_fallthru
      _
    // Predicated region
    $region26: #{_forward_device.1} parent=1 // pred_check
      _
    $region27: #{_forward_device.1} parent=1 // pred_check_branch
      %43 = sbr.rel (0) target = $region29
    $region28: #{_forward_device.1} parent=1 // pred_region
      _
    $region29: #{_forward_device.1} parent=1 // pred_fallthru
      _
    // Predicated region
    $region30: #{_forward_device.1} parent=1 // pred_check
      _
    $region31: #{_forward_device.1} parent=1 // pred_check_branch
      %45 = sbr.rel (0) target = $region33
    $region32: #{_forward_device.1} parent=1 // pred_region
      _
    $region33: #{_forward_device.1} parent=1 // pred_fallthru
      _
    // Predicated region
    $region34: #{_forward_device.1} parent=1 // pred_check
      _
    $region35: #{_forward_device.1} parent=1 // pred_check_branch
      %47 = sbr.rel (0) target = $region37
    $region36: #{_forward_device.1} parent=1 // pred_region
      _
    $region37: #{_forward_device.1} parent=1 // pred_fallthru
      _
    // Predicated region
    $region38: #{_forward_device.1} parent=1 // pred_check
      _
    $region39: #{_forward_device.1} parent=1 // pred_check_branch
      %49 = sbr.rel (0) target = $region41
    $region40: #{_forward_device.1} parent=1 // pred_region
      _
    $region41: #{_forward_device.1} parent=1 // pred_fallthru
      _
    // Predicated region
    $region42: #{_forward_device.1} parent=1 // pred_check
      _
    $region43: #{_forward_device.1} parent=1 // pred_check_branch
      %51 = sbr.rel (0) target = $region45
    $region44: #{_forward_device.1} parent=1 // pred_region
      _
    $region45: #{_forward_device.1} parent=1 // pred_fallthru
      _
    // Predicated region
    $region46: #{_forward_device.1} parent=1 // pred_check
      _
    $region47: #{_forward_device.1} parent=1 // pred_check_branch
      %53 = sbr.rel (0) target = $region49
    $region48: #{_forward_device.1} parent=1 // pred_region
      _
    $region49: #{_forward_device.1} parent=1 // pred_fallthru
      _
    // Predicated region
    $region50: #{_forward_device.1} parent=1 // pred_check
      _
    $region51: #{_forward_device.1} parent=1 // pred_check_branch
      %55 = sbr.rel (0) target = $region53
    $region52: #{_forward_device.1} parent=1 // pred_region
      _
    $region53: #{_forward_device.1} parent=1 // pred_fallthru
      _
    // Predicated region
    $region54: #{_forward_device.1} parent=1 // pred_check
      _
    $region55: #{_forward_device.1} parent=1 // pred_check_branch
      %57 = sbr.rel (0) target = $region57
    $region56: #{_forward_device.1} parent=1 // pred_region
      _
    $region57: #{_forward_device.1} parent=1 // pred_fallthru
      _
    // Predicated region
    $region58: #{_forward_device.1} parent=1 // pred_check
      _
    $region59: #{_forward_device.1} parent=1 // pred_check_branch
      %59 = sbr.rel (0) target = $region61
    $region60: #{_forward_device.1} parent=1 // pred_region
      _
    $region61: #{_forward_device.1} parent=1 // pred_fallthru
      _
    // Predicated region
    $region62: #{_forward_device.1} parent=1 // pred_check
      _
    $region63: #{_forward_device.1} parent=1 // pred_check_branch
      %61 = sbr.rel (0) target = $region65
    $region64: #{_forward_device.1} parent=1 // pred_region
      _
    $region65: #{_forward_device.1} parent=1 // pred_fallthru
      _
    // Predicated region
    $region66: #{_forward_device.1} parent=1 // pred_check
      _
    $region67: #{_forward_device.1} parent=1 // pred_check_branch
      %63 = sbr.rel (0) target = $region69
    $region68: #{_forward_device.1} parent=1 // pred_region
      _
    $region69: #{_forward_device.1} parent=1 // pred_fallthru
      _
    // Predicated region
    $region70: #{_forward_device.1} parent=1 // pred_check
      _
    $region71: #{_forward_device.1} parent=1 // pred_check_branch
      %65 = sbr.rel (0) target = $region73
    $region72: #{_forward_device.1} parent=1 // pred_region
      _
    $region73: #{_forward_device.1} parent=1 // pred_fallthru
      _
    // Predicated region
    $region74: #{_forward_device.1} parent=1 // pred_check
      _
    $region75: #{_forward_device.1} parent=1 // pred_check_branch
      %67 = sbr.rel (0) target = $region77
    $region76: #{_forward_device.1} parent=1 // pred_region
      _
    $region77: #{_forward_device.1} parent=1 // pred_fallthru
      _
    // Predicated region
    $region78: #{_forward_device.1} parent=1 // pred_check
      _
    $region79: #{_forward_device.1} parent=1 // pred_check_branch
      %69 = sbr.rel (0) target = $region81
    $region80: #{_forward_device.1} parent=1 // pred_region
      _
    $region81: #{_forward_device.1} parent=1 // pred_fallthru
      _
    %v70 = vld [vmem:[%s0] sm:$0xff]
    %v71 = vld [vmem:[%s0 + $0x8] sm:$0xff]
    %v72 = vld [vmem:[%s0 + $0x10] sm:$0xff]
    %v73 = vld [vmem:[%s0 + $0x18] sm:$0xff]
    %v74 = vld [vmem:[%s0 + $0x20] sm:$0xff]
    %v75 = vld [vmem:[%s0 + $0x28] sm:$0xff]
    %v76 = vld [vmem:[%s1] sm:$0xff]
    %v77 = vld [vmem:[%s2] sm:$0xff]
    %v78 = vld [vmem:[%s4] sm:$0x1]
    %v80 = vperm.slane %v78, 0
    %vm82 = vcmask 64512
    %v84 = vsel %vm82, %v70, 0
    %v87 = vsel %vm82, %v71, 0
    %v90 = vsel %vm82, %v72, 0
    %v93 = vsel %vm82, %v73, 0
    %v96 = vsel %vm82, %v74, 0
    %v99 = vsel %vm82, %v75, 0
    %101 = vmatpush.msra.mxu0 0.0
    %102 = vmatpush.msra.mxu0 0.0
    %103 = vmatpush.msra.mxu0 0.0
    %104 = vmatpush.msra.mxu0 0.0
    %105 = vmatpush.msra.mxu0 0.0
    %106 = vmatpush.msra.mxu0 0.0
    %107 = vmatpush.msra.mxu0 0.0
    %108 = vmatpush.msra.mxu0 0.0
    %109 = vmatpush.msra.mxu0 0.0
    %110 = vmatpush.msra.mxu0 0.0
    %111 = vmatpush.msra.mxu0 0.0
    %112 = vmatpush.msra.mxu0 0.0
    %113 = vmatpush.msra.mxu0 0.0
    %114 = vmatpush.msra.mxu0 0.0
    %115 = vmatpush.msra.mxu0 0.0
    %116 = vmatpush.msra.mxu0 %v77
    %117 = vmatmul.f32.gmra.mxu0 %v84
    %v118 = vpop.f32.mrf.mxu0
    %v119 = vadd.f32 %v80, %v118
    %120 = vmatmul.f32.gmra.mxu0 %v87
    %v121 = vpop.f32.mrf.mxu0
    %v122 = vadd.f32 %v80, %v121
    %123 = vmatmul.f32.gmra.mxu0 %v90
    %v124 = vpop.f32.mrf.mxu0
    %v125 = vadd.f32 %v80, %v124
    %126 = vmatmul.f32.gmra.mxu0 %v93
    %v127 = vpop.f32.mrf.mxu0
    %v128 = vadd.f32 %v80, %v127
    %129 = vmatmul.f32.gmra.mxu0 %v96
    %v130 = vpop.f32.mrf.mxu0
    %v131 = vadd.f32 %v80, %v130
    %132 = vmatmul.f32.gmra.mxu0 %v99
    %v133 = vpop.f32.mrf.mxu0
    %v134 = vadd.f32 %v80, %v133
    %135 = vdwg.mxu0
    %v136 = vld [vmem:[%s3] sm:$0xff]
    %v138 = vsel %vm82, 0.0, 0
    %140 = vmatpush.msra.mxu0 0.0
    %141 = vmatpush.msra.mxu0 0.0
    %142 = vmatpush.msra.mxu0 0.0
    %143 = vmatpush.msra.mxu0 0.0
    %144 = vmatpush.msra.mxu0 0.0
    %145 = vmatpush.msra.mxu0 0.0
    %146 = vmatpush.msra.mxu0 0.0
    %147 = vmatpush.msra.mxu0 0.0
    %148 = vmatpush.msra.mxu0 0.0
    %149 = vmatpush.msra.mxu0 0.0
    %150 = vmatpush.msra.mxu0 0.0
    %151 = vmatpush.msra.mxu0 0.0
    %152 = vmatpush.msra.mxu0 0.0
    %153 = vmatpush.msra.mxu0 0.0
    %154 = vmatpush.msra.mxu0 0.0
    %155 = vmatpush.msra.mxu0 %v136
    %156 = vmatmul.f32.gmra.mxu0 %v138
    %v157 = vpop.f32.mrf.mxu0
    %v158 = vadd.f32 0.0, %v157
    %159 = vdwg.mxu0
    %v160 = vadd.f32 %v119, %v158
    %v161 = vxor.u32 %v160, 2147483648
    %v162 = vmul.f32 %v161, 1.442695
    %v163 = vpow.pop %v162
    %v164 = vadd.f32 %v163, 1.0
    %v165 = vrcp.pop %v164
    %v166 = vmul.f32 %v164, %v165
    %v167 = vsub.f32 1.0, %v166
    %v168 = vmul.f32 %v165, %v167
    %v169 = vadd.f32 %v165, %v168
    %vm170 = vweird.f32 %v164
    %vm171 = vweird.f32 %v165
    %vm172 = vmor %vm170, %vm171
    %v173 = vsel %vm172, %v165, %v169
    %v174 = vand.u32 2147483647, %v164
    %vm175 = vcmp.eq.f32.partialorder %v174, 8.507059e+37
    %v176 = vand.u32 %v164, 2147483648
    %v177 = vor.u32 1.1754944e-38, %v176
    %v178 = vsel %vm175, %v177, %v173
    %v179 = vmul.f32 1.0, %v178
    %v180 = vtanh.pop %v160
    %v181 = vmul.f32 %v179, 0.0
    %183 = vrot.lane.b32.xlu0 %v180, 104
    %v184 = vpop.permute.xlu0 %183
    %v186 = vmul.f32 %v179, %v184
    %188 = vrot.lane.b32.xlu0 %v186, 8
    %v189 = vpop.permute.xlu0 %188
    %v191 = vadd.f32 %v181, %v189
    %v192 = vtanh.pop %v191
    %194 = vrot.lane.b32.xlu0 %v192, 8
    %v195 = vpop.permute.xlu0 %194
    %v197 = vmul.f32 %v179, %v195
    %199 = vrot.lane.b32.xlu0 %v197, 112
    %v200 = vpop.permute.xlu0 %199
    %v201 = vsel %vm82, %v200, 0
    %203 = vmatpush.msra.mxu0 0.0
    %204 = vmatpush.msra.mxu0 0.0
    %205 = vmatpush.msra.mxu0 0.0
    %206 = vmatpush.msra.mxu0 0.0
    %207 = vmatpush.msra.mxu0 0.0
    %208 = vmatpush.msra.mxu0 0.0
    %209 = vmatpush.msra.mxu0 0.0
    %210 = vmatpush.msra.mxu0 0.0
    %211 = vmatpush.msra.mxu0 0.0
    %212 = vmatpush.msra.mxu0 0.0
    %213 = vmatpush.msra.mxu0 0.0
    %214 = vmatpush.msra.mxu0 0.0
    %215 = vmatpush.msra.mxu0 0.0
    %216 = vmatpush.msra.mxu0 0.0
    %217 = vmatpush.msra.mxu0 0.0
    %218 = vmatpush.msra.mxu0 %v136
    %219 = vmatmul.f32.gmra.mxu0 %v201
    %v220 = vpop.f32.mrf.mxu0
    %v221 = vadd.f32 0.0, %v220
    %222 = vdwg.mxu0
    %v223 = vadd.f32 %v122, %v221
    %v224 = vxor.u32 %v223, 2147483648
    %v225 = vmul.f32 %v224, 1.442695
    %v226 = vpow.pop %v225
    %v227 = vadd.f32 %v226, 1.0
    %v228 = vrcp.pop %v227
    %v229 = vmul.f32 %v227, %v228
    %v230 = vsub.f32 1.0, %v229
    %v231 = vmul.f32 %v228, %v230
    %v232 = vadd.f32 %v228, %v231
    %vm233 = vweird.f32 %v227
    %vm234 = vweird.f32 %v228
    %vm235 = vmor %vm233, %vm234
    %v236 = vsel %vm235, %v228, %v232
    %v237 = vand.u32 2147483647, %v227
    %vm238 = vcmp.eq.f32.partialorder %v237, 8.507059e+37
    %v239 = vand.u32 %v227, 2147483648
    %v240 = vor.u32 1.1754944e-38, %v239
    %v241 = vsel %vm238, %v240, %v236
    %v242 = vmul.f32 1.0, %v241
    %v243 = vtanh.pop %v223
    %v244 = vmul.f32 %v242, %v191
    %246 = vrot.lane.b32.xlu0 %v243, 104
    %v247 = vpop.permute.xlu0 %246
    %v249 = vmul.f32 %v242, %v247
    %251 = vrot.lane.b32.xlu0 %v249, 8
    %v252 = vpop.permute.xlu0 %251
    %v254 = vadd.f32 %v244, %v252
    %v255 = vtanh.pop %v254
    %257 = vrot.lane.b32.xlu0 %v255, 8
    %v258 = vpop.permute.xlu0 %257
    %v260 = vmul.f32 %v242, %v258
    %262 = vrot.lane.b32.xlu0 %v260, 112
    %v263 = vpop.permute.xlu0 %262
    %v264 = vsel %vm82, %v263, 0
    %266 = vmatpush.msra.mxu0 0.0
    %267 = vmatpush.msra.mxu0 0.0
    %268 = vmatpush.msra.mxu0 0.0
    %269 = vmatpush.msra.mxu0 0.0
    %270 = vmatpush.msra.mxu0 0.0
    %271 = vmatpush.msra.mxu0 0.0
    %272 = vmatpush.msra.mxu0 0.0
    %273 = vmatpush.msra.mxu0 0.0
    %274 = vmatpush.msra.mxu0 0.0
    %275 = vmatpush.msra.mxu0 0.0
    %276 = vmatpush.msra.mxu0 0.0
    %277 = vmatpush.msra.mxu0 0.0
    %278 = vmatpush.msra.mxu0 0.0
    %279 = vmatpush.msra.mxu0 0.0
    %280 = vmatpush.msra.mxu0 0.0
    %281 = vmatpush.msra.mxu0 %v136
    %282 = vmatmul.f32.gmra.mxu0 %v264
    %v283 = vpop.f32.mrf.mxu0
    %v284 = vadd.f32 0.0, %v283
    %285 = vdwg.mxu0
    %v286 = vadd.f32 %v125, %v284
    %v287 = vxor.u32 %v286, 2147483648
    %v288 = vmul.f32 %v287, 1.442695
    %v289 = vpow.pop %v288
    %v290 = vadd.f32 %v289, 1.0
    %v291 = vrcp.pop %v290
    %v292 = vmul.f32 %v290, %v291
    %v293 = vsub.f32 1.0, %v292
    %v294 = vmul.f32 %v291, %v293
    %v295 = vadd.f32 %v291, %v294
    %vm296 = vweird.f32 %v290
    %vm297 = vweird.f32 %v291
    %vm298 = vmor %vm296, %vm297
    %v299 = vsel %vm298, %v291, %v295
    %v300 = vand.u32 2147483647, %v290
    %vm301 = vcmp.eq.f32.partialorder %v300, 8.507059e+37
    %v302 = vand.u32 %v290, 2147483648
    %v303 = vor.u32 1.1754944e-38, %v302
    %v304 = vsel %vm301, %v303, %v299
    %v305 = vmul.f32 1.0, %v304
    %v306 = vtanh.pop %v286
    %v307 = vmul.f32 %v305, %v254
    %309 = vrot.lane.b32.xlu0 %v306, 104
    %v310 = vpop.permute.xlu0 %309
    %v312 = vmul.f32 %v305, %v310
    %314 = vrot.lane.b32.xlu0 %v312, 8
    %v315 = vpop.permute.xlu0 %314
    %v317 = vadd.f32 %v307, %v315
    %v318 = vtanh.pop %v317
    %320 = vrot.lane.b32.xlu0 %v318, 8
    %v321 = vpop.permute.xlu0 %320
    %v323 = vmul.f32 %v305, %v321
    %325 = vrot.lane.b32.xlu0 %v323, 112
    %v326 = vpop.permute.xlu0 %325
    %v327 = vsel %vm82, %v326, 0
    %329 = vmatpush.msra.mxu0 0.0
    %330 = vmatpush.msra.mxu0 0.0
    %331 = vmatpush.msra.mxu0 0.0
    %332 = vmatpush.msra.mxu0 0.0
    %333 = vmatpush.msra.mxu0 0.0
    %334 = vmatpush.msra.mxu0 0.0
    %335 = vmatpush.msra.mxu0 0.0
    %336 = vmatpush.msra.mxu0 0.0
    %337 = vmatpush.msra.mxu0 0.0
    %338 = vmatpush.msra.mxu0 0.0
    %339 = vmatpush.msra.mxu0 0.0
    %340 = vmatpush.msra.mxu0 0.0
    %341 = vmatpush.msra.mxu0 0.0
    %342 = vmatpush.msra.mxu0 0.0
    %343 = vmatpush.msra.mxu0 0.0
    %344 = vmatpush.msra.mxu0 %v136
    %345 = vmatmul.f32.gmra.mxu0 %v327
    %v346 = vpop.f32.mrf.mxu0
    %v347 = vadd.f32 0.0, %v346
    %348 = vdwg.mxu0
    %v349 = vadd.f32 %v128, %v347
    %v350 = vxor.u32 %v349, 2147483648
    %v351 = vmul.f32 %v350, 1.442695
    %v352 = vpow.pop %v351
    %v353 = vadd.f32 %v352, 1.0
    %v354 = vrcp.pop %v353
    %v355 = vmul.f32 %v353, %v354
    %v356 = vsub.f32 1.0, %v355
    %v357 = vmul.f32 %v354, %v356
    %v358 = vadd.f32 %v354, %v357
    %vm359 = vweird.f32 %v353
    %vm360 = vweird.f32 %v354
    %vm361 = vmor %vm359, %vm360
    %v362 = vsel %vm361, %v354, %v358
    %v363 = vand.u32 2147483647, %v353
    %vm364 = vcmp.eq.f32.partialorder %v363, 8.507059e+37
    %v365 = vand.u32 %v353, 2147483648
    %v366 = vor.u32 1.1754944e-38, %v365
    %v367 = vsel %vm364, %v366, %v362
    %v368 = vmul.f32 1.0, %v367
    %v369 = vtanh.pop %v349
    %v370 = vmul.f32 %v368, %v317
    %372 = vrot.lane.b32.xlu0 %v369, 104
    %v373 = vpop.permute.xlu0 %372
    %v375 = vmul.f32 %v368, %v373
    %377 = vrot.lane.b32.xlu0 %v375, 8
    %v378 = vpop.permute.xlu0 %377
    %v380 = vadd.f32 %v370, %v378
    %v381 = vtanh.pop %v380
    %383 = vrot.lane.b32.xlu0 %v381, 8
    %v384 = vpop.permute.xlu0 %383
    %v386 = vmul.f32 %v368, %v384
    %388 = vrot.lane.b32.xlu0 %v386, 112
    %v389 = vpop.permute.xlu0 %388
    %v390 = vsel %vm82, %v389, 0
    %392 = vmatpush.msra.mxu0 0.0
    %393 = vmatpush.msra.mxu0 0.0
    %394 = vmatpush.msra.mxu0 0.0
    %395 = vmatpush.msra.mxu0 0.0
    %396 = vmatpush.msra.mxu0 0.0
    %397 = vmatpush.msra.mxu0 0.0
    %398 = vmatpush.msra.mxu0 0.0
    %399 = vmatpush.msra.mxu0 0.0
    %400 = vmatpush.msra.mxu0 0.0
    %401 = vmatpush.msra.mxu0 0.0
    %402 = vmatpush.msra.mxu0 0.0
    %403 = vmatpush.msra.mxu0 0.0
    %404 = vmatpush.msra.mxu0 0.0
    %405 = vmatpush.msra.mxu0 0.0
    %406 = vmatpush.msra.mxu0 0.0
    %407 = vmatpush.msra.mxu0 %v136
    %408 = vmatmul.f32.gmra.mxu0 %v390
    %v409 = vpop.f32.mrf.mxu0
    %v410 = vadd.f32 0.0, %v409
    %411 = vdwg.mxu0
    %v412 = vadd.f32 %v131, %v410
    %v413 = vxor.u32 %v412, 2147483648
    %v414 = vmul.f32 %v413, 1.442695
    %v415 = vpow.pop %v414
    %v416 = vadd.f32 %v415, 1.0
    %v417 = vrcp.pop %v416
    %v418 = vmul.f32 %v416, %v417
    %v419 = vsub.f32 1.0, %v418
    %v420 = vmul.f32 %v417, %v419
    %v421 = vadd.f32 %v417, %v420
    %vm422 = vweird.f32 %v416
    %vm423 = vweird.f32 %v417
    %vm424 = vmor %vm422, %vm423
    %v425 = vsel %vm424, %v417, %v421
    %v426 = vand.u32 2147483647, %v416
    %vm427 = vcmp.eq.f32.partialorder %v426, 8.507059e+37
    %v428 = vand.u32 %v416, 2147483648
    %v429 = vor.u32 1.1754944e-38, %v428
    %v430 = vsel %vm427, %v429, %v425
    %v431 = vmul.f32 1.0, %v430
    %v432 = vtanh.pop %v412
    %v433 = vmul.f32 %v431, %v380
    %435 = vrot.lane.b32.xlu0 %v432, 104
    %v436 = vpop.permute.xlu0 %435
    %v438 = vmul.f32 %v431, %v436
    %440 = vrot.lane.b32.xlu0 %v438, 8
    %v441 = vpop.permute.xlu0 %440
    %v443 = vadd.f32 %v433, %v441
    %v444 = vtanh.pop %v443
    %446 = vrot.lane.b32.xlu0 %v444, 8
    %v447 = vpop.permute.xlu0 %446
    %v449 = vmul.f32 %v431, %v447
    %451 = vrot.lane.b32.xlu0 %v449, 112
    %v452 = vpop.permute.xlu0 %451
    %v453 = vsel %vm82, %v452, 0
    %455 = vmatpush.msra.mxu0 0.0
    %456 = vmatpush.msra.mxu0 0.0
    %457 = vmatpush.msra.mxu0 0.0
    %458 = vmatpush.msra.mxu0 0.0
    %459 = vmatpush.msra.mxu0 0.0
    %460 = vmatpush.msra.mxu0 0.0
    %461 = vmatpush.msra.mxu0 0.0
    %462 = vmatpush.msra.mxu0 0.0
    %463 = vmatpush.msra.mxu0 0.0
    %464 = vmatpush.msra.mxu0 0.0
    %465 = vmatpush.msra.mxu0 0.0
    %466 = vmatpush.msra.mxu0 0.0
    %467 = vmatpush.msra.mxu0 0.0
    %468 = vmatpush.msra.mxu0 0.0
    %469 = vmatpush.msra.mxu0 0.0
    %470 = vmatpush.msra.mxu0 %v136
    %471 = vmatmul.f32.gmra.mxu0 %v453
    %v472 = vpop.f32.mrf.mxu0
    %v473 = vadd.f32 0.0, %v472
    %474 = vdwg.mxu0
    %v475 = vadd.f32 %v134, %v473
    %v476 = vxor.u32 %v475, 2147483648
    %v477 = vmul.f32 %v476, 1.442695
    %v478 = vpow.pop %v477
    %v479 = vadd.f32 %v478, 1.0
    %v480 = vrcp.pop %v479
    %v481 = vmul.f32 %v479, %v480
    %v482 = vsub.f32 1.0, %v481
    %v483 = vmul.f32 %v480, %v482
    %v484 = vadd.f32 %v480, %v483
    %vm485 = vweird.f32 %v479
    %vm486 = vweird.f32 %v480
    %vm487 = vmor %vm485, %vm486
    %v488 = vsel %vm487, %v480, %v484
    %v489 = vand.u32 2147483647, %v479
    %vm490 = vcmp.eq.f32.partialorder %v489, 8.507059e+37
    %v491 = vand.u32 %v479, 2147483648
    %v492 = vor.u32 1.1754944e-38, %v491
    %v493 = vsel %vm490, %v492, %v488
    %v494 = vmul.f32 1.0, %v493
    %v495 = vtanh.pop %v475
    %v496 = vmul.f32 %v494, %v443
    %498 = vrot.lane.b32.xlu0 %v495, 104
    %v499 = vpop.permute.xlu0 %498
    %v501 = vmul.f32 %v494, %v499
    %503 = vrot.lane.b32.xlu0 %v501, 8
    %v504 = vpop.permute.xlu0 %503
    %v506 = vadd.f32 %v496, %v504
    %v507 = vtanh.pop %v506
    %509 = vrot.lane.b32.xlu0 %v507, 8
    %v510 = vpop.permute.xlu0 %509
    %v512 = vmul.f32 %v494, %v510
    %v513 = vld [vmem:[%s5] sm:$0xff]
    %v514 = vld [vmem:[%s6] sm:$0x1]
    %v516 = vperm.slane %v514, 0
    %518 = vmatpush.msra.mxu0 0.0
    %519 = vmatpush.msra.mxu0 0.0
    %520 = vmatpush.msra.mxu0 0.0
    %521 = vmatpush.msra.mxu0 0.0
    %522 = vmatpush.msra.mxu0 0.0
    %523 = vmatpush.msra.mxu0 0.0
    %524 = vmatpush.msra.mxu0 0.0
    %525 = vmatpush.msra.mxu0 0.0
    %526 = vmatpush.msra.mxu0 0.0
    %527 = vmatpush.msra.mxu0 0.0
    %528 = vmatpush.msra.mxu0 0.0
    %529 = vmatpush.msra.mxu0 0.0
    %530 = vmatpush.msra.mxu0 0.0
    %531 = vmatpush.msra.mxu0 0.0
    %532 = vmatpush.msra.mxu0 0.0
    %533 = vmatpush.msra.mxu0 %v513
    %534 = vmatmul.f32.gmra.mxu0 %v99
    %v535 = vpop.f32.mrf.mxu0
    %v536 = vadd.f32 %v516, %v535
    %537 = vdwg.mxu0
    %v538 = vxor.u32 %v536, 2147483648
    %v539 = vmul.f32 %v538, 1.442695
    %v540 = vpow.pop %v539
    %v541 = vadd.f32 %v540, 1.0
    %v542 = vrcp.pop %v541
    %v543 = vmul.f32 %v541, %v542
    %v544 = vsub.f32 1.0, %v543
    %v545 = vmul.f32 %v542, %v544
    %v546 = vadd.f32 %v542, %v545
    %vm547 = vweird.f32 %v541
    %vm548 = vweird.f32 %v542
    %vm549 = vmor %vm547, %vm548
    %v550 = vsel %vm549, %v542, %v546
    %v551 = vand.u32 2147483647, %v541
    %vm552 = vcmp.eq.f32.partialorder %v551, 8.507059e+37
    %v553 = vand.u32 %v541, 2147483648
    %v554 = vor.u32 1.1754944e-38, %v553
    %v555 = vsel %vm552, %v554, %v550
    %v556 = vmul.f32 1.0, %v555
    %v557 = vtanh.pop %v536
    %v558 = vmul.f32 %v556, 0.0
    %560 = vrot.lane.b32.xlu0 %v557, 104
    %v561 = vpop.permute.xlu0 %560
    %v563 = vmul.f32 %v556, %v561
    %565 = vrot.lane.b32.xlu0 %v563, 8
    %v566 = vpop.permute.xlu0 %565
    %v568 = vadd.f32 %v558, %v566
    %v569 = vtanh.pop %v568
    %571 = vrot.lane.b32.xlu0 %v569, 8
    %v572 = vpop.permute.xlu0 %571
    %v574 = vmul.f32 %v556, %v572
    %v575 = vld [vmem:[%s7] sm:$0xff]
    %v576 = vld [vmem:[%s7 + $0x8] sm:$0xff]
    %v577 = vld [vmem:[%s7 + $0x10] sm:$0xff]
    %v578 = vld [vmem:[%s7 + $0x18] sm:$0xff]
    %v579 = vld [vmem:[%s10] sm:$0xff]
    %v580 = vld [vmem:[%s10 + $0x8] sm:$0xff]
    %v581 = vld [vmem:[%s10 + $0x10] sm:$0xff]
    %v582 = vld [vmem:[%s10 + $0x18] sm:$0xff]
    %584 = vrot.lane.b32.xlu0 %v512, 112
    %v585 = vpop.permute.xlu0 %584
    %v586 = vsel %vm82, %v585, 0
    %588 = vmatpush.msra.mxu0 0.0
    %589 = vmatpush.msra.mxu0 0.0
    %590 = vmatpush.msra.mxu0 0.0
    %591 = vmatpush.msra.mxu0 0.0
    %592 = vmatpush.msra.mxu0 0.0
    %593 = vmatpush.msra.mxu0 0.0
    %594 = vmatpush.msra.mxu0 0.0
    %595 = vmatpush.msra.mxu0 0.0
    %596 = vmatpush.msra.mxu0 0.0
    %597 = vmatpush.msra.mxu0 0.0
    %598 = vmatpush.msra.mxu0 0.0
    %599 = vmatpush.msra.mxu0 0.0
    %600 = vmatpush.msra.mxu0 0.0
    %601 = vmatpush.msra.mxu0 0.0
    %602 = vmatpush.msra.mxu0 0.0
    %603 = vmatpush.msra.mxu0 %v577
    %604 = vmatmul.f32.gmra.mxu0 %v586
    %v605 = vpop.f32.mrf.mxu0
    %v606 = vadd.f32 0.0, %v605
    %607 = vdwg.mxu0
    %vm608 = vcmask 130048
    %v610 = vsel %vm608, %v76, 0
    %612 = vmatpush.msra.mxu0 0.0
    %613 = vmatpush.msra.mxu0 0.0
    %614 = vmatpush.msra.mxu0 0.0
    %615 = vmatpush.msra.mxu0 0.0
    %616 = vmatpush.msra.mxu0 0.0
    %617 = vmatpush.msra.mxu0 0.0
    %618 = vmatpush.msra.mxu0 0.0
    %619 = vmatpush.msra.mxu0 0.0
    %620 = vmatpush.msra.mxu0 0.0
    %621 = vmatpush.msra.mxu0 0.0
    %622 = vmatpush.msra.mxu0 0.0
    %623 = vmatpush.msra.mxu0 0.0
    %624 = vmatpush.msra.mxu0 0.0
    %625 = vmatpush.msra.mxu0 0.0
    %626 = vmatpush.msra.mxu0 %v576
    %627 = vmatpush.msra.mxu0 %v575
    %628 = vmatmul.f32.gmra.mxu0 %v610
    %v629 = vpop.f32.mrf.mxu0
    %v630 = vadd.f32 %v606, %v629
    %631 = vdwg.mxu0
    %633 = vrot.lane.b32.xlu0 %v574, 112
    %v634 = vpop.permute.xlu0 %633
    %v635 = vsel %vm82, %v634, 0
    %637 = vmatpush.msra.mxu0 0.0
    %638 = vmatpush.msra.mxu0 0.0
    %639 = vmatpush.msra.mxu0 0.0
    %640 = vmatpush.msra.mxu0 0.0
    %641 = vmatpush.msra.mxu0 0.0
    %642 = vmatpush.msra.mxu0 0.0
    %643 = vmatpush.msra.mxu0 0.0
    %644 = vmatpush.msra.mxu0 0.0
    %645 = vmatpush.msra.mxu0 0.0
    %646 = vmatpush.msra.mxu0 0.0
    %647 = vmatpush.msra.mxu0 0.0
    %648 = vmatpush.msra.mxu0 0.0
    %649 = vmatpush.msra.mxu0 0.0
    %650 = vmatpush.msra.mxu0 0.0
    %651 = vmatpush.msra.mxu0 0.0
    %652 = vmatpush.msra.mxu0 %v578
    %653 = vmatmul.f32.gmra.mxu0 %v635
    %v654 = vpop.f32.mrf.mxu0
    %v655 = vadd.f32 0.0, %v654
    %656 = vdwg.mxu0
    %v657 = vadd.f32 %v630, %v655
    %v658 = vld [vmem:[%s9] sm:$0x1]
    %v660 = vperm.slane %v658, 0
    %v662 = vadd.f32 %v657, %v660
    %663 = vmatpush.msra.mxu0 0.0
    %664 = vmatpush.msra.mxu0 0.0
    %665 = vmatpush.msra.mxu0 0.0
    %666 = vmatpush.msra.mxu0 0.0
    %667 = vmatpush.msra.mxu0 0.0
    %668 = vmatpush.msra.mxu0 0.0
    %669 = vmatpush.msra.mxu0 0.0
    %670 = vmatpush.msra.mxu0 0.0
    %671 = vmatpush.msra.mxu0 0.0
    %672 = vmatpush.msra.mxu0 0.0
    %673 = vmatpush.msra.mxu0 0.0
    %674 = vmatpush.msra.mxu0 0.0
    %675 = vmatpush.msra.mxu0 0.0
    %676 = vmatpush.msra.mxu0 0.0
    %677 = vmatpush.msra.mxu0 0.0
    %678 = vmatpush.msra.mxu0 %v581
    %679 = vmatmul.f32.gmra.mxu0 %v586
    %v680 = vpop.f32.mrf.mxu0
    %v681 = vadd.f32 0.0, %v680
    %682 = vdwg.mxu0
    %683 = vmatpush.msra.mxu0 0.0
    %684 = vmatpush.msra.mxu0 0.0
    %685 = vmatpush.msra.mxu0 0.0
    %686 = vmatpush.msra.mxu0 0.0
    %687 = vmatpush.msra.mxu0 0.0
    %688 = vmatpush.msra.mxu0 0.0
    %689 = vmatpush.msra.mxu0 0.0
    %690 = vmatpush.msra.mxu0 0.0
    %691 = vmatpush.msra.mxu0 0.0
    %692 = vmatpush.msra.mxu0 0.0
    %693 = vmatpush.msra.mxu0 0.0
    %694 = vmatpush.msra.mxu0 0.0
    %695 = vmatpush.msra.mxu0 0.0
    %696 = vmatpush.msra.mxu0 0.0
    %697 = vmatpush.msra.mxu0 %v580
    %698 = vmatpush.msra.mxu0 %v579
    %699 = vmatmul.f32.gmra.mxu0 %v610
    %v700 = vpop.f32.mrf.mxu0
    %v701 = vadd.f32 %v681, %v700
    %702 = vdwg.mxu0
    %703 = vmatpush.msra.mxu0 0.0
    %704 = vmatpush.msra.mxu0 0.0
    %705 = vmatpush.msra.mxu0 0.0
    %706 = vmatpush.msra.mxu0 0.0
    %707 = vmatpush.msra.mxu0 0.0
    %708 = vmatpush.msra.mxu0 0.0
    %709 = vmatpush.msra.mxu0 0.0
    %710 = vmatpush.msra.mxu0 0.0
    %711 = vmatpush.msra.mxu0 0.0
    %712 = vmatpush.msra.mxu0 0.0
    %713 = vmatpush.msra.mxu0 0.0
    %714 = vmatpush.msra.mxu0 0.0
    %715 = vmatpush.msra.mxu0 0.0
    %716 = vmatpush.msra.mxu0 0.0
    %717 = vmatpush.msra.mxu0 0.0
    %718 = vmatpush.msra.mxu0 %v582
    %719 = vmatmul.f32.gmra.mxu0 %v635
    %v720 = vpop.f32.mrf.mxu0
    %v721 = vadd.f32 0.0, %v720
    %722 = vdwg.mxu0
    %v723 = vadd.f32 %v701, %v721
    %v724 = vld [vmem:[%s12] sm:$0x1]
    %v726 = vperm.slane %v724, 0
    %v728 = vadd.f32 %v723, %v726
    %v729 = vld [vmem:[%s8] sm:$0xff]
    %v730 = vld [vmem:[%s8 + $0x8] sm:$0xff]
    %v731 = vld [vmem:[%s11] sm:$0xff]
    %v732 = vld [vmem:[%s11 + $0x8] sm:$0xff]
    %v733 = vlaneseq
    %v734 = vshrl.u32 %v733, 7
    %v735 = vld [vmem:[%s13] sm:$0x1]
    %v736 = vld [vmem:[%s14] sm:$0x1]
    %v737 = vld [vmem:[%s15] sm:$0x1]
    %v738 = vld [vmem:[%s16] sm:$0x1]
    %v740 = vsel %vm608, %v735, 0
    %742 = vmatpush.msra.mxu0 0.0
    %743 = vmatpush.msra.mxu0 0.0
    %744 = vmatpush.msra.mxu0 0.0
    %745 = vmatpush.msra.mxu0 0.0
    %746 = vmatpush.msra.mxu0 0.0
    %747 = vmatpush.msra.mxu0 0.0
    %748 = vmatpush.msra.mxu0 0.0
    %749 = vmatpush.msra.mxu0 0.0
    %750 = vmatpush.msra.mxu0 0.0
    %751 = vmatpush.msra.mxu0 0.0
    %752 = vmatpush.msra.mxu0 0.0
    %753 = vmatpush.msra.mxu0 0.0
    %754 = vmatpush.msra.mxu0 0.0
    %755 = vmatpush.msra.mxu0 0.0
    %756 = vmatpush.msra.mxu0 %v730
    %757 = vmatpush.msra.mxu0 %v729
    %758 = vmatmul.f32.gmra.mxu0 %v740
    %v759 = vpop.f32.mrf.mxu0
    %v760 = vadd.f32 0.0, %v759
    %761 = vdwg.mxu0
    %v762 = vadd.f32 %v662, %v760
    %v763 = vxor.u32 %v762, 2147483648
    %v764 = vmul.f32 %v763, 1.442695
    %v765 = vpow.pop %v764
    %v766 = vadd.f32 %v765, 1.0
    %v767 = vrcp.pop %v766
    %v768 = vmul.f32 %v766, %v767
    %v769 = vsub.f32 1.0, %v768
    %v770 = vmul.f32 %v767, %v769
    %v771 = vadd.f32 %v767, %v770
    %vm772 = vweird.f32 %v766
    %vm773 = vweird.f32 %v767
    %vm774 = vmor %vm772, %vm773
    %v775 = vsel %vm774, %v767, %v771
    %v776 = vand.u32 2147483647, %v766
    %vm777 = vcmp.eq.f32.partialorder %v776, 8.507059e+37
    %v778 = vand.u32 %v766, 2147483648
    %v779 = vor.u32 1.1754944e-38, %v778
    %v780 = vsel %vm777, %v779, %v775
    %v781 = vmul.f32 1.0, %v780
    %v782 = vtanh.pop %v762
    %v784 = vperm.slane %v736, 0
    %785 = vrot.lane.b32.xlu0 %v784, 16
    %v786 = vpop.permute.xlu0 %785
    %v788 = vmul.f32 %v781, %v786
    %790 = vrot.lane.b32.xlu0 %v782, 80
    %v791 = vpop.permute.xlu0 %790
    %v793 = vmul.f32 %v781, %v791
    %795 = vrot.lane.b32.xlu0 %v793, 16
    %v796 = vpop.permute.xlu0 %795
    %v798 = vadd.f32 %v788, %v796
    %v799 = vtanh.pop %v798
    %801 = vrot.lane.b32.xlu0 %v799, 16
    %v802 = vpop.permute.xlu0 %801
    %v804 = vmul.f32 %v781, %v802
    %v806 = vsel %vm608, %v737, 0
    %808 = vmatpush.msra.mxu0 0.0
    %809 = vmatpush.msra.mxu0 0.0
    %810 = vmatpush.msra.mxu0 0.0
    %811 = vmatpush.msra.mxu0 0.0
    %812 = vmatpush.msra.mxu0 0.0
    %813 = vmatpush.msra.mxu0 0.0
    %814 = vmatpush.msra.mxu0 0.0
    %815 = vmatpush.msra.mxu0 0.0
    %816 = vmatpush.msra.mxu0 0.0
    %817 = vmatpush.msra.mxu0 0.0
    %818 = vmatpush.msra.mxu0 0.0
    %819 = vmatpush.msra.mxu0 0.0
    %820 = vmatpush.msra.mxu0 0.0
    %821 = vmatpush.msra.mxu0 0.0
    %822 = vmatpush.msra.mxu0 %v732
    %823 = vmatpush.msra.mxu0 %v731
    %824 = vmatmul.f32.gmra.mxu0 %v806
    %v825 = vpop.f32.mrf.mxu0
    %v826 = vadd.f32 0.0, %v825
    %827 = vdwg.mxu0
    %v829 = vrot.slane %v826, 1
    %v831 = vadd.f32 %v728, %v829
    %v832 = vxor.u32 %v831, 2147483648
    %v833 = vmul.f32 %v832, 1.442695
    %v834 = vpow.pop %v833
    %v835 = vadd.f32 %v834, 1.0
    %v836 = vrcp.pop %v835
    %v837 = vmul.f32 %v835, %v836
    %v838 = vsub.f32 1.0, %v837
    %v839 = vmul.f32 %v836, %v838
    %v840 = vadd.f32 %v836, %v839
    %vm841 = vweird.f32 %v835
    %vm842 = vweird.f32 %v836
    %vm843 = vmor %vm841, %vm842
    %v844 = vsel %vm843, %v836, %v840
    %v845 = vand.u32 2147483647, %v835
    %vm846 = vcmp.eq.f32.partialorder %v845, 8.507059e+37
    %v847 = vand.u32 %v835, 2147483648
    %v848 = vor.u32 1.1754944e-38, %v847
    %v849 = vsel %vm846, %v848, %v844
    %v850 = vmul.f32 1.0, %v849
    %v851 = vtanh.pop %v831
    %v853 = vperm.slane %v738, 0
    %854 = vrot.lane.b32.xlu0 %v853, 16
    %v855 = vpop.permute.xlu0 %854
    %v857 = vmul.f32 %v850, %v855
    %859 = vrot.lane.b32.xlu0 %v851, 80
    %v860 = vpop.permute.xlu0 %859
    %v862 = vmul.f32 %v850, %v860
    %864 = vrot.lane.b32.xlu0 %v862, 16
    %v865 = vpop.permute.xlu0 %864
    %v867 = vadd.f32 %v857, %v865
    %v868 = vtanh.pop %v867
    %870 = vrot.lane.b32.xlu0 %v868, 16
    %v871 = vpop.permute.xlu0 %870
    %v873 = vmul.f32 %v850, %v871
    %vm874 = vcmp.eq.s32.totalorder %v734, 0
    %v875 = vsel %vm874, 1, 0
    %vm876 = vcmp.eq.s32.totalorder %v875, 1
    %v877 = vperm.slane %v804, 0
    %v878 = vsel %vm876, %v877, 0.0
    %vm879 = vcmp.eq.s32.totalorder %v734, 7
    %v880 = vsel %vm879, 1, 0
    %vm881 = vcmp.eq.s32.totalorder %v880, 1
    %v882 = vperm.slane %v873, 7
    %v883 = vsel %vm881, %v882, 0.0
    %885 = vrot.lane.b32.xlu0 %v804, 96
    %v886 = vpop.permute.xlu0 %885
    %v887 = vsel %vm608, %v886, 0
    %889 = vmatpush.msra.mxu0 0.0
    %890 = vmatpush.msra.mxu0 0.0
    %891 = vmatpush.msra.mxu0 0.0
    %892 = vmatpush.msra.mxu0 0.0
    %893 = vmatpush.msra.mxu0 0.0
    %894 = vmatpush.msra.mxu0 0.0
    %895 = vmatpush.msra.mxu0 0.0
    %896 = vmatpush.msra.mxu0 0.0
    %897 = vmatpush.msra.mxu0 0.0
    %898 = vmatpush.msra.mxu0 0.0
    %899 = vmatpush.msra.mxu0 0.0
    %900 = vmatpush.msra.mxu0 0.0
    %901 = vmatpush.msra.mxu0 0.0
    %902 = vmatpush.msra.mxu0 0.0
    %903 = vmatpush.msra.mxu0 %v730
    %904 = vmatpush.msra.mxu0 %v729
    %905 = vmatmul.f32.gmra.mxu0 %v887
    %v906 = vpop.f32.mrf.mxu0
    %v907 = vadd.f32 0.0, %v906
    %908 = vdwg.mxu0
    %v910 = vrot.slane %v907, 7
    %v912 = vadd.f32 %v662, %v910
    %v913 = vxor.u32 %v912, 2147483648
    %v914 = vmul.f32 %v913, 1.442695
    %v915 = vpow.pop %v914
    %v916 = vadd.f32 %v915, 1.0
    %v917 = vrcp.pop %v916
    %v918 = vmul.f32 %v916, %v917
    %v919 = vsub.f32 1.0, %v918
    %v920 = vmul.f32 %v917, %v919
    %v921 = vadd.f32 %v917, %v920
    %vm922 = vweird.f32 %v916
    %vm923 = vweird.f32 %v917
    %vm924 = vmor %vm922, %vm923
    %v925 = vsel %vm924, %v917, %v921
    %v926 = vand.u32 2147483647, %v916
    %vm927 = vcmp.eq.f32.partialorder %v926, 8.507059e+37
    %v928 = vand.u32 %v916, 2147483648
    %v929 = vor.u32 1.1754944e-38, %v928
    %v930 = vsel %vm927, %v929, %v925
    %v931 = vmul.f32 1.0, %v930
    %v932 = vtanh.pop %v912
    %v934 = vrot.slane %v798, 7
    %v936 = vmul.f32 %v931, %v934
    %938 = vrot.lane.b32.xlu0 %v932, 80
    %v939 = vpop.permute.xlu0 %938
    %v941 = vmul.f32 %v931, %v939
    %943 = vrot.lane.b32.xlu0 %v941, 16
    %v944 = vpop.permute.xlu0 %943
    %v946 = vadd.f32 %v936, %v944
    %v947 = vtanh.pop %v946
    %949 = vrot.lane.b32.xlu0 %v947, 16
    %v950 = vpop.permute.xlu0 %949
    %v952 = vmul.f32 %v931, %v950
    %v954 = vrot.slane %v873, 7
    %955 = vrot.lane.b32.xlu0 %v954, 96
    %v956 = vpop.permute.xlu0 %955
    %v957 = vsel %vm608, %v956, 0
    %959 = vmatpush.msra.mxu0 0.0
    %960 = vmatpush.msra.mxu0 0.0
    %961 = vmatpush.msra.mxu0 0.0
    %962 = vmatpush.msra.mxu0 0.0
    %963 = vmatpush.msra.mxu0 0.0
    %964 = vmatpush.msra.mxu0 0.0
    %965 = vmatpush.msra.mxu0 0.0
    %966 = vmatpush.msra.mxu0 0.0
    %967 = vmatpush.msra.mxu0 0.0
    %968 = vmatpush.msra.mxu0 0.0
    %969 = vmatpush.msra.mxu0 0.0
    %970 = vmatpush.msra.mxu0 0.0
    %971 = vmatpush.msra.mxu0 0.0
    %972 = vmatpush.msra.mxu0 0.0
    %973 = vmatpush.msra.mxu0 %v732
    %974 = vmatpush.msra.mxu0 %v731
    %975 = vmatmul.f32.gmra.mxu0 %v957
    %v976 = vpop.f32.mrf.mxu0
    %v977 = vadd.f32 0.0, %v976
    %978 = vdwg.mxu0
    %v980 = vrot.slane %v977, 2
    %v982 = vadd.f32 %v728, %v980
    %v983 = vxor.u32 %v982, 2147483648
    %v984 = vmul.f32 %v983, 1.442695
    %v985 = vpow.pop %v984
    %v986 = vadd.f32 %v985, 1.0
    %v987 = vrcp.pop %v986
    %v988 = vmul.f32 %v986, %v987
    %v989 = vsub.f32 1.0, %v988
    %v990 = vmul.f32 %v987, %v989
    %v991 = vadd.f32 %v987, %v990
    %vm992 = vweird.f32 %v986
    %vm993 = vweird.f32 %v987
    %vm994 = vmor %vm992, %vm993
    %v995 = vsel %vm994, %v987, %v991
    %v996 = vand.u32 2147483647, %v986
    %vm997 = vcmp.eq.f32.partialorder %v996, 8.507059e+37
    %v998 = vand.u32 %v986, 2147483648
    %v999 = vor.u32 1.1754944e-38, %v998
    %v1000 = vsel %vm997, %v999, %v995
    %v1001 = vmul.f32 1.0, %v1000
    %v1002 = vtanh.pop %v982
    %v1004 = vrot.slane %v867, 1
    %v1006 = vmul.f32 %v1001, %v1004
    %1008 = vrot.lane.b32.xlu0 %v1002, 80
    %v1009 = vpop.permute.xlu0 %1008
    %v1011 = vmul.f32 %v1001, %v1009
    %1013 = vrot.lane.b32.xlu0 %v1011, 16
    %v1014 = vpop.permute.xlu0 %1013
    %v1016 = vadd.f32 %v1006, %v1014
    %v1017 = vtanh.pop %v1016
    %1019 = vrot.lane.b32.xlu0 %v1017, 16
    %v1020 = vpop.permute.xlu0 %1019
    %v1022 = vmul.f32 %v1001, %v1020
    %vm1023 = vcmp.eq.s32.totalorder %v734, 1
    %v1024 = vsel %vm1023, 1, 0
    %vm1025 = vcmp.eq.s32.totalorder %v1024, 1
    %v1026 = vperm.slane %v952, 1
    %v1027 = vsel %vm1025, %v1026, %v878
    %vm1028 = vcmp.eq.s32.totalorder %v734, 6
    %v1029 = vsel %vm1028, 1, 0
    %vm1030 = vcmp.eq.s32.totalorder %v1029, 1
    %v1031 = vperm.slane %v1022, 6
    %v1032 = vsel %vm1030, %v1031, %v883
    %v1034 = vrot.slane %v952, 1
    %1035 = vrot.lane.b32.xlu0 %v1034, 96
    %v1036 = vpop.permute.xlu0 %1035
    %v1037 = vsel %vm608, %v1036, 0
    %1039 = vmatpush.msra.mxu0 0.0
    %1040 = vmatpush.msra.mxu0 0.0
    %1041 = vmatpush.msra.mxu0 0.0
    %1042 = vmatpush.msra.mxu0 0.0
    %1043 = vmatpush.msra.mxu0 0.0
    %1044 = vmatpush.msra.mxu0 0.0
    %1045 = vmatpush.msra.mxu0 0.0
    %1046 = vmatpush.msra.mxu0 0.0
    %1047 = vmatpush.msra.mxu0 0.0
    %1048 = vmatpush.msra.mxu0 0.0
    %1049 = vmatpush.msra.mxu0 0.0
    %1050 = vmatpush.msra.mxu0 0.0
    %1051 = vmatpush.msra.mxu0 0.0
    %1052 = vmatpush.msra.mxu0 0.0
    %1053 = vmatpush.msra.mxu0 %v730
    %1054 = vmatpush.msra.mxu0 %v729
    %1055 = vmatmul.f32.gmra.mxu0 %v1037
    %v1056 = vpop.f32.mrf.mxu0
    %v1057 = vadd.f32 0.0, %v1056
    %1058 = vdwg.mxu0
    %v1060 = vrot.slane %v1057, 6
    %v1062 = vadd.f32 %v662, %v1060
    %v1063 = vxor.u32 %v1062, 2147483648
    %v1064 = vmul.f32 %v1063, 1.442695
    %v1065 = vpow.pop %v1064
    %v1066 = vadd.f32 %v1065, 1.0
    %v1067 = vrcp.pop %v1066
    %v1068 = vmul.f32 %v1066, %v1067
    %v1069 = vsub.f32 1.0, %v1068
    %v1070 = vmul.f32 %v1067, %v1069
    %v1071 = vadd.f32 %v1067, %v1070
    %vm1072 = vweird.f32 %v1066
    %vm1073 = vweird.f32 %v1067
    %vm1074 = vmor %vm1072, %vm1073
    %v1075 = vsel %vm1074, %v1067, %v1071
    %v1076 = vand.u32 2147483647, %v1066
    %vm1077 = vcmp.eq.f32.partialorder %v1076, 8.507059e+37
    %v1078 = vand.u32 %v1066, 2147483648
    %v1079 = vor.u32 1.1754944e-38, %v1078
    %v1080 = vsel %vm1077, %v1079, %v1075
    %v1081 = vmul.f32 1.0, %v1080
    %v1082 = vtanh.pop %v1062
    %v1084 = vrot.slane %v946, 7
    %v1086 = vmul.f32 %v1081, %v1084
    %1088 = vrot.lane.b32.xlu0 %v1082, 80
    %v1089 = vpop.permute.xlu0 %1088
    %v1091 = vmul.f32 %v1081, %v1089
    %1093 = vrot.lane.b32.xlu0 %v1091, 16
    %v1094 = vpop.permute.xlu0 %1093
    %v1096 = vadd.f32 %v1086, %v1094
    %v1097 = vtanh.pop %v1096
    %1099 = vrot.lane.b32.xlu0 %v1097, 16
    %v1100 = vpop.permute.xlu0 %1099
    %v1102 = vmul.f32 %v1081, %v1100
    %v1104 = vrot.slane %v1022, 6
    %1105 = vrot.lane.b32.xlu0 %v1104, 96
    %v1106 = vpop.permute.xlu0 %1105
    %v1107 = vsel %vm608, %v1106, 0
    %1109 = vmatpush.msra.mxu0 0.0
    %1110 = vmatpush.msra.mxu0 0.0
    %1111 = vmatpush.msra.mxu0 0.0
    %1112 = vmatpush.msra.mxu0 0.0
    %1113 = vmatpush.msra.mxu0 0.0
    %1114 = vmatpush.msra.mxu0 0.0
    %1115 = vmatpush.msra.mxu0 0.0
    %1116 = vmatpush.msra.mxu0 0.0
    %1117 = vmatpush.msra.mxu0 0.0
    %1118 = vmatpush.msra.mxu0 0.0
    %1119 = vmatpush.msra.mxu0 0.0
    %1120 = vmatpush.msra.mxu0 0.0
    %1121 = vmatpush.msra.mxu0 0.0
    %1122 = vmatpush.msra.mxu0 0.0
    %1123 = vmatpush.msra.mxu0 %v732
    %1124 = vmatpush.msra.mxu0 %v731
    %1125 = vmatmul.f32.gmra.mxu0 %v1107
    %v1126 = vpop.f32.mrf.mxu0
    %v1127 = vadd.f32 0.0, %v1126
    %1128 = vdwg.mxu0
    %v1130 = vrot.slane %v1127, 3
    %v1132 = vadd.f32 %v728, %v1130
    %v1133 = vxor.u32 %v1132, 2147483648
    %v1134 = vmul.f32 %v1133, 1.442695
    %v1135 = vpow.pop %v1134
    %v1136 = vadd.f32 %v1135, 1.0
    %v1137 = vrcp.pop %v1136
    %v1138 = vmul.f32 %v1136, %v1137
    %v1139 = vsub.f32 1.0, %v1138
    %v1140 = vmul.f32 %v1137, %v1139
    %v1141 = vadd.f32 %v1137, %v1140
    %vm1142 = vweird.f32 %v1136
    %vm1143 = vweird.f32 %v1137
    %vm1144 = vmor %vm1142, %vm1143
    %v1145 = vsel %vm1144, %v1137, %v1141
    %v1146 = vand.u32 2147483647, %v1136
    %vm1147 = vcmp.eq.f32.partialorder %v1146, 8.507059e+37
    %v1148 = vand.u32 %v1136, 2147483648
    %v1149 = vor.u32 1.1754944e-38, %v1148
    %v1150 = vsel %vm1147, %v1149, %v1145
    %v1151 = vmul.f32 1.0, %v1150
    %v1152 = vtanh.pop %v1132
    %v1154 = vrot.slane %v1016, 1
    %v1156 = vmul.f32 %v1151, %v1154
    %1158 = vrot.lane.b32.xlu0 %v1152, 80
    %v1159 = vpop.permute.xlu0 %1158
    %v1161 = vmul.f32 %v1151, %v1159
    %1163 = vrot.lane.b32.xlu0 %v1161, 16
    %v1164 = vpop.permute.xlu0 %1163
    %v1166 = vadd.f32 %v1156, %v1164
    %v1167 = vtanh.pop %v1166
    %1169 = vrot.lane.b32.xlu0 %v1167, 16
    %v1170 = vpop.permute.xlu0 %1169
    %v1172 = vmul.f32 %v1151, %v1170
    %vm1173 = vcmp.eq.s32.totalorder %v734, 2
    %v1174 = vsel %vm1173, 1, 0
    %vm1175 = vcmp.eq.s32.totalorder %v1174, 1
    %v1176 = vperm.slane %v1102, 2
    %v1177 = vsel %vm1175, %v1176, %v1027
    %vm1178 = vcmp.eq.s32.totalorder %v734, 5
    %v1179 = vsel %vm1178, 1, 0
    %vm1180 = vcmp.eq.s32.totalorder %v1179, 1
    %v1181 = vperm.slane %v1172, 5
    %v1182 = vsel %vm1180, %v1181, %v1032
    %v1184 = vrot.slane %v1102, 2
    %1185 = vrot.lane.b32.xlu0 %v1184, 96
    %v1186 = vpop.permute.xlu0 %1185
    %v1187 = vsel %vm608, %v1186, 0
    %1189 = vmatpush.msra.mxu0 0.0
    %1190 = vmatpush.msra.mxu0 0.0
    %1191 = vmatpush.msra.mxu0 0.0
    %1192 = vmatpush.msra.mxu0 0.0
    %1193 = vmatpush.msra.mxu0 0.0
    %1194 = vmatpush.msra.mxu0 0.0
    %1195 = vmatpush.msra.mxu0 0.0
    %1196 = vmatpush.msra.mxu0 0.0
    %1197 = vmatpush.msra.mxu0 0.0
    %1198 = vmatpush.msra.mxu0 0.0
    %1199 = vmatpush.msra.mxu0 0.0
    %1200 = vmatpush.msra.mxu0 0.0
    %1201 = vmatpush.msra.mxu0 0.0
    %1202 = vmatpush.msra.mxu0 0.0
    %1203 = vmatpush.msra.mxu0 %v730
    %1204 = vmatpush.msra.mxu0 %v729
    %1205 = vmatmul.f32.gmra.mxu0 %v1187
    %v1206 = vpop.f32.mrf.mxu0
    %v1207 = vadd.f32 0.0, %v1206
    %1208 = vdwg.mxu0
    %v1210 = vrot.slane %v1207, 5
    %v1212 = vadd.f32 %v662, %v1210
    %v1213 = vxor.u32 %v1212, 2147483648
    %v1214 = vmul.f32 %v1213, 1.442695
    %v1215 = vpow.pop %v1214
    %v1216 = vadd.f32 %v1215, 1.0
    %v1217 = vrcp.pop %v1216
    %v1218 = vmul.f32 %v1216, %v1217
    %v1219 = vsub.f32 1.0, %v1218
    %v1220 = vmul.f32 %v1217, %v1219
    %v1221 = vadd.f32 %v1217, %v1220
    %vm1222 = vweird.f32 %v1216
    %vm1223 = vweird.f32 %v1217
    %vm1224 = vmor %vm1222, %vm1223
    %v1225 = vsel %vm1224, %v1217, %v1221
    %v1226 = vand.u32 2147483647, %v1216
    %vm1227 = vcmp.eq.f32.partialorder %v1226, 8.507059e+37
    %v1228 = vand.u32 %v1216, 2147483648
    %v1229 = vor.u32 1.1754944e-38, %v1228
    %v1230 = vsel %vm1227, %v1229, %v1225
    %v1231 = vmul.f32 1.0, %v1230
    %v1232 = vtanh.pop %v1212
    %v1234 = vrot.slane %v1096, 7
    %v1236 = vmul.f32 %v1231, %v1234
    %1238 = vrot.lane.b32.xlu0 %v1232, 80
    %v1239 = vpop.permute.xlu0 %1238
    %v1241 = vmul.f32 %v1231, %v1239
    %1243 = vrot.lane.b32.xlu0 %v1241, 16
    %v1244 = vpop.permute.xlu0 %1243
    %v1246 = vadd.f32 %v1236, %v1244
    %v1247 = vtanh.pop %v1246
    %1249 = vrot.lane.b32.xlu0 %v1247, 16
    %v1250 = vpop.permute.xlu0 %1249
    %v1252 = vmul.f32 %v1231, %v1250
    %v1254 = vrot.slane %v1172, 5
    %1255 = vrot.lane.b32.xlu0 %v1254, 96
    %v1256 = vpop.permute.xlu0 %1255
    %v1257 = vsel %vm608, %v1256, 0
    %1259 = vmatpush.msra.mxu0 0.0
    %1260 = vmatpush.msra.mxu0 0.0
    %1261 = vmatpush.msra.mxu0 0.0
    %1262 = vmatpush.msra.mxu0 0.0
    %1263 = vmatpush.msra.mxu0 0.0
    %1264 = vmatpush.msra.mxu0 0.0
    %1265 = vmatpush.msra.mxu0 0.0
    %1266 = vmatpush.msra.mxu0 0.0
    %1267 = vmatpush.msra.mxu0 0.0
    %1268 = vmatpush.msra.mxu0 0.0
    %1269 = vmatpush.msra.mxu0 0.0
    %1270 = vmatpush.msra.mxu0 0.0
    %1271 = vmatpush.msra.mxu0 0.0
    %1272 = vmatpush.msra.mxu0 0.0
    %1273 = vmatpush.msra.mxu0 %v732
    %1274 = vmatpush.msra.mxu0 %v731
    %1275 = vmatmul.f32.gmra.mxu0 %v1257
    %v1276 = vpop.f32.mrf.mxu0
    %v1277 = vadd.f32 0.0, %v1276
    %1278 = vdwg.mxu0
    %v1280 = vrot.slane %v1277, 4
    %v1282 = vadd.f32 %v728, %v1280
    %v1283 = vxor.u32 %v1282, 2147483648
    %v1284 = vmul.f32 %v1283, 1.442695
    %v1285 = vpow.pop %v1284
    %v1286 = vadd.f32 %v1285, 1.0
    %v1287 = vrcp.pop %v1286
    %v1288 = vmul.f32 %v1286, %v1287
    %v1289 = vsub.f32 1.0, %v1288
    %v1290 = vmul.f32 %v1287, %v1289
    %v1291 = vadd.f32 %v1287, %v1290
    %vm1292 = vweird.f32 %v1286
    %vm1293 = vweird.f32 %v1287
    %vm1294 = vmor %vm1292, %vm1293
    %v1295 = vsel %vm1294, %v1287, %v1291
    %v1296 = vand.u32 2147483647, %v1286
    %vm1297 = vcmp.eq.f32.partialorder %v1296, 8.507059e+37
    %v1298 = vand.u32 %v1286, 2147483648
    %v1299 = vor.u32 1.1754944e-38, %v1298
    %v1300 = vsel %vm1297, %v1299, %v1295
    %v1301 = vmul.f32 1.0, %v1300
    %v1302 = vtanh.pop %v1282
    %v1304 = vrot.slane %v1166, 1
    %v1306 = vmul.f32 %v1301, %v1304
    %1308 = vrot.lane.b32.xlu0 %v1302, 80
    %v1309 = vpop.permute.xlu0 %1308
    %v1311 = vmul.f32 %v1301, %v1309
    %1313 = vrot.lane.b32.xlu0 %v1311, 16
    %v1314 = vpop.permute.xlu0 %1313
    %v1316 = vadd.f32 %v1306, %v1314
    %v1317 = vtanh.pop %v1316
    %1319 = vrot.lane.b32.xlu0 %v1317, 16
    %v1320 = vpop.permute.xlu0 %1319
    %v1322 = vmul.f32 %v1301, %v1320
    %vm1323 = vcmp.eq.s32.totalorder %v734, 3
    %v1324 = vsel %vm1323, 1, 0
    %vm1325 = vcmp.eq.s32.totalorder %v1324, 1
    %v1326 = vperm.slane %v1252, 3
    %v1327 = vsel %vm1325, %v1326, %v1177
    %vm1328 = vcmp.eq.s32.totalorder %v734, 4
    %v1329 = vsel %vm1328, 1, 0
    %vm1330 = vcmp.eq.s32.totalorder %v1329, 1
    %v1331 = vperm.slane %v1322, 4
    %v1332 = vsel %vm1330, %v1331, %v1182
    %v1334 = vrot.slane %v1252, 3
    %1335 = vrot.lane.b32.xlu0 %v1334, 96
    %v1336 = vpop.permute.xlu0 %1335
    %v1337 = vsel %vm608, %v1336, 0
    %1339 = vmatpush.msra.mxu0 0.0
    %1340 = vmatpush.msra.mxu0 0.0
    %1341 = vmatpush.msra.mxu0 0.0
    %1342 = vmatpush.msra.mxu0 0.0
    %1343 = vmatpush.msra.mxu0 0.0
    %1344 = vmatpush.msra.mxu0 0.0
    %1345 = vmatpush.msra.mxu0 0.0
    %1346 = vmatpush.msra.mxu0 0.0
    %1347 = vmatpush.msra.mxu0 0.0
    %1348 = vmatpush.msra.mxu0 0.0
    %1349 = vmatpush.msra.mxu0 0.0
    %1350 = vmatpush.msra.mxu0 0.0
    %1351 = vmatpush.msra.mxu0 0.0
    %1352 = vmatpush.msra.mxu0 0.0
    %1353 = vmatpush.msra.mxu0 %v730
    %1354 = vmatpush.msra.mxu0 %v729
    %1355 = vmatmul.f32.gmra.mxu0 %v1337
    %v1356 = vpop.f32.mrf.mxu0
    %v1357 = vadd.f32 0.0, %v1356
    %1358 = vdwg.mxu0
    %v1360 = vrot.slane %v1357, 4
    %v1362 = vadd.f32 %v662, %v1360
    %v1363 = vxor.u32 %v1362, 2147483648
    %v1364 = vmul.f32 %v1363, 1.442695
    %v1365 = vpow.pop %v1364
    %v1366 = vadd.f32 %v1365, 1.0
    %v1367 = vrcp.pop %v1366
    %v1368 = vmul.f32 %v1366, %v1367
    %v1369 = vsub.f32 1.0, %v1368
    %v1370 = vmul.f32 %v1367, %v1369
    %v1371 = vadd.f32 %v1367, %v1370
    %vm1372 = vweird.f32 %v1366
    %vm1373 = vweird.f32 %v1367
    %vm1374 = vmor %vm1372, %vm1373
    %v1375 = vsel %vm1374, %v1367, %v1371
    %v1376 = vand.u32 2147483647, %v1366
    %vm1377 = vcmp.eq.f32.partialorder %v1376, 8.507059e+37
    %v1378 = vand.u32 %v1366, 2147483648
    %v1379 = vor.u32 1.1754944e-38, %v1378
    %v1380 = vsel %vm1377, %v1379, %v1375
    %v1381 = vmul.f32 1.0, %v1380
    %v1382 = vtanh.pop %v1362
    %v1384 = vrot.slane %v1246, 7
    %v1386 = vmul.f32 %v1381, %v1384
    %1388 = vrot.lane.b32.xlu0 %v1382, 80
    %v1389 = vpop.permute.xlu0 %1388
    %v1391 = vmul.f32 %v1381, %v1389
    %1393 = vrot.lane.b32.xlu0 %v1391, 16
    %v1394 = vpop.permute.xlu0 %1393
    %v1396 = vadd.f32 %v1386, %v1394
    %v1397 = vtanh.pop %v1396
    %1399 = vrot.lane.b32.xlu0 %v1397, 16
    %v1400 = vpop.permute.xlu0 %1399
    %v1402 = vmul.f32 %v1381, %v1400
    %v1404 = vrot.slane %v1322, 4
    %1405 = vrot.lane.b32.xlu0 %v1404, 96
    %v1406 = vpop.permute.xlu0 %1405
    %v1407 = vsel %vm608, %v1406, 0
    %1409 = vmatpush.msra.mxu0 0.0
    %1410 = vmatpush.msra.mxu0 0.0
    %1411 = vmatpush.msra.mxu0 0.0
    %1412 = vmatpush.msra.mxu0 0.0
    %1413 = vmatpush.msra.mxu0 0.0
    %1414 = vmatpush.msra.mxu0 0.0
    %1415 = vmatpush.msra.mxu0 0.0
    %1416 = vmatpush.msra.mxu0 0.0
    %1417 = vmatpush.msra.mxu0 0.0
    %1418 = vmatpush.msra.mxu0 0.0
    %1419 = vmatpush.msra.mxu0 0.0
    %1420 = vmatpush.msra.mxu0 0.0
    %1421 = vmatpush.msra.mxu0 0.0
    %1422 = vmatpush.msra.mxu0 0.0
    %1423 = vmatpush.msra.mxu0 %v732
    %1424 = vmatpush.msra.mxu0 %v731
    %1425 = vmatmul.f32.gmra.mxu0 %v1407
    %v1426 = vpop.f32.mrf.mxu0
    %v1427 = vadd.f32 0.0, %v1426
    %1428 = vdwg.mxu0
    %v1430 = vrot.slane %v1427, 5
    %v1432 = vadd.f32 %v728, %v1430
    %v1433 = vxor.u32 %v1432, 2147483648
    %v1434 = vmul.f32 %v1433, 1.442695
    %v1435 = vpow.pop %v1434
    %v1436 = vadd.f32 %v1435, 1.0
    %v1437 = vrcp.pop %v1436
    %v1438 = vmul.f32 %v1436, %v1437
    %v1439 = vsub.f32 1.0, %v1438
    %v1440 = vmul.f32 %v1437, %v1439
    %v1441 = vadd.f32 %v1437, %v1440
    %vm1442 = vweird.f32 %v1436
    %vm1443 = vweird.f32 %v1437
    %vm1444 = vmor %vm1442, %vm1443
    %v1445 = vsel %vm1444, %v1437, %v1441
    %v1446 = vand.u32 2147483647, %v1436
    %vm1447 = vcmp.eq.f32.partialorder %v1446, 8.507059e+37
    %v1448 = vand.u32 %v1436, 2147483648
    %v1449 = vor.u32 1.1754944e-38, %v1448
    %v1450 = vsel %vm1447, %v1449, %v1445
    %v1451 = vmul.f32 1.0, %v1450
    %v1452 = vtanh.pop %v1432
    %v1454 = vrot.slane %v1316, 1
    %v1456 = vmul.f32 %v1451, %v1454
    %1458 = vrot.lane.b32.xlu0 %v1452, 80
    %v1459 = vpop.permute.xlu0 %1458
    %v1461 = vmul.f32 %v1451, %v1459
    %1463 = vrot.lane.b32.xlu0 %v1461, 16
    %v1464 = vpop.permute.xlu0 %1463
    %v1466 = vadd.f32 %v1456, %v1464
    %v1467 = vtanh.pop %v1466
    %1469 = vrot.lane.b32.xlu0 %v1467, 16
    %v1470 = vpop.permute.xlu0 %1469
    %v1472 = vmul.f32 %v1451, %v1470
    %v1473 = vperm.slane %v1402, 4
    %v1474 = vsel %vm1330, %v1473, %v1327
    %v1475 = vperm.slane %v1472, 3
    %v1476 = vsel %vm1325, %v1475, %v1332
    %v1478 = vrot.slane %v1402, 4
    %1479 = vrot.lane.b32.xlu0 %v1478, 96
    %v1480 = vpop.permute.xlu0 %1479
    %v1481 = vsel %vm608, %v1480, 0
    %1483 = vmatpush.msra.mxu0 0.0
    %1484 = vmatpush.msra.mxu0 0.0
    %1485 = vmatpush.msra.mxu0 0.0
    %1486 = vmatpush.msra.mxu0 0.0
    %1487 = vmatpush.msra.mxu0 0.0
    %1488 = vmatpush.msra.mxu0 0.0
    %1489 = vmatpush.msra.mxu0 0.0
    %1490 = vmatpush.msra.mxu0 0.0
    %1491 = vmatpush.msra.mxu0 0.0
    %1492 = vmatpush.msra.mxu0 0.0
    %1493 = vmatpush.msra.mxu0 0.0
    %1494 = vmatpush.msra.mxu0 0.0
    %1495 = vmatpush.msra.mxu0 0.0
    %1496 = vmatpush.msra.mxu0 0.0
    %1497 = vmatpush.msra.mxu0 %v730
    %1498 = vmatpush.msra.mxu0 %v729
    %1499 = vmatmul.f32.gmra.mxu0 %v1481
    %v1500 = vpop.f32.mrf.mxu0
    %v1501 = vadd.f32 0.0, %v1500
    %1502 = vdwg.mxu0
    %v1504 = vrot.slane %v1501, 3
    %v1506 = vadd.f32 %v662, %v1504
    %v1507 = vxor.u32 %v1506, 2147483648
    %v1508 = vmul.f32 %v1507, 1.442695
    %v1509 = vpow.pop %v1508
    %v1510 = vadd.f32 %v1509, 1.0
    %v1511 = vrcp.pop %v1510
    %v1512 = vmul.f32 %v1510, %v1511
    %v1513 = vsub.f32 1.0, %v1512
    %v1514 = vmul.f32 %v1511, %v1513
    %v1515 = vadd.f32 %v1511, %v1514
    %vm1516 = vweird.f32 %v1510
    %vm1517 = vweird.f32 %v1511
    %vm1518 = vmor %vm1516, %vm1517
    %v1519 = vsel %vm1518, %v1511, %v1515
    %v1520 = vand.u32 2147483647, %v1510
    %vm1521 = vcmp.eq.f32.partialorder %v1520, 8.507059e+37
    %v1522 = vand.u32 %v1510, 2147483648
    %v1523 = vor.u32 1.1754944e-38, %v1522
    %v1524 = vsel %vm1521, %v1523, %v1519
    %v1525 = vmul.f32 1.0, %v1524
    %v1526 = vtanh.pop %v1506
    %v1528 = vrot.slane %v1396, 7
    %v1530 = vmul.f32 %v1525, %v1528
    %1532 = vrot.lane.b32.xlu0 %v1526, 80
    %v1533 = vpop.permute.xlu0 %1532
    %v1535 = vmul.f32 %v1525, %v1533
    %1537 = vrot.lane.b32.xlu0 %v1535, 16
    %v1538 = vpop.permute.xlu0 %1537
    %v1540 = vadd.f32 %v1530, %v1538
    %v1541 = vtanh.pop %v1540
    %1543 = vrot.lane.b32.xlu0 %v1541, 16
    %v1544 = vpop.permute.xlu0 %1543
    %v1546 = vmul.f32 %v1525, %v1544
    %v1548 = vrot.slane %v1472, 3
    %1549 = vrot.lane.b32.xlu0 %v1548, 96
    %v1550 = vpop.permute.xlu0 %1549
    %v1551 = vsel %vm608, %v1550, 0
    %1553 = vmatpush.msra.mxu0 0.0
    %1554 = vmatpush.msra.mxu0 0.0
    %1555 = vmatpush.msra.mxu0 0.0
    %1556 = vmatpush.msra.mxu0 0.0
    %1557 = vmatpush.msra.mxu0 0.0
    %1558 = vmatpush.msra.mxu0 0.0
    %1559 = vmatpush.msra.mxu0 0.0
    %1560 = vmatpush.msra.mxu0 0.0
    %1561 = vmatpush.msra.mxu0 0.0
    %1562 = vmatpush.msra.mxu0 0.0
    %1563 = vmatpush.msra.mxu0 0.0
    %1564 = vmatpush.msra.mxu0 0.0
    %1565 = vmatpush.msra.mxu0 0.0
    %1566 = vmatpush.msra.mxu0 0.0
    %1567 = vmatpush.msra.mxu0 %v732
    %1568 = vmatpush.msra.mxu0 %v731
    %1569 = vmatmul.f32.gmra.mxu0 %v1551
    %v1570 = vpop.f32.mrf.mxu0
    %v1571 = vadd.f32 0.0, %v1570
    %1572 = vdwg.mxu0
    %v1574 = vrot.slane %v1571, 6
    %v1576 = vadd.f32 %v728, %v1574
    %v1577 = vxor.u32 %v1576, 2147483648
    %v1578 = vmul.f32 %v1577, 1.442695
    %v1579 = vpow.pop %v1578
    %v1580 = vadd.f32 %v1579, 1.0
    %v1581 = vrcp.pop %v1580
    %v1582 = vmul.f32 %v1580, %v1581
    %v1583 = vsub.f32 1.0, %v1582
    %v1584 = vmul.f32 %v1581, %v1583
    %v1585 = vadd.f32 %v1581, %v1584
    %vm1586 = vweird.f32 %v1580
    %vm1587 = vweird.f32 %v1581
    %vm1588 = vmor %vm1586, %vm1587
    %v1589 = vsel %vm1588, %v1581, %v1585
    %v1590 = vand.u32 2147483647, %v1580
    %vm1591 = vcmp.eq.f32.partialorder %v1590, 8.507059e+37
    %v1592 = vand.u32 %v1580, 2147483648
    %v1593 = vor.u32 1.1754944e-38, %v1592
    %v1594 = vsel %vm1591, %v1593, %v1589
    %v1595 = vmul.f32 1.0, %v1594
    %v1596 = vtanh.pop %v1576
    %v1598 = vrot.slane %v1466, 1
    %v1600 = vmul.f32 %v1595, %v1598
    %1602 = vrot.lane.b32.xlu0 %v1596, 80
    %v1603 = vpop.permute.xlu0 %1602
    %v1605 = vmul.f32 %v1595, %v1603
    %1607 = vrot.lane.b32.xlu0 %v1605, 16
    %v1608 = vpop.permute.xlu0 %1607
    %v1610 = vadd.f32 %v1600, %v1608
    %v1611 = vtanh.pop %v1610
    %1613 = vrot.lane.b32.xlu0 %v1611, 16
    %v1614 = vpop.permute.xlu0 %1613
    %v1616 = vmul.f32 %v1595, %v1614
    %v1617 = vperm.slane %v1546, 5
    %v1618 = vsel %vm1180, %v1617, %v1474
    %v1619 = vperm.slane %v1616, 2
    %v1620 = vsel %vm1175, %v1619, %v1476
    %v1622 = vrot.slane %v1546, 5
    %1623 = vrot.lane.b32.xlu0 %v1622, 96
    %v1624 = vpop.permute.xlu0 %1623
    %v1625 = vsel %vm608, %v1624, 0
    %1627 = vmatpush.msra.mxu0 0.0
    %1628 = vmatpush.msra.mxu0 0.0
    %1629 = vmatpush.msra.mxu0 0.0
    %1630 = vmatpush.msra.mxu0 0.0
    %1631 = vmatpush.msra.mxu0 0.0
    %1632 = vmatpush.msra.mxu0 0.0
    %1633 = vmatpush.msra.mxu0 0.0
    %1634 = vmatpush.msra.mxu0 0.0
    %1635 = vmatpush.msra.mxu0 0.0
    %1636 = vmatpush.msra.mxu0 0.0
    %1637 = vmatpush.msra.mxu0 0.0
    %1638 = vmatpush.msra.mxu0 0.0
    %1639 = vmatpush.msra.mxu0 0.0
    %1640 = vmatpush.msra.mxu0 0.0
    %1641 = vmatpush.msra.mxu0 %v730
    %1642 = vmatpush.msra.mxu0 %v729
    %1643 = vmatmul.f32.gmra.mxu0 %v1625
    %v1644 = vpop.f32.mrf.mxu0
    %v1645 = vadd.f32 0.0, %v1644
    %1646 = vdwg.mxu0
    %v1648 = vrot.slane %v1645, 2
    %v1650 = vadd.f32 %v662, %v1648
    %v1651 = vxor.u32 %v1650, 2147483648
    %v1652 = vmul.f32 %v1651, 1.442695
    %v1653 = vpow.pop %v1652
    %v1654 = vadd.f32 %v1653, 1.0
    %v1655 = vrcp.pop %v1654
    %v1656 = vmul.f32 %v1654, %v1655
    %v1657 = vsub.f32 1.0, %v1656
    %v1658 = vmul.f32 %v1655, %v1657
    %v1659 = vadd.f32 %v1655, %v1658
    %vm1660 = vweird.f32 %v1654
    %vm1661 = vweird.f32 %v1655
    %vm1662 = vmor %vm1660, %vm1661
    %v1663 = vsel %vm1662, %v1655, %v1659
    %v1664 = vand.u32 2147483647, %v1654
    %vm1665 = vcmp.eq.f32.partialorder %v1664, 8.507059e+37
    %v1666 = vand.u32 %v1654, 2147483648
    %v1667 = vor.u32 1.1754944e-38, %v1666
    %v1668 = vsel %vm1665, %v1667, %v1663
    %v1669 = vmul.f32 1.0, %v1668
    %v1670 = vtanh.pop %v1650
    %v1672 = vrot.slane %v1540, 7
    %v1674 = vmul.f32 %v1669, %v1672
    %1676 = vrot.lane.b32.xlu0 %v1670, 80
    %v1677 = vpop.permute.xlu0 %1676
    %v1679 = vmul.f32 %v1669, %v1677
    %1681 = vrot.lane.b32.xlu0 %v1679, 16
    %v1682 = vpop.permute.xlu0 %1681
    %v1684 = vadd.f32 %v1674, %v1682
    %v1685 = vtanh.pop %v1684
    %1687 = vrot.lane.b32.xlu0 %v1685, 16
    %v1688 = vpop.permute.xlu0 %1687
    %v1690 = vmul.f32 %v1669, %v1688
    %v1692 = vrot.slane %v1616, 2
    %1693 = vrot.lane.b32.xlu0 %v1692, 96
    %v1694 = vpop.permute.xlu0 %1693
    %v1695 = vsel %vm608, %v1694, 0
    %1697 = vmatpush.msra.mxu0 0.0
    %1698 = vmatpush.msra.mxu0 0.0
    %1699 = vmatpush.msra.mxu0 0.0
    %1700 = vmatpush.msra.mxu0 0.0
    %1701 = vmatpush.msra.mxu0 0.0
    %1702 = vmatpush.msra.mxu0 0.0
    %1703 = vmatpush.msra.mxu0 0.0
    %1704 = vmatpush.msra.mxu0 0.0
    %1705 = vmatpush.msra.mxu0 0.0
    %1706 = vmatpush.msra.mxu0 0.0
    %1707 = vmatpush.msra.mxu0 0.0
    %1708 = vmatpush.msra.mxu0 0.0
    %1709 = vmatpush.msra.mxu0 0.0
    %1710 = vmatpush.msra.mxu0 0.0
    %1711 = vmatpush.msra.mxu0 %v732
    %1712 = vmatpush.msra.mxu0 %v731
    %1713 = vmatmul.f32.gmra.mxu0 %v1695
    %v1714 = vpop.f32.mrf.mxu0
    %v1715 = vadd.f32 0.0, %v1714
    %1716 = vdwg.mxu0
    %v1718 = vrot.slane %v1715, 7
    %v1720 = vadd.f32 %v728, %v1718
    %v1721 = vxor.u32 %v1720, 2147483648
    %v1722 = vmul.f32 %v1721, 1.442695
    %v1723 = vpow.pop %v1722
    %v1724 = vadd.f32 %v1723, 1.0
    %v1725 = vrcp.pop %v1724
    %v1726 = vmul.f32 %v1724, %v1725
    %v1727 = vsub.f32 1.0, %v1726
    %v1728 = vmul.f32 %v1725, %v1727
    %v1729 = vadd.f32 %v1725, %v1728
    %vm1730 = vweird.f32 %v1724
    %vm1731 = vweird.f32 %v1725
    %vm1732 = vmor %vm1730, %vm1731
    %v1733 = vsel %vm1732, %v1725, %v1729
    %v1734 = vand.u32 2147483647, %v1724
    %vm1735 = vcmp.eq.f32.partialorder %v1734, 8.507059e+37
    %v1736 = vand.u32 %v1724, 2147483648
    %v1737 = vor.u32 1.1754944e-38, %v1736
    %v1738 = vsel %vm1735, %v1737, %v1733
    %v1739 = vmul.f32 1.0, %v1738
    %v1740 = vtanh.pop %v1720
    %v1742 = vrot.slane %v1610, 1
    %v1744 = vmul.f32 %v1739, %v1742
    %1746 = vrot.lane.b32.xlu0 %v1740, 80
    %v1747 = vpop.permute.xlu0 %1746
    %v1749 = vmul.f32 %v1739, %v1747
    %1751 = vrot.lane.b32.xlu0 %v1749, 16
    %v1752 = vpop.permute.xlu0 %1751
    %v1754 = vadd.f32 %v1744, %v1752
    %v1755 = vtanh.pop %v1754
    %1757 = vrot.lane.b32.xlu0 %v1755, 16
    %v1758 = vpop.permute.xlu0 %1757
    %v1760 = vmul.f32 %v1739, %v1758
    %v1761 = vperm.slane %v1690, 6
    %v1762 = vsel %vm1030, %v1761, %v1618
    %v1763 = vperm.slane %v1760, 1
    %v1764 = vsel %vm1025, %v1763, %v1620
    %v1766 = vrot.slane %v1690, 6
    %1767 = vrot.lane.b32.xlu0 %v1766, 96
    %v1768 = vpop.permute.xlu0 %1767
    %v1769 = vsel %vm608, %v1768, 0
    %1771 = vmatpush.msra.mxu0 0.0
    %1772 = vmatpush.msra.mxu0 0.0
    %1773 = vmatpush.msra.mxu0 0.0
    %1774 = vmatpush.msra.mxu0 0.0
    %1775 = vmatpush.msra.mxu0 0.0
    %1776 = vmatpush.msra.mxu0 0.0
    %1777 = vmatpush.msra.mxu0 0.0
    %1778 = vmatpush.msra.mxu0 0.0
    %1779 = vmatpush.msra.mxu0 0.0
    %1780 = vmatpush.msra.mxu0 0.0
    %1781 = vmatpush.msra.mxu0 0.0
    %1782 = vmatpush.msra.mxu0 0.0
    %1783 = vmatpush.msra.mxu0 0.0
    %1784 = vmatpush.msra.mxu0 0.0
    %1785 = vmatpush.msra.mxu0 %v730
    %1786 = vmatpush.msra.mxu0 %v729
    %1787 = vmatmul.f32.gmra.mxu0 %v1769
    %v1788 = vpop.f32.mrf.mxu0
    %v1789 = vadd.f32 0.0, %v1788
    %1790 = vdwg.mxu0
    %v1792 = vrot.slane %v1789, 1
    %v1794 = vadd.f32 %v662, %v1792
    %v1795 = vxor.u32 %v1794, 2147483648
    %v1796 = vmul.f32 %v1795, 1.442695
    %v1797 = vpow.pop %v1796
    %v1798 = vadd.f32 %v1797, 1.0
    %v1799 = vrcp.pop %v1798
    %v1800 = vmul.f32 %v1798, %v1799
    %v1801 = vsub.f32 1.0, %v1800
    %v1802 = vmul.f32 %v1799, %v1801
    %v1803 = vadd.f32 %v1799, %v1802
    %vm1804 = vweird.f32 %v1798
    %vm1805 = vweird.f32 %v1799
    %vm1806 = vmor %vm1804, %vm1805
    %v1807 = vsel %vm1806, %v1799, %v1803
    %v1808 = vand.u32 2147483647, %v1798
    %vm1809 = vcmp.eq.f32.partialorder %v1808, 8.507059e+37
    %v1810 = vand.u32 %v1798, 2147483648
    %v1811 = vor.u32 1.1754944e-38, %v1810
    %v1812 = vsel %vm1809, %v1811, %v1807
    %v1813 = vmul.f32 1.0, %v1812
    %v1814 = vtanh.pop %v1794
    %v1816 = vrot.slane %v1684, 7
    %v1818 = vmul.f32 %v1813, %v1816
    %1820 = vrot.lane.b32.xlu0 %v1814, 80
    %v1821 = vpop.permute.xlu0 %1820
    %v1823 = vmul.f32 %v1813, %v1821
    %1825 = vrot.lane.b32.xlu0 %v1823, 16
    %v1826 = vpop.permute.xlu0 %1825
    %v1828 = vadd.f32 %v1818, %v1826
    %v1829 = vtanh.pop %v1828
    %1831 = vrot.lane.b32.xlu0 %v1829, 16
    %v1832 = vpop.permute.xlu0 %1831
    %v1834 = vmul.f32 %v1813, %v1832
    %v1836 = vrot.slane %v1760, 1
    %1837 = vrot.lane.b32.xlu0 %v1836, 96
    %v1838 = vpop.permute.xlu0 %1837
    %v1839 = vsel %vm608, %v1838, 0
    %1841 = vmatpush.msra.mxu0 0.0
    %1842 = vmatpush.msra.mxu0 0.0
    %1843 = vmatpush.msra.mxu0 0.0
    %1844 = vmatpush.msra.mxu0 0.0
    %1845 = vmatpush.msra.mxu0 0.0
    %1846 = vmatpush.msra.mxu0 0.0
    %1847 = vmatpush.msra.mxu0 0.0
    %1848 = vmatpush.msra.mxu0 0.0
    %1849 = vmatpush.msra.mxu0 0.0
    %1850 = vmatpush.msra.mxu0 0.0
    %1851 = vmatpush.msra.mxu0 0.0
    %1852 = vmatpush.msra.mxu0 0.0
    %1853 = vmatpush.msra.mxu0 0.0
    %1854 = vmatpush.msra.mxu0 0.0
    %1855 = vmatpush.msra.mxu0 %v732
    %1856 = vmatpush.msra.mxu0 %v731
    %1857 = vmatmul.f32.gmra.mxu0 %v1839
    %v1858 = vpop.f32.mrf.mxu0
    %v1859 = vadd.f32 0.0, %v1858
    %1860 = vdwg.mxu0
    %v1861 = vadd.f32 %v728, %v1859
    %v1862 = vxor.u32 %v1861, 2147483648
    %v1863 = vmul.f32 %v1862, 1.442695
    %v1864 = vpow.pop %v1863
    %v1865 = vadd.f32 %v1864, 1.0
    %v1866 = vrcp.pop %v1865
    %v1867 = vmul.f32 %v1865, %v1866
    %v1868 = vsub.f32 1.0, %v1867
    %v1869 = vmul.f32 %v1866, %v1868
    %v1870 = vadd.f32 %v1866, %v1869
    %vm1871 = vweird.f32 %v1865
    %vm1872 = vweird.f32 %v1866
    %vm1873 = vmor %vm1871, %vm1872
    %v1874 = vsel %vm1873, %v1866, %v1870
    %v1875 = vand.u32 2147483647, %v1865
    %vm1876 = vcmp.eq.f32.partialorder %v1875, 8.507059e+37
    %v1877 = vand.u32 %v1865, 2147483648
    %v1878 = vor.u32 1.1754944e-38, %v1877
    %v1879 = vsel %vm1876, %v1878, %v1874
    %v1880 = vmul.f32 1.0, %v1879
    %v1881 = vtanh.pop %v1861
    %v1883 = vrot.slane %v1754, 1
    %v1885 = vmul.f32 %v1880, %v1883
    %1887 = vrot.lane.b32.xlu0 %v1881, 80
    %v1888 = vpop.permute.xlu0 %1887
    %v1890 = vmul.f32 %v1880, %v1888
    %1892 = vrot.lane.b32.xlu0 %v1890, 16
    %v1893 = vpop.permute.xlu0 %1892
    %v1895 = vadd.f32 %v1885, %v1893
    %v1896 = vtanh.pop %v1895
    %1898 = vrot.lane.b32.xlu0 %v1896, 16
    %v1899 = vpop.permute.xlu0 %1898
    %v1901 = vmul.f32 %v1880, %v1899
    %v1902 = vperm.slane %v1834, 7
    %v1903 = vsel %vm881, %v1902, %v1762
    %v1904 = vperm.slane %v1901, 0
    %v1905 = vsel %vm876, %v1904, %v1764
    %v1906 = vld [vmem:[%s17] sm:$0xff]
    %v1907 = vld [vmem:[%s17 + $0x8] sm:$0xff]
    %v1908 = vld [vmem:[%s17 + $0x10] sm:$0xff]
    %v1909 = vld [vmem:[%s17 + $0x18] sm:$0xff]
    %1911 = vrot.lane.b32.xlu0 %v1905, 96
    %v1912 = vpop.permute.xlu0 %1911
    %v1913 = vsel %vm608, %v1912, 0
    %1915 = vmatpush.msra.mxu0 0.0
    %1916 = vmatpush.msra.mxu0 0.0
    %1917 = vmatpush.msra.mxu0 0.0
    %1918 = vmatpush.msra.mxu0 0.0
    %1919 = vmatpush.msra.mxu0 0.0
    %1920 = vmatpush.msra.mxu0 0.0
    %1921 = vmatpush.msra.mxu0 0.0
    %1922 = vmatpush.msra.mxu0 0.0
    %1923 = vmatpush.msra.mxu0 0.0
    %1924 = vmatpush.msra.mxu0 0.0
    %1925 = vmatpush.msra.mxu0 0.0
    %1926 = vmatpush.msra.mxu0 0.0
    %1927 = vmatpush.msra.mxu0 0.0
    %1928 = vmatpush.msra.mxu0 0.0
    %1929 = vmatpush.msra.mxu0 %v1909
    %1930 = vmatpush.msra.mxu0 %v1908
    %1931 = vmatmul.f32.gmra.mxu0 %v1913
    %v1932 = vpop.f32.mrf.mxu0
    %v1933 = vadd.f32 0.0, %v1932
    %1934 = vdwg.mxu0
    %1936 = vrot.lane.b32.xlu0 %v1903, 96
    %v1937 = vpop.permute.xlu0 %1936
    %v1938 = vsel %vm608, %v1937, 0
    %1940 = vmatpush.msra.mxu0 0.0
    %1941 = vmatpush.msra.mxu0 0.0
    %1942 = vmatpush.msra.mxu0 0.0
    %1943 = vmatpush.msra.mxu0 0.0
    %1944 = vmatpush.msra.mxu0 0.0
    %1945 = vmatpush.msra.mxu0 0.0
    %1946 = vmatpush.msra.mxu0 0.0
    %1947 = vmatpush.msra.mxu0 0.0
    %1948 = vmatpush.msra.mxu0 0.0
    %1949 = vmatpush.msra.mxu0 0.0
    %1950 = vmatpush.msra.mxu0 0.0
    %1951 = vmatpush.msra.mxu0 0.0
    %1952 = vmatpush.msra.mxu0 0.0
    %1953 = vmatpush.msra.mxu0 0.0
    %1954 = vmatpush.msra.mxu0 %v1907
    %1955 = vmatpush.msra.mxu0 %v1906
    %1956 = vmatmul.f32.gmra.mxu0 %v1938
    %v1957 = vpop.f32.mrf.mxu0
    %v1958 = vadd.f32 %v1933, %v1957
    %1959 = vdwg.mxu0
    %v1960 = vld [vmem:[%s18] sm:$0x1]
    %v1962 = vperm.slane %v1960, 0
    %v1964 = vadd.f32 %v1958, %v1962
    %v1965 = vld [vmem:[%s19] sm:$0x1f]
    %v1966 = vlaneseq
    %v1967 = vand.u32 %v1966, 127
    %vm1968 = vcmp.eq.s32.totalorder %v734, %v1967
    %v1969 = vsel %vm1968, 1, 0
    %v1970 = vcvt.s32.f32 %v1969
    %vm1971 = vcmp.eq.s32.totalorder %v1967, 3
    %v1972 = vsel %vm1971, 0.0, -10000.0
    %v1973 = vadd.f32 %v1972, %v1965
    %vm1974 = vcmask 36864
    %v1975 = vsel %vm1974, %v1973, -inf
    %1976 = vmax.xlane.f32.xlu0 %v1975
    %v1977 = vpop.xlane.xlu0 %1976
    %vm1978 = vcmp.eq.f32.partialorder %v1973, %v1977
    %v1979 = vsel %vm1978, %v1967, 5
    %v1980 = vsel %vm1974, %v1979, 2147483647
    %v1981 = vand.u32 %v1980, 65535
    %v1982 = vshra.s32 %v1980, 16
    %v1983 = vcvt.s32.f32 %v1981
    %v1984 = vcvt.s32.f32 %v1982
    %1985 = vmin.xlane.f32.xlu0 %v1984
    %v1986 = vpop.xlane.xlu0 %1985
    %vm1987 = vcmp.eq.f32.partialorder %v1984, %v1986
    %v1988 = vsel %vm1987, %v1983, inf
    %1989 = vmin.xlane.f32.xlu0 %v1988
    %v1990 = vpop.xlane.xlu0 %1989
    %v1991 = vcvt.f32.s32 %v1990
    %v1992 = vcvt.f32.s32 %v1986
    %v1993 = vshll.u32 %v1992, 16
    %v1994 = vadd.s32 %v1993, %v1991
    %vm1995 = vcmp.eq.s32.totalorder %v1967, 0
    %v1996 = vsel %vm1995, %v1994, 0
    %v1997 = vmul.f32 %v1977, %v1970
    %v1998 = vsel %vm1974, %v1997, 0.0
    %v1999 = vrot.slane %v1998, 4
    %v2000 = vadd.f32 %v1998, %v1999
    %v2001 = vrot.slane %v2000, 2
    %v2002 = vadd.f32 %v2000, %v2001
    %v2003 = vrot.slane %v2002, 1
    %v2004 = vadd.f32 %v2002, %v2003
    %v2005 = vadd.f32 %v2004, %v1964
    %v2006 = vperm.slane %v2005, 0
    %v2007 = vadd.f32 %v2006, %v1965
    %v2008 = vsel %vm1974, %v2007, -inf
    %2009 = vmax.xlane.f32.xlu0 %v2008
    %v2010 = vpop.xlane.xlu0 %2009
    %vm2011 = vcmp.eq.f32.partialorder %v2007, %v2010
    %v2012 = vsel %vm2011, %v1967, 5
    %v2013 = vsel %vm1974, %v2012, 2147483647
    %v2014 = vand.u32 %v2013, 65535
    %v2015 = vshra.s32 %v2013, 16
    %v2016 = vcvt.s32.f32 %v2014
    %v2017 = vcvt.s32.f32 %v2015
    %2018 = vmin.xlane.f32.xlu0 %v2017
    %v2019 = vpop.xlane.xlu0 %2018
    %vm2020 = vcmp.eq.f32.partialorder %v2017, %v2019
    %v2021 = vsel %vm2020, %v2016, inf
    %2022 = vmin.xlane.f32.xlu0 %v2021
    %v2023 = vpop.xlane.xlu0 %2022
    %v2024 = vcvt.f32.s32 %v2023
    %v2025 = vcvt.f32.s32 %v2019
    %v2026 = vshll.u32 %v2025, 16
    %v2027 = vadd.s32 %v2026, %v2024
    %vm2028 = vcmp.eq.s32.totalorder %v1967, 1
    %v2029 = vsel %vm2028, %v2027, %v1996
    %v2030 = vmul.f32 %v2010, %v1970
    %v2031 = vsel %vm1974, %v2030, 0.0
    %v2032 = vrot.slane %v2031, 4
    %v2033 = vadd.f32 %v2031, %v2032
    %v2034 = vrot.slane %v2033, 2
    %v2035 = vadd.f32 %v2033, %v2034
    %v2036 = vrot.slane %v2035, 1
    %v2037 = vadd.f32 %v2035, %v2036
    %v2038 = vadd.f32 %v2037, %v1964
    %v2039 = vperm.slane %v2038, 1
    %v2040 = vadd.f32 %v2039, %v1965
    %v2041 = vsel %vm1974, %v2040, -inf
    %2042 = vmax.xlane.f32.xlu0 %v2041
    %v2043 = vpop.xlane.xlu0 %2042
    %vm2044 = vcmp.eq.f32.partialorder %v2040, %v2043
    %v2045 = vsel %vm2044, %v1967, 5
    %v2046 = vsel %vm1974, %v2045, 2147483647
    %v2047 = vand.u32 %v2046, 65535
    %v2048 = vshra.s32 %v2046, 16
    %v2049 = vcvt.s32.f32 %v2047
    %v2050 = vcvt.s32.f32 %v2048
    %2051 = vmin.xlane.f32.xlu0 %v2050
    %v2052 = vpop.xlane.xlu0 %2051
    %vm2053 = vcmp.eq.f32.partialorder %v2050, %v2052
    %v2054 = vsel %vm2053, %v2049, inf
    %2055 = vmin.xlane.f32.xlu0 %v2054
    %v2056 = vpop.xlane.xlu0 %2055
    %v2057 = vcvt.f32.s32 %v2056
    %v2058 = vcvt.f32.s32 %v2052
    %v2059 = vshll.u32 %v2058, 16
    %v2060 = vadd.s32 %v2059, %v2057
    %vm2061 = vcmp.eq.s32.totalorder %v1967, 2
    %v2062 = vsel %vm2061, %v2060, %v2029
    %v2063 = vmul.f32 %v2043, %v1970
    %v2064 = vsel %vm1974, %v2063, 0.0
    %v2065 = vrot.slane %v2064, 4
    %v2066 = vadd.f32 %v2064, %v2065
    %v2067 = vrot.slane %v2066, 2
    %v2068 = vadd.f32 %v2066, %v2067
    %v2069 = vrot.slane %v2068, 1
    %v2070 = vadd.f32 %v2068, %v2069
    %v2071 = vadd.f32 %v2070, %v1964
    %v2072 = vperm.slane %v2071, 2
    %v2073 = vadd.f32 %v2072, %v1965
    %v2074 = vsel %vm1974, %v2073, -inf
    %2075 = vmax.xlane.f32.xlu0 %v2074
    %v2076 = vpop.xlane.xlu0 %2075
    %vm2077 = vcmp.eq.f32.partialorder %v2073, %v2076
    %v2078 = vsel %vm2077, %v1967, 5
    %v2079 = vsel %vm1974, %v2078, 2147483647
    %v2080 = vand.u32 %v2079, 65535
    %v2081 = vshra.s32 %v2079, 16
    %v2082 = vcvt.s32.f32 %v2080
    %v2083 = vcvt.s32.f32 %v2081
    %2084 = vmin.xlane.f32.xlu0 %v2083
    %v2085 = vpop.xlane.xlu0 %2084
    %vm2086 = vcmp.eq.f32.partialorder %v2083, %v2085
    %v2087 = vsel %vm2086, %v2082, inf
    %2088 = vmin.xlane.f32.xlu0 %v2087
    %v2089 = vpop.xlane.xlu0 %2088
    %v2090 = vcvt.f32.s32 %v2089
    %v2091 = vcvt.f32.s32 %v2085
    %v2092 = vshll.u32 %v2091, 16
    %v2093 = vadd.s32 %v2092, %v2090
    %v2094 = vsel %vm1971, %v2093, %v2062
    %v2095 = vmul.f32 %v2076, %v1970
    %v2096 = vsel %vm1974, %v2095, 0.0
    %v2097 = vrot.slane %v2096, 4
    %v2098 = vadd.f32 %v2096, %v2097
    %v2099 = vrot.slane %v2098, 2
    %v2100 = vadd.f32 %v2098, %v2099
    %v2101 = vrot.slane %v2100, 1
    %v2102 = vadd.f32 %v2100, %v2101
    %v2103 = vadd.f32 %v2102, %v1964
    %v2104 = vperm.slane %v2103, 3
    %v2105 = vadd.f32 %v2104, %v1965
    %v2106 = vsel %vm1974, %v2105, -inf
    %2107 = vmax.xlane.f32.xlu0 %v2106
    %v2108 = vpop.xlane.xlu0 %2107
    %vm2109 = vcmp.eq.f32.partialorder %v2105, %v2108
    %v2110 = vsel %vm2109, %v1967, 5
    %v2111 = vsel %vm1974, %v2110, 2147483647
    %v2112 = vand.u32 %v2111, 65535
    %v2113 = vshra.s32 %v2111, 16
    %v2114 = vcvt.s32.f32 %v2112
    %v2115 = vcvt.s32.f32 %v2113
    %2116 = vmin.xlane.f32.xlu0 %v2115
    %v2117 = vpop.xlane.xlu0 %2116
    %vm2118 = vcmp.eq.f32.partialorder %v2115, %v2117
    %v2119 = vsel %vm2118, %v2114, inf
    %2120 = vmin.xlane.f32.xlu0 %v2119
    %v2121 = vpop.xlane.xlu0 %2120
    %v2122 = vcvt.f32.s32 %v2121
    %v2123 = vcvt.f32.s32 %v2117
    %v2124 = vshll.u32 %v2123, 16
    %v2125 = vadd.s32 %v2124, %v2122
    %vm2126 = vcmp.eq.s32.totalorder %v1967, 4
    %v2127 = vsel %vm2126, %v2125, %v2094
    %v2128 = vmul.f32 %v2108, %v1970
    %v2129 = vsel %vm1974, %v2128, 0.0
    %v2130 = vrot.slane %v2129, 4
    %v2131 = vadd.f32 %v2129, %v2130
    %v2132 = vrot.slane %v2131, 2
    %v2133 = vadd.f32 %v2131, %v2132
    %v2134 = vrot.slane %v2133, 1
    %v2135 = vadd.f32 %v2133, %v2134
    %v2136 = vadd.f32 %v2135, %v1964
    %v2137 = vperm.slane %v2136, 4
    %v2138 = vadd.f32 %v2137, %v1965
    %v2139 = vsel %vm1974, %v2138, -inf
    %2140 = vmax.xlane.f32.xlu0 %v2139
    %v2141 = vpop.xlane.xlu0 %2140
    %vm2142 = vcmp.eq.f32.partialorder %v2138, %v2141
    %v2143 = vsel %vm2142, %v1967, 5
    %v2144 = vsel %vm1974, %v2143, 2147483647
    %v2145 = vand.u32 %v2144, 65535
    %v2146 = vshra.s32 %v2144, 16
    %v2147 = vcvt.s32.f32 %v2145
    %v2148 = vcvt.s32.f32 %v2146
    %2149 = vmin.xlane.f32.xlu0 %v2148
    %v2150 = vpop.xlane.xlu0 %2149
    %vm2151 = vcmp.eq.f32.partialorder %v2148, %v2150
    %v2152 = vsel %vm2151, %v2147, inf
    %2153 = vmin.xlane.f32.xlu0 %v2152
    %v2154 = vpop.xlane.xlu0 %2153
    %v2155 = vcvt.f32.s32 %v2154
    %v2156 = vcvt.f32.s32 %v2150
    %v2157 = vshll.u32 %v2156, 16
    %v2158 = vadd.s32 %v2157, %v2155
    %vm2159 = vcmp.eq.s32.totalorder %v1967, 5
    %v2160 = vsel %vm2159, %v2158, %v2127
    %v2161 = vmul.f32 %v2141, %v1970
    %v2162 = vsel %vm1974, %v2161, 0.0
    %v2163 = vrot.slane %v2162, 4
    %v2164 = vadd.f32 %v2162, %v2163
    %v2165 = vrot.slane %v2164, 2
    %v2166 = vadd.f32 %v2164, %v2165
    %v2167 = vrot.slane %v2166, 1
    %v2168 = vadd.f32 %v2166, %v2167
    %v2169 = vadd.f32 %v2168, %v1964
    %v2170 = vperm.slane %v2169, 5
    %v2171 = vadd.f32 %v2170, %v1965
    %v2172 = vsel %vm1974, %v2171, -inf
    %2173 = vmax.xlane.f32.xlu0 %v2172
    %v2174 = vpop.xlane.xlu0 %2173
    %vm2175 = vcmp.eq.f32.partialorder %v2171, %v2174
    %v2176 = vsel %vm2175, %v1967, 5
    %v2177 = vsel %vm1974, %v2176, 2147483647
    %v2178 = vand.u32 %v2177, 65535
    %v2179 = vshra.s32 %v2177, 16
    %v2180 = vcvt.s32.f32 %v2178
    %v2181 = vcvt.s32.f32 %v2179
    %2182 = vmin.xlane.f32.xlu0 %v2181
    %v2183 = vpop.xlane.xlu0 %2182
    %vm2184 = vcmp.eq.f32.partialorder %v2181, %v2183
    %v2185 = vsel %vm2184, %v2180, inf
    %2186 = vmin.xlane.f32.xlu0 %v2185
    %v2187 = vpop.xlane.xlu0 %2186
    %v2188 = vcvt.f32.s32 %v2187
    %v2189 = vcvt.f32.s32 %v2183
    %v2190 = vshll.u32 %v2189, 16
    %v2191 = vadd.s32 %v2190, %v2188
    %vm2192 = vcmp.eq.s32.totalorder %v1967, 6
    %v2193 = vsel %vm2192, %v2191, %v2160
    %v2194 = vmul.f32 %v2174, %v1970
    %v2195 = vsel %vm1974, %v2194, 0.0
    %v2196 = vrot.slane %v2195, 4
    %v2197 = vadd.f32 %v2195, %v2196
    %v2198 = vrot.slane %v2197, 2
    %v2199 = vadd.f32 %v2197, %v2198
    %v2200 = vrot.slane %v2199, 1
    %v2201 = vadd.f32 %v2199, %v2200
    %v2202 = vadd.f32 %v2201, %v1964
    %v2203 = vperm.slane %v2202, 6
    %v2204 = vadd.f32 %v2203, %v1965
    %v2205 = vsel %vm1974, %v2204, -inf
    %2206 = vmax.xlane.f32.xlu0 %v2205
    %v2207 = vpop.xlane.xlu0 %2206
    %vm2208 = vcmp.eq.f32.partialorder %v2204, %v2207
    %v2209 = vsel %vm2208, %v1967, 5
    %v2210 = vsel %vm1974, %v2209, 2147483647
    %v2211 = vand.u32 %v2210, 65535
    %v2212 = vshra.s32 %v2210, 16
    %v2213 = vcvt.s32.f32 %v2211
    %v2214 = vcvt.s32.f32 %v2212
    %2215 = vmin.xlane.f32.xlu0 %v2214
    %v2216 = vpop.xlane.xlu0 %2215
    %vm2217 = vcmp.eq.f32.partialorder %v2214, %v2216
    %v2218 = vsel %vm2217, %v2213, inf
    %2219 = vmin.xlane.f32.xlu0 %v2218
    %v2220 = vpop.xlane.xlu0 %2219
    %v2221 = vcvt.f32.s32 %v2220
    %v2222 = vcvt.f32.s32 %v2216
    %v2223 = vshll.u32 %v2222, 16
    %v2224 = vadd.s32 %v2223, %v2221
    %vm2225 = vcmp.eq.s32.totalorder %v1967, 7
    %v2226 = vsel %vm2225, %v2224, %v2193
    %v2227 = vmul.f32 %v2207, %v1970
    %v2228 = vsel %vm1974, %v2227, 0.0
    %v2229 = vrot.slane %v2228, 4
    %v2230 = vadd.f32 %v2228, %v2229
    %v2231 = vrot.slane %v2230, 2
    %v2232 = vadd.f32 %v2230, %v2231
    %v2233 = vrot.slane %v2232, 1
    %v2234 = vadd.f32 %v2232, %v2233
    %v2235 = vadd.f32 %v2234, %v1964
    %v2237 = vrot.slane %v1965, 5
    %v2239 = vadd.f32 %v2235, %v2237
    %vm2240 = vcmask 39943
    %v2241 = vsel %vm2240, %v2239, -inf
    %2242 = vmax.xlane.f32.xlu0 %v2241
    %v2243 = vpop.xlane.xlu0 %2242
    %vm2244 = vcmp.eq.f32.partialorder %v2239, %v2243
    %v2245 = vsel %vm2244, %v1967, 5
    %v2246 = vsel %vm2240, %v2245, 2147483647
    %v2247 = vand.u32 %v2246, 65535
    %v2248 = vshra.s32 %v2246, 16
    %v2249 = vcvt.s32.f32 %v2247
    %v2250 = vcvt.s32.f32 %v2248
    %2251 = vmin.xlane.f32.xlu0 %v2250
    %v2252 = vpop.xlane.xlu0 %2251
    %vm2253 = vcmp.eq.f32.partialorder %v2250, %v2252
    %v2254 = vsel %vm2253, %v2249, inf
    %2255 = vmin.xlane.f32.xlu0 %v2254
    %v2256 = vpop.xlane.xlu0 %2255
    %v2257 = vcvt.f32.s32 %v2256
    %v2258 = vcvt.f32.s32 %v2252
    %v2259 = vshll.u32 %v2258, 16
    %v2260 = vadd.s32 %v2259, %v2257
    %v2261 = vsel %vm2225, %v2260, 0
    %v2262 = vperm.slane %v2260, 7
    %vm2263 = vcmp.eq.s32.totalorder %v734, %v2262
    %v2264 = vsel %vm2263, %v2226, 0
    %vm2265 = vcmask 61496
    %v2266 = vsel %vm2265, %v2264, 0
    %v2267 = vrot.slane %v2266, 4
    %v2268 = vadd.s32 %v2266, %v2267
    %v2269 = vrot.slane %v2268, 2
    %v2270 = vadd.s32 %v2268, %v2269
    %v2271 = vrot.slane %v2270, 1
    %v2272 = vadd.s32 %v2270, %v2271
    %2273 = vset.pattern.permute.xlu0 7
    %2274 = vperm.xlu0 %2273, %v2272
    %v2275 = vpop.permute.xlu0 %2274
    %v2276 = vsel %vm2192, %v2275, %v2261
    %vm2277 = vcmp.eq.s32.totalorder %v734, %v2272
    %2278 = vrot.lane.b32.xlu0 %v2226, 1
    %v2279 = vpop.permute.xlu0 %2278
    %v2280 = vsel %vm2277, %v2279, 0
    %v2281 = vsel %vm2265, %v2280, 0
    %v2282 = vrot.slane %v2281, 4
    %v2283 = vadd.s32 %v2281, %v2282
    %v2284 = vrot.slane %v2283, 2
    %v2285 = vadd.s32 %v2283, %v2284
    %v2286 = vrot.slane %v2285, 1
    %v2287 = vadd.s32 %v2285, %v2286
    %2288 = vset.pattern.permute.xlu0 7
    %2289 = vperm.xlu0 %2288, %v2287
    %v2290 = vpop.permute.xlu0 %2289
    %v2291 = vsel %vm2159, %v2290, %v2276
    %vm2292 = vcmp.eq.s32.totalorder %v734, %v2287
    %2293 = vrot.lane.b32.xlu0 %v2226, 2
    %v2294 = vpop.permute.xlu0 %2293
    %v2295 = vsel %vm2292, %v2294, 0
    %v2296 = vsel %vm2265, %v2295, 0
    %v2297 = vrot.slane %v2296, 4
    %v2298 = vadd.s32 %v2296, %v2297
    %v2299 = vrot.slane %v2298, 2
    %v2300 = vadd.s32 %v2298, %v2299
    %v2301 = vrot.slane %v2300, 1
    %v2302 = vadd.s32 %v2300, %v2301
    %2303 = vset.pattern.permute.xlu0 7
    %2304 = vperm.xlu0 %2303, %v2302
    %v2305 = vpop.permute.xlu0 %2304
    %v2306 = vsel %vm2126, %v2305, %v2291
    %vm2307 = vcmp.eq.s32.totalorder %v734, %v2302
    %2308 = vrot.lane.b32.xlu0 %v2226, 3
    %v2309 = vpop.permute.xlu0 %2308
    %v2310 = vsel %vm2307, %v2309, 0
    %v2311 = vsel %vm2265, %v2310, 0
    %v2312 = vrot.slane %v2311, 4
    %v2313 = vadd.s32 %v2311, %v2312
    %v2314 = vrot.slane %v2313, 2
    %v2315 = vadd.s32 %v2313, %v2314
    %v2316 = vrot.slane %v2315, 1
    %v2317 = vadd.s32 %v2315, %v2316
    %2318 = vset.pattern.permute.xlu0 7
    %2319 = vperm.xlu0 %2318, %v2317
    %v2320 = vpop.permute.xlu0 %2319
    %v2321 = vsel %vm1971, %v2320, %v2306
    %vm2322 = vcmp.eq.s32.totalorder %v734, %v2317
    %2323 = vrot.lane.b32.xlu0 %v2226, 4
    %v2324 = vpop.permute.xlu0 %2323
    %v2325 = vsel %vm2322, %v2324, 0
    %v2326 = vsel %vm2265, %v2325, 0
    %v2327 = vrot.slane %v2326, 4
    %v2328 = vadd.s32 %v2326, %v2327
    %v2329 = vrot.slane %v2328, 2
    %v2330 = vadd.s32 %v2328, %v2329
    %v2331 = vrot.slane %v2330, 1
    %v2332 = vadd.s32 %v2330, %v2331
    %2333 = vset.pattern.permute.xlu0 7
    %2334 = vperm.xlu0 %2333, %v2332
    %v2335 = vpop.permute.xlu0 %2334
    %v2336 = vsel %vm2061, %v2335, %v2321
    %vm2337 = vcmp.eq.s32.totalorder %v734, %v2332
    %2338 = vrot.lane.b32.xlu0 %v2226, 5
    %v2339 = vpop.permute.xlu0 %2338
    %v2340 = vsel %vm2337, %v2339, 0
    %v2341 = vsel %vm2265, %v2340, 0
    %v2342 = vrot.slane %v2341, 4
    %v2343 = vadd.s32 %v2341, %v2342
    %v2344 = vrot.slane %v2343, 2
    %v2345 = vadd.s32 %v2343, %v2344
    %v2346 = vrot.slane %v2345, 1
    %v2347 = vadd.s32 %v2345, %v2346
    %2348 = vset.pattern.permute.xlu0 7
    %2349 = vperm.xlu0 %2348, %v2347
    %v2350 = vpop.permute.xlu0 %2349
    %v2351 = vsel %vm2028, %v2350, %v2336
    %vm2352 = vcmp.eq.s32.totalorder %v734, %v2347
    %2353 = vrot.lane.b32.xlu0 %v2226, 6
    %v2354 = vpop.permute.xlu0 %2353
    %v2355 = vsel %vm2352, %v2354, 0
    %v2356 = vsel %vm2265, %v2355, 0
    %v2357 = vrot.slane %v2356, 4
    %v2358 = vadd.s32 %v2356, %v2357
    %v2359 = vrot.slane %v2358, 2
    %v2360 = vadd.s32 %v2358, %v2359
    %v2361 = vrot.slane %v2360, 1
    %v2362 = vadd.s32 %v2360, %v2361
    %2363 = vset.pattern.permute.xlu0 7
    %2364 = vperm.xlu0 %2363, %v2362
    %v2365 = vpop.permute.xlu0 %2364
    %v2366 = vsel %vm1995, %v2365, %v2351
    %vm2367 = vcmp.eq.s32.totalorder %v734, %v2362
    %2368 = vrot.lane.b32.xlu0 %v2226, 7
    %v2369 = vpop.permute.xlu0 %2368
    %v2370 = vsel %vm2367, %v2369, 0
    %v2371 = vsel %vm2265, %v2370, 0
    %v2372 = vrot.slane %v2371, 4
    %v2373 = vadd.s32 %v2371, %v2372
    %v2374 = vrot.slane %v2373, 2
    %v2375 = vadd.s32 %v2373, %v2374
    %v2376 = vrot.slane %v2375, 1
    %v2377 = vadd.s32 %v2375, %v2376
    %vm2378 = vcmask 64519
    %2379 = vst.msk [vmem:[#allocation2 - $0x7] sm:$0x80] %vm2378, %v2366
    %vm2380 = vcmask 7175
    %2381 = vst.msk [vmem:[#allocation4 - $0x7] sm:$0x80] %vm2380, %v2243
    %2382 = vrot.lane.b32.xlu0 %v2377, 121
    %v2383 = vpop.permute.xlu0 %2382
    %vm2384 = vcmask 0
    %2385 = vst.msk [vmem:[#allocation6] sm:$0x1] %vm2384, %v2383
    // Predicated region
    $region82: #{_forward_device.1} parent=1 // pred_check
      _
    $region83: #{_forward_device.1} parent=1 // pred_check_branch
      %2387 = sbr.rel (0) target = $region85
    $region84: #{_forward_device.1} parent=1 // pred_region
      %2389 = vsyncadd [#allocation3], 0
      %s2391 = sshll.u32 [#allocation2], 4
      %s2392 = int_to_ptr.vmem [resolvable:$true] %s2391
      %s2393 = sshll.u32 %s20, 4
      %s2394 = int_to_ptr.hbm [resolvable:$true] %s2393
      %2396 = dma.vmem_to_hbm [thread:$0]  %s2392, 16, %s2394, [#allocation3]
    $region85: #{_forward_device.1} parent=1 // pred_fallthru
      _
    // Predicated region
    $region86: #{_forward_device.1} parent=1 // pred_check
      _
    $region87: #{_forward_device.1} parent=1 // pred_check_branch
      %2398 = sbr.rel (0) target = $region89
    $region88: #{_forward_device.1} parent=1 // pred_region
      %2400 = vsyncadd [#allocation5], 0
      %s2402 = sshll.u32 [#allocation4], 4
      %s2403 = int_to_ptr.vmem [resolvable:$true] %s2402
      %s2404 = sshll.u32 %s21, 4
      %s2405 = int_to_ptr.hbm [resolvable:$true] %s2404
      %2407 = dma.vmem_to_hbm [thread:$0]  %s2403, 16, %s2405, [#allocation5]
    $region89: #{_forward_device.1} parent=1 // pred_fallthru
      _
    // Predicated region
    $region90: #{_forward_device.1} parent=1 // pred_check
      _
    $region91: #{_forward_device.1} parent=1 // pred_check_branch
      %2409 = sbr.rel (0) target = $region93
    $region92: #{_forward_device.1} parent=1 // pred_region
      %2411 = vsyncadd [#allocation5], 0
      %s2413 = sshll.u32 [#allocation6], 4
      %s2414 = int_to_ptr.vmem [resolvable:$true] %s2413
      %s2415 = sshll.u32 %s22, 4
      %s2416 = int_to_ptr.hbm [resolvable:$true] %s2415
      %2418 = dma.vmem_to_hbm [thread:$0]  %s2414, 16, %s2416, [#allocation5]
    $region93: #{_forward_device.1} parent=1 // pred_fallthru
      _
    // Predicated region
    $region94: #{_forward_device.1} parent=1 // pred_check
      _
    $region95: #{_forward_device.1} parent=1 // pred_check_branch
      %2420 = sbr.rel (0) target = $region97
    $region96: #{_forward_device.1} parent=1 // pred_region
      %2422 = dma.done [#allocation3], 16
    $region97: #{_forward_device.1} parent=1 // pred_fallthru
      _
    // Predicated region
    $region98: #{_forward_device.1} parent=1 // pred_check
      _
    $region99: #{_forward_device.1} parent=1 // pred_check_branch
      %2424 = sbr.rel (0) target = $region101
    $region100: #{_forward_device.1} parent=1 // pred_region
      %2426 = dma.done [#allocation5], 16
    $region101: #{_forward_device.1} parent=1 // pred_fallthru
      _
    // Predicated region
    $region102: #{_forward_device.1} parent=1 // pred_check
      _
    $region103: #{_forward_device.1} parent=1 // pred_check_branch
      %2428 = sbr.rel (0) target = $region105
    $region104: #{_forward_device.1} parent=1 // pred_region
      %2430 = dma.done [#allocation5], 16
    $region105: #{_forward_device.1} parent=1 // pred_fallthru
      _
    %2431 = vsyncpa [#allocation3], 1
    %2432 = vsyncpa [#allocation5], 1

</llo_original>
